<compile_context>
chip_gen: v7x
topology: tpu7x:2x2x1
jax: 0.10.0
libtpu: 0.0.40
codegen_flags: <defaults>
</compile_context>

<pallas_src>
import functools

import jax
import jax.numpy as jnp
from jax.experimental import pallas as pl
from jax.experimental.pallas import tpu as pltpu

LANE = 128   # lane width (last dim)
SUB = 8      # sublane width (second-to-last dim)


def _ceil_to(v, m):
    return ((v + m - 1) // m) * m


def _pad2(a, rows, cols):
    return jnp.pad(a, ((0, rows - a.shape[0]), (0, cols - a.shape[1])))


# ------------------------------ kernels -------------------------------------
def _edge_tsae_kernel(et_t_ref, et_f_ref, alg_ref,
                      w_ts_ref, w_s_ref, w_n_ref, b_ref, out_ref):
    """Edge-side chain (TSAEncoder surrogate). Grid = edge-row tiles, parallel.

    h_e_full is recomputed per tile from the replicated et block; the extra
    MXU work is K=t/te (~1/16) of the line-graph aggregation, i.e. negligible,
    and it keeps the kernel row-local (no cross-step scratch).
    """
    dt = w_s_ref.dtype
    he_t = jnp.maximum(
        jnp.dot(et_t_ref[...], w_ts_ref[...],
                preferred_element_type=jnp.float32), 0.0)
    he_f = jnp.maximum(
        jnp.dot(et_f_ref[...], w_ts_ref[...],
                preferred_element_type=jnp.float32), 0.0)
    h_agg = jnp.dot(alg_ref[...], he_f.astype(dt),
                    preferred_element_type=jnp.float32)
    tsae = (jnp.dot(he_t.astype(dt), w_s_ref[...],
                    preferred_element_type=jnp.float32)
            + jnp.dot(h_agg.astype(dt), w_n_ref[...],
                      preferred_element_type=jnp.float32)
            + b_ref[...])
    out_ref[...] = jnp.maximum(tsae, 0.0).astype(out_ref.dtype)


def _sage1_kernel(x_t_ref, x_f_ref, a_ref, w1s_ref, w1n_ref, b1_ref, out_ref):
    """SAGE layer 1 (mean aggregation). Grid = node-row tiles, parallel."""
    dt = w1s_ref.dtype
    agg1 = jnp.dot(a_ref[...], x_f_ref[...], preferred_element_type=jnp.float32)
    h1 = (jnp.dot(x_t_ref[...], w1s_ref[...],
                  preferred_element_type=jnp.float32)
          + jnp.dot(agg1.astype(dt), w1n_ref[...],
                    preferred_element_type=jnp.float32)
          + b1_ref[...])
    out_ref[...] = jnp.maximum(h1, 0.0).astype(out_ref.dtype)


def _node_fused_kernel(hn_ref, tsae_ref, a_ref, h1f_ref, h1t_ref,
                       w_etn_ref, b_etn_ref, w_lin_ref,
                       w2s_ref, w2n_ref, b2_ref,
                       m_ref, wo_ref, o_ref, *, inv_sqrt_h, out_size):
    """EdgeGCN node side + SAGE layer 2 + MixAttention + out linear + log_softmax.

    Purely row-local per node-row tile; all intermediates stay in VMEM/vregs.
    """
    dt = w_etn_ref.dtype

    # ---- EdgeGCN node side: incidence agg -> linear -> leaky_relu -> linear
    hx = jnp.dot(hn_ref[...], tsae_ref[...], preferred_element_type=jnp.float32)
    etn = jnp.dot(hx.astype(dt), w_etn_ref[...],
                  preferred_element_type=jnp.float32) + b_etn_ref[...]
    etn = jnp.where(etn > 0, etn, 0.2 * etn)
    edge = jnp.dot(etn.astype(dt), w_lin_ref[...],
                   preferred_element_type=jnp.float32)

    # ---- SAGE layer 2
    agg2 = jnp.dot(a_ref[...], h1f_ref[...], preferred_element_type=jnp.float32)
    node = (jnp.dot(h1t_ref[...], w2s_ref[...],
                    preferred_element_type=jnp.float32)
            + jnp.dot(agg2.astype(dt), w2n_ref[...],
                      preferred_element_type=jnp.float32)
            + b2_ref[...])

    # ---- MixAttention surrogate: single MXU pass via M = Wq @ Wk^T
    nm = jnp.dot(node.astype(dt), m_ref[...], preferred_element_type=jnp.float32)
    sn = jnp.sum(nm * node, axis=-1, keepdims=True) * inv_sqrt_h
    se = jnp.sum(nm * edge, axis=-1, keepdims=True) * inv_sqrt_h
    mx = jnp.maximum(sn, se)
    en = jnp.exp(sn - mx)
    ee = jnp.exp(se - mx)
    inv = pl.reciprocal(en + ee, approx=True)
    mixed = (en * node + ee * edge) * inv

    # ---- output linear + masked log_softmax (lane-dense store)
    logits = jnp.dot(mixed.astype(dt), wo_ref[...],
                     preferred_element_type=jnp.float32)
    col = jax.lax.broadcasted_iota(jnp.int32, logits.shape, 1)
    logits = jnp.where(col < out_size, logits, jnp.float32(-1e30))
    lmax = jnp.max(logits, axis=-1, keepdims=True)
    z = logits - lmax
    lse = jnp.log(jnp.sum(jnp.exp(z), axis=-1, keepdims=True))
    o_ref[...] = (z - lse).astype(o_ref.dtype)


# ------------------------- pallas_call wrappers ------------------------------
def _rep(shape):
    return pl.BlockSpec(shape, lambda i: (0, 0))       # replicated full block


def _tiled(rows, cols):
    return pl.BlockSpec((rows, cols), lambda i: (i, 0))  # row-tiled block


def edge_tsae(et_p, alg_p, w_ts, w_s, w_n, b_ts, *, te, out_dtype):
    e_pad, t_k = et_p.shape
    h_pad = w_ts.shape[1]
    return pl.pallas_call(
        _edge_tsae_kernel,
        out_shape=jax.ShapeDtypeStruct((e_pad, h_pad), out_dtype),
        grid=(e_pad // te,),
        in_specs=[_tiled(te, t_k), _rep((e_pad, t_k)), _tiled(te, e_pad),
                  _rep((t_k, h_pad)), _rep((h_pad, h_pad)), _rep((h_pad, h_pad)),
                  _rep((1, h_pad))],
        out_specs=_tiled(te, h_pad),
        compiler_params=pltpu.CompilerParams(
            dimension_semantics=("parallel",)),
    )(et_p, et_p, alg_p, w_ts, w_s, w_n, b_ts)


def sage1(x_p, ar_p, w1s, w1n, b1, *, tm, out_dtype):
    n_pad, f_k = x_p.shape
    h_pad = w1s.shape[1]
    return pl.pallas_call(
        _sage1_kernel,
        out_shape=jax.ShapeDtypeStruct((n_pad, h_pad), out_dtype),
        grid=(n_pad // tm,),
        in_specs=[_tiled(tm, f_k), _rep((n_pad, f_k)), _tiled(tm, n_pad),
                  _rep((f_k, h_pad)), _rep((f_k, h_pad)), _rep((1, h_pad))],
        out_specs=_tiled(tm, h_pad),
        compiler_params=pltpu.CompilerParams(
            dimension_semantics=("parallel",)),
    )(x_p, x_p, ar_p, w1s, w1n, b1)


def node_fused(hn_p, tsae, ar_p, h1, w_etn, b_etn, w_lin, w2s, w2n, b2,
               m_mat, w_out, *, tm, hidden, out_size):
    n_pad, e_pad = hn_p.shape
    h_pad = w_etn.shape[1]
    o_pad = w_out.shape[1]
    kern = functools.partial(_node_fused_kernel,
                             inv_sqrt_h=1.0 / float(hidden) ** 0.5,
                             out_size=out_size)
    return pl.pallas_call(
        kern,
        out_shape=jax.ShapeDtypeStruct((n_pad, o_pad), jnp.float32),
        grid=(n_pad // tm,),
        in_specs=[_tiled(tm, e_pad),             # H_norm row tile
                  _rep((e_pad, h_pad)),          # tsae (full, edge side)
                  _tiled(tm, n_pad),             # A_raw_mean row tile
                  _rep((n_pad, h_pad)),          # h1 full (for neighbour agg)
                  _tiled(tm, h_pad),             # h1 row tile (self term)
                  _rep((h_pad, h_pad)), _rep((1, h_pad)), _rep((h_pad, h_pad)),
                  _rep((h_pad, h_pad)), _rep((h_pad, h_pad)), _rep((1, h_pad)),
                  _rep((h_pad, h_pad)), _rep((h_pad, o_pad))],
        out_specs=_tiled(tm, o_pad),
        compiler_params=pltpu.CompilerParams(
            dimension_semantics=("parallel",)),
    )(hn_p, tsae, ar_p, h1, h1, w_etn, b_etn, w_lin, w2s, w2n, b2, m_mat, w_out)


# ----------------------------- parameters ------------------------------------
def glorot(key, fan_in, fan_out):
    lim = jnp.sqrt(6.0 / (fan_in + fan_out))
    return jax.random.uniform(key, (fan_in, fan_out), jnp.float32, -lim, lim)


def init_params(key, num_features, timestamp_size, hidden, out_size):
    ks = jax.random.split(key, 16)
    p = {}
    # EdgeGCN / TSAEncoder surrogate
    p["w_ts"] = glorot(ks[0], timestamp_size, hidden)
    p["w_ts_self"] = glorot(ks[1], hidden, hidden)
    p["w_ts_nbr"] = glorot(ks[2], hidden, hidden)
    p["b_ts"] = jnp.zeros((1, hidden), jnp.float32)
    # EdgeToNodeConv
    p["w_etn"] = glorot(ks[3], hidden, hidden)
    p["b_etn"] = jnp.zeros((1, hidden), jnp.float32)
    # EdgeGCN output linear (bias=False)
    p["w_edge_lin"] = glorot(ks[4], hidden, hidden)
    # SAGE (2 layers)
    p["w1_self"] = glorot(ks[5], num_features, hidden)
    p["w1_nbr"] = glorot(ks[6], num_features, hidden)
    p["b1"] = jnp.zeros((1, hidden), jnp.float32)
    p["w2_self"] = glorot(ks[7], hidden, hidden)
    p["w2_nbr"] = glorot(ks[8], hidden, hidden)
    p["b2"] = jnp.zeros((1, hidden), jnp.float32)
    # MixAttention surrogate
    p["wq"] = glorot(ks[9], hidden, hidden)
    p["wk"] = glorot(ks[10], hidden, hidden)
    # final linear (bias=False)
    p["w_out"] = glorot(ks[11], hidden, out_size)
    return p


# ------------------------------ forward --------------------------------------
def forward(params, x, et, H_norm, A_raw_mean, A_lg_mean, *, hidden, out_size,
            tm=128, te=128, compute_dtype=jnp.bfloat16):
    """tm/te: node / edge row-tile sizes (128 for v5e, 256 on v6e/v7x if N,E large)."""
    n, f = x.shape
    e, t = et.shape
    n_pad = _ceil_to(n, tm)
    e_pad = _ceil_to(e, te)
    f_k = _ceil_to(f, SUB)        # contraction dims only sublane-padded (no 128-lane pad)
    t_k = _ceil_to(t, SUB)
    h_pad = _ceil_to(hidden, LANE)
    o_pad = _ceil_to(out_size, LANE)
    cd = compute_dtype

    # zero-pad activations / graph operators (zeros are inert through every
    # matmul / mean-aggregation / activation); matmul operands in compute dtype.
    x_p = _pad2(x, n_pad, f_k).astype(cd)
    et_p = _pad2(et, e_pad, t_k).astype(cd)
    hn_p = _pad2(H_norm, n_pad, e_pad).astype(cd)
    ar_p = _pad2(A_raw_mean, n_pad, n_pad).astype(cd)
    alg_p = _pad2(A_lg_mean, e_pad, e_pad).astype(cd)

    # weights in compute dtype, lane-padded on the hidden/out axes only; biases f32.
    w_ts = _pad2(params["w_ts"], t_k, h_pad).astype(cd)
    w_tss = _pad2(params["w_ts_self"], h_pad, h_pad).astype(cd)
    w_tsn = _pad2(params["w_ts_nbr"], h_pad, h_pad).astype(cd)
    b_ts = _pad2(params["b_ts"], 1, h_pad)
    w_etn = _pad2(params["w_etn"], h_pad, h_pad).astype(cd)
    b_etn = _pad2(params["b_etn"], 1, h_pad)
    w_lin = _pad2(params["w_edge_lin"], h_pad, h_pad).astype(cd)
    w1s = _pad2(params["w1_self"], f_k, h_pad).astype(cd)
    w1n = _pad2(params["w1_nbr"], f_k, h_pad).astype(cd)
    b1 = _pad2(params["b1"], 1, h_pad)
    w2s = _pad2(params["w2_self"], h_pad, h_pad).astype(cd)
    w2n = _pad2(params["w2_nbr"], h_pad, h_pad).astype(cd)
    b2 = _pad2(params["b2"], 1, h_pad)
    # MixAttention bilinear form precomputed once (tiny h x h matmul).
    m_mat = _pad2(params["wq"] @ params["wk"].T, h_pad, h_pad).astype(cd)
    w_out = _pad2(params["w_out"], h_pad, o_pad).astype(cd)

    tsae = edge_tsae(et_p, alg_p, w_ts, w_tss, w_tsn, b_ts,
                     te=te, out_dtype=cd)                     # [E_pad, H_pad]
    h1 = sage1(x_p, ar_p, w1s, w1n, b1, tm=tm, out_dtype=cd)  # [N_pad, H_pad]
    out_p = node_fused(hn_p, tsae, ar_p, h1, w_etn, b_etn, w_lin,
                       w2s, w2n, b2, m_mat, w_out,
                       tm=tm, hidden=hidden, out_size=out_size)  # [N_pad, O_pad]
    return out_p[:n, :out_size]


# --------------------------- pure-JAX reference -------------------------------
def reference(params, x, et, H_norm, A_raw_mean, A_lg_mean, hidden,
              compute_dtype=jnp.float32):
    """Pure-JAX reference; q() mimics the kernel's matmul-operand quantization."""
    q = lambda a: a.astype(compute_dtype).astype(jnp.float32)
    relu = lambda v: jnp.maximum(v, 0.0)

    h_e = relu(q(et) @ q(params["w_ts"]))
    h_agg = q(A_lg_mean) @ q(h_e)
    tsae = relu(q(h_e) @ q(params["w_ts_self"])
                + q(h_agg) @ q(params["w_ts_nbr"]) + params["b_ts"])
    hx = q(H_norm) @ q(tsae)
    etn = q(hx) @ q(params["w_etn"]) + params["b_etn"]
    etn = jnp.where(etn > 0, etn, 0.2 * etn)
    edge_repr = q(etn) @ q(params["w_edge_lin"])

    agg1 = q(A_raw_mean) @ q(x)
    h1 = relu(q(x) @ q(params["w1_self"]) + q(agg1) @ q(params["w1_nbr"])
              + params["b1"])
    agg2 = q(A_raw_mean) @ q(h1)
    node_repr = (q(h1) @ q(params["w2_self"]) + q(agg2) @ q(params["w2_nbr"])
                 + params["b2"])

    m_mat = params["wq"] @ params["wk"].T
    nm = q(node_repr) @ q(m_mat)
    scale = 1.0 / (float(hidden) ** 0.5)
    sn = jnp.sum(nm * node_repr, axis=-1, keepdims=True) * scale
    se = jnp.sum(nm * edge_repr, axis=-1, keepdims=True) * scale
    m = jnp.maximum(sn, se)
    en = jnp.exp(sn - m)
    ee = jnp.exp(se - m)
    mixed = (en * node_repr + ee * edge_repr) / (en + ee)
    return jax.nn.log_softmax(q(mixed) @ q(params["w_out"]), axis=1)


# ------------------------------- main ----------------------------------------
if __name__ == "__main__":
    N = 12            # num nodes
    E = 24            # num raw edges (= nodes of the line graph)
    E_LG = 48         # num line-graph edges
    NUM_FEATURES = 16
    TIMESTAMP_SIZE = 4
    HIDDEN = 32
    OUT_SIZE = 8

    key = jax.random.PRNGKey(0)
    k_x, k_et, k_e1, k_e2, k_lg1, k_lg2, k_par = jax.random.split(key, 7)

    x = jax.random.normal(k_x, (N, NUM_FEATURES), jnp.float32)
    et = jax.random.normal(k_et, (E, TIMESTAMP_SIZE), jnp.float32)

    # raw graph edges (src -> dst)
    src = jax.random.randint(k_e1, (E,), 0, N)
    dst = jax.random.randint(k_e2, (E,), 0, N)
    A_raw = jnp.zeros((N, N), jnp.float32).at[dst, src].add(1.0)
    A_raw = jnp.minimum(A_raw, 1.0)
    deg = jnp.maximum(A_raw.sum(axis=1, keepdims=True), 1.0)
    A_raw_mean = A_raw / deg                                   # mean aggregation

    # line-graph edges between edge-entities
    lsrc = jax.random.randint(k_lg1, (E_LG,), 0, E)
    ldst = jax.random.randint(k_lg2, (E_LG,), 0, E)
    A_lg = jnp.zeros((E, E), jnp.float32).at[ldst, lsrc].add(1.0)
    A_lg = jnp.minimum(A_lg, 1.0)
    ldeg = jnp.maximum(A_lg.sum(axis=1, keepdims=True), 1.0)
    A_lg_mean = A_lg / ldeg

    # node-edge incidence matrix H [N, E], row-normalized
    eidx = jnp.arange(E)
    Hmat = (jnp.zeros((N, E), jnp.float32)
            .at[src, eidx].set(1.0).at[dst, eidx].set(1.0))
    hdeg = jnp.maximum(Hmat.sum(axis=1, keepdims=True), 1.0)
    H_norm = Hmat / hdeg

    params = init_params(k_par, NUM_FEATURES, TIMESTAMP_SIZE, HIDDEN, OUT_SIZE)

    # ---- full-precision path -------------------------------------------------
    fwd_f32 = jax.jit(functools.partial(forward, hidden=HIDDEN, out_size=OUT_SIZE,
                                        compute_dtype=jnp.float32))
    out_f32 = jax.block_until_ready(
        fwd_f32(params, x, et, H_norm, A_raw_mean, A_lg_mean))
    assert out_f32.shape == (N, OUT_SIZE)
    assert jnp.allclose(jnp.exp(out_f32).sum(axis=1), 1.0, atol=1e-4)
    ref_f32 = reference(params, x, et, H_norm, A_raw_mean, A_lg_mean, HIDDEN,
                        compute_dtype=jnp.float32)
    assert jnp.allclose(out_f32, ref_f32, atol=2e-2, rtol=2e-2), \
        float(jnp.max(jnp.abs(out_f32 - ref_f32)))

    # ---- bf16 fast path (bf16 MXU operands, f32 accumulation) ----------------
    fwd_bf16 = jax.jit(functools.partial(forward, hidden=HIDDEN, out_size=OUT_SIZE,
                                         compute_dtype=jnp.bfloat16))
    out_bf16 = jax.block_until_ready(
        fwd_bf16(params, x, et, H_norm, A_raw_mean, A_lg_mean))
    assert out_bf16.shape == (N, OUT_SIZE)
    assert jnp.allclose(jnp.exp(out_bf16).sum(axis=1), 1.0, atol=1e-4)
    ref_bf16 = reference(params, x, et, H_norm, A_raw_mean, A_lg_mean, HIDDEN,
                         compute_dtype=jnp.bfloat16)
    assert jnp.allclose(out_bf16, ref_bf16, atol=3e-2, rtol=3e-2), \
        float(jnp.max(jnp.abs(out_bf16 - ref_bf16)))

    print("KERNEL_OK")
</pallas_src>

<mosaic_0001>
module attributes {stable_mosaic.version = 11 : i64} {
  func.func @_sage1_kernel(%arg0: i32, %arg1: memref<128x16xf32, #tpu.memory_space<vmem>>, %arg2: memref<128x16xf32, #tpu.memory_space<vmem>>, %arg3: memref<128x128xf32, #tpu.memory_space<vmem>>, %arg4: memref<16x128xf32, #tpu.memory_space<vmem>>, %arg5: memref<16x128xf32, #tpu.memory_space<vmem>>, %arg6: memref<1x128xf32, #tpu.memory_space<vmem>>, %arg7: memref<128x128xf32, #tpu.memory_space<vmem>>) attributes {dimension_semantics = [#tpu.dimension_semantics<parallel>], iteration_bounds = array<i64: 1>, scalar_prefetch = 0 : i64, scratch_operands = 0 : i64, tpu.core_type = #tpu.core_type<tc>, window_params = [{transform_indices = @transform_0, window_bounds = array<i64: 128, 16>}, {pipeline_mode = #tpu.pipeline_mode<synchronous>, transform_indices = @transform_1, window_bounds = array<i64: 128, 16>}, {transform_indices = @transform_2, window_bounds = array<i64: 128, 128>}, {pipeline_mode = #tpu.pipeline_mode<synchronous>, transform_indices = @transform_3, window_bounds = array<i64: 16, 128>}, {pipeline_mode = #tpu.pipeline_mode<synchronous>, transform_indices = @transform_4, window_bounds = array<i64: 16, 128>}, {pipeline_mode = #tpu.pipeline_mode<synchronous>, transform_indices = @transform_5, window_bounds = array<i64: 1, 128>}, {transform_indices = @transform_6, window_bounds = array<i64: 128, 128>}]} {
    %c0 = arith.constant 0 : index
    %c0_0 = arith.constant 0 : index
    %0 = vector.load %arg3[%c0, %c0_0] : memref<128x128xf32, #tpu.memory_space<vmem>>, vector<128x128xf32>
    %c0_1 = arith.constant 0 : index
    %c0_2 = arith.constant 0 : index
    %1 = vector.load %arg2[%c0_1, %c0_2] : memref<128x16xf32, #tpu.memory_space<vmem>>, vector<128x16xf32>
    %cst = arith.constant dense<0.000000e+00> : vector<128x16xf32>
    %2 = tpu.matmul %0, %1, %cst {dimension_numbers = #tpu.dot_dimension_numbers<[1], [0], [0], [1], [0, 0, 1, 1], [], []>} : vector<128x128xf32>, vector<128x16xf32>, vector<128x16xf32> -> vector<128x16xf32>
    %c0_3 = arith.constant 0 : index
    %c0_4 = arith.constant 0 : index
    %3 = vector.load %arg1[%c0_3, %c0_4] : memref<128x16xf32, #tpu.memory_space<vmem>>, vector<128x16xf32>
    %c0_5 = arith.constant 0 : index
    %c0_6 = arith.constant 0 : index
    %4 = vector.load %arg4[%c0_5, %c0_6] : memref<16x128xf32, #tpu.memory_space<vmem>>, vector<16x128xf32>
    %cst_7 = arith.constant dense<0.000000e+00> : vector<128x128xf32>
    %5 = tpu.matmul %3, %4, %cst_7 {dimension_numbers = #tpu.dot_dimension_numbers<[1], [0], [0], [1], [0, 0, 1, 1], [], []>} : vector<128x16xf32>, vector<16x128xf32>, vector<128x128xf32> -> vector<128x128xf32>
    %c0_8 = arith.constant 0 : index
    %c0_9 = arith.constant 0 : index
    %6 = vector.load %arg5[%c0_8, %c0_9] : memref<16x128xf32, #tpu.memory_space<vmem>>, vector<16x128xf32>
    %cst_10 = arith.constant dense<0.000000e+00> : vector<128x128xf32>
    %7 = tpu.matmul %2, %6, %cst_10 {dimension_numbers = #tpu.dot_dimension_numbers<[1], [0], [0], [1], [0, 0, 1, 1], [], []>} : vector<128x16xf32>, vector<16x128xf32>, vector<128x128xf32> -> vector<128x128xf32>
    %8 = arith.addf %5, %7 : vector<128x128xf32>
    %c0_11 = arith.constant 0 : index
    %c0_12 = arith.constant 0 : index
    %9 = vector.load %arg6[%c0_11, %c0_12] : memref<1x128xf32, #tpu.memory_space<vmem>>, vector<1x128xf32>
    %10 = vector.broadcast %9 : vector<1x128xf32> to vector<128x128xf32>
    %11 = arith.addf %8, %10 : vector<128x128xf32>
    %cst_13 = arith.constant 0.000000e+00 : f32
    %12 = vector.broadcast %cst_13 : f32 to vector<128x128xf32>
    %13 = arith.maximumf %11, %12 : vector<128x128xf32>
    %c0_14 = arith.constant 0 : index
    %c0_15 = arith.constant 0 : index
    %14 = vector.load %arg7[%c0_14, %c0_15] : memref<128x128xf32, #tpu.memory_space<vmem>>, vector<128x128xf32>
    tpu.vector_store %arg7[%c0_14, %c0_15], %13 {strides = array<i32>} : memref<128x128xf32, #tpu.memory_space<vmem>>, vector<128x128xf32>,
    return
  }
  func.func @transform_0(%arg0: i32) -> (i32, i32) {
    %c0_i32 = arith.constant 0 : i32
    %c0_i32_0 = arith.constant 0 : i32
    return %arg0, %c0_i32 : i32, i32
  }
  func.func @transform_1(%arg0: i32) -> (i32, i32) {
    %c0_i32 = arith.constant 0 : i32
    %c0_i32_0 = arith.constant 0 : i32
    %c0_i32_1 = arith.constant 0 : i32
    return %c0_i32, %c0_i32_0 : i32, i32
  }
  func.func @transform_2(%arg0: i32) -> (i32, i32) {
    %c0_i32 = arith.constant 0 : i32
    %c0_i32_0 = arith.constant 0 : i32
    return %arg0, %c0_i32 : i32, i32
  }
  func.func @transform_3(%arg0: i32) -> (i32, i32) {
    %c0_i32 = arith.constant 0 : i32
    %c0_i32_0 = arith.constant 0 : i32
    %c0_i32_1 = arith.constant 0 : i32
    return %c0_i32, %c0_i32_0 : i32, i32
  }
  func.func @transform_4(%arg0: i32) -> (i32, i32) {
    %c0_i32 = arith.constant 0 : i32
    %c0_i32_0 = arith.constant 0 : i32
    %c0_i32_1 = arith.constant 0 : i32
    return %c0_i32, %c0_i32_0 : i32, i32
  }
  func.func @transform_5(%arg0: i32) -> (i32, i32) {
    %c0_i32 = arith.constant 0 : i32
    %c0_i32_0 = arith.constant 0 : i32
    %c0_i32_1 = arith.constant 0 : i32
    return %c0_i32, %c0_i32_0 : i32, i32
  }
  func.func @transform_6(%arg0: i32) -> (i32, i32) {
    %c0_i32 = arith.constant 0 : i32
    %c0_i32_0 = arith.constant 0 : i32
    return %arg0, %c0_i32 : i32, i32
  }
}

module attributes {stable_mosaic.version = 11 : i64} {
  func.func @_edge_tsae_kernel(%arg0: i32, %arg1: memref<128x8xf32, #tpu.memory_space<vmem>>, %arg2: memref<128x8xf32, #tpu.memory_space<vmem>>, %arg3: memref<128x128xf32, #tpu.memory_space<vmem>>, %arg4: memref<8x128xf32, #tpu.memory_space<vmem>>, %arg5: memref<128x128xf32, #tpu.memory_space<vmem>>, %arg6: memref<128x128xf32, #tpu.memory_space<vmem>>, %arg7: memref<1x128xf32, #tpu.memory_space<vmem>>, %arg8: memref<128x128xf32, #tpu.memory_space<vmem>>) attributes {dimension_semantics = [#tpu.dimension_semantics<parallel>], iteration_bounds = array<i64: 1>, scalar_prefetch = 0 : i64, scratch_operands = 0 : i64, tpu.core_type = #tpu.core_type<tc>, window_params = [{transform_indices = @transform_0, window_bounds = array<i64: 128, 8>}, {pipeline_mode = #tpu.pipeline_mode<synchronous>, transform_indices = @transform_1, window_bounds = array<i64: 128, 8>}, {transform_indices = @transform_2, window_bounds = array<i64: 128, 128>}, {pipeline_mode = #tpu.pipeline_mode<synchronous>, transform_indices = @transform_3, window_bounds = array<i64: 8, 128>}, {pipeline_mode = #tpu.pipeline_mode<synchronous>, transform_indices = @transform_4, window_bounds = array<i64: 128, 128>}, {pipeline_mode = #tpu.pipeline_mode<synchronous>, transform_indices = @transform_5, window_bounds = array<i64: 128, 128>}, {pipeline_mode = #tpu.pipeline_mode<synchronous>, transform_indices = @transform_6, window_bounds = array<i64: 1, 128>}, {transform_indices = @transform_7, window_bounds = array<i64: 128, 128>}]} {
    %c0 = arith.constant 0 : index
    %c0_0 = arith.constant 0 : index
    %0 = vector.load %arg1[%c0, %c0_0] : memref<128x8xf32, #tpu.memory_space<vmem>>, vector<128x8xf32>
    %c0_1 = arith.constant 0 : index
    %c0_2 = arith.constant 0 : index
    %1 = vector.load %arg4[%c0_1, %c0_2] : memref<8x128xf32, #tpu.memory_space<vmem>>, vector<8x128xf32>
    %cst = arith.constant dense<0.000000e+00> : vector<128x128xf32>
    %2 = tpu.matmul %0, %1, %cst {dimension_numbers = #tpu.dot_dimension_numbers<[1], [0], [0], [1], [0, 0, 1, 1], [], []>} : vector<128x8xf32>, vector<8x128xf32>, vector<128x128xf32> -> vector<128x128xf32>
    %cst_3 = arith.constant 0.000000e+00 : f32
    %3 = vector.broadcast %cst_3 : f32 to vector<128x128xf32>
    %4 = arith.maximumf %2, %3 : vector<128x128xf32>
    %c0_4 = arith.constant 0 : index
    %c0_5 = arith.constant 0 : index
    %5 = vector.load %arg2[%c0_4, %c0_5] : memref<128x8xf32, #tpu.memory_space<vmem>>, vector<128x8xf32>
    %c0_6 = arith.constant 0 : index
    %c0_7 = arith.constant 0 : index
    %6 = vector.load %arg4[%c0_6, %c0_7] : memref<8x128xf32, #tpu.memory_space<vmem>>, vector<8x128xf32>
    %cst_8 = arith.constant dense<0.000000e+00> : vector<128x128xf32>
    %7 = tpu.matmul %5, %6, %cst_8 {dimension_numbers = #tpu.dot_dimension_numbers<[1], [0], [0], [1], [0, 0, 1, 1], [], []>} : vector<128x8xf32>, vector<8x128xf32>, vector<128x128xf32> -> vector<128x128xf32>
    %cst_9 = arith.constant 0.000000e+00 : f32
    %8 = vector.broadcast %cst_9 : f32 to vector<128x128xf32>
    %9 = arith.maximumf %7, %8 : vector<128x128xf32>
    %c0_10 = arith.constant 0 : index
    %c0_11 = arith.constant 0 : index
    %10 = vector.load %arg3[%c0_10, %c0_11] : memref<128x128xf32, #tpu.memory_space<vmem>>, vector<128x128xf32>
    %cst_12 = arith.constant dense<0.000000e+00> : vector<128x128xf32>
    %11 = tpu.matmul %10, %9, %cst_12 {dimension_numbers = #tpu.dot_dimension_numbers<[1], [0], [0], [1], [0, 0, 1, 1], [], []>} : vector<128x128xf32>, vector<128x128xf32>, vector<128x128xf32> -> vector<128x128xf32>
    %c0_13 = arith.constant 0 : index
    %c0_14 = arith.constant 0 : index
    %12 = vector.load %arg5[%c0_13, %c0_14] : memref<128x128xf32, #tpu.memory_space<vmem>>, vector<128x128xf32>
    %cst_15 = arith.constant dense<0.000000e+00> : vector<128x128xf32>
    %13 = tpu.matmul %4, %12, %cst_15 {dimension_numbers = #tpu.dot_dimension_numbers<[1], [0], [0], [1], [0, 0, 1, 1], [], []>} : vector<128x128xf32>, vector<128x128xf32>, vector<128x128xf32> -> vector<128x128xf32>
    %c0_16 = arith.constant 0 : index
    %c0_17 = arith.constant 0 : index
    %14 = vector.load %arg6[%c0_16, %c0_17] : memref<128x128xf32, #tpu.memory_space<vmem>>, vector<128x128xf32>
    %cst_18 = arith.constant dense<0.000000e+00> : vector<128x128xf32>
    %15 = tpu.matmul %11, %14, %cst_18 {dimension_numbers = #tpu.dot_dimension_numbers<[1], [0], [0], [1], [0, 0, 1, 1], [], []>} : vector<128x128xf32>, vector<128x128xf32>, vector<128x128xf32> -> vector<128x128xf32>
    %16 = arith.addf %13, %15 : vector<128x128xf32>
    %c0_19 = arith.constant 0 : index
    %c0_20 = arith.constant 0 : index
    %17 = vector.load %arg7[%c0_19, %c0_20] : memref<1x128xf32, #tpu.memory_space<vmem>>, vector<1x128xf32>
    %18 = vector.broadcast %17 : vector<1x128xf32> to vector<128x128xf32>
    %19 = arith.addf %16, %18 : vector<128x128xf32>
    %cst_21 = arith.constant 0.000000e+00 : f32
    %20 = vector.broadcast %cst_21 : f32 to vector<128x128xf32>
    %21 = arith.maximumf %19, %20 : vector<128x128xf32>
    %c0_22 = arith.constant 0 : index
    %c0_23 = arith.constant 0 : index
    %22 = vector.load %arg8[%c0_22, %c0_23] : memref<128x128xf32, #tpu.memory_space<vmem>>, vector<128x128xf32>
    tpu.vector_store %arg8[%c0_22, %c0_23], %21 {strides = array<i32>} : memref<128x128xf32, #tpu.memory_space<vmem>>, vector<128x128xf32>,
    return
  }
  func.func @transform_0(%arg0: i32) -> (i32, i32) {
    %c0_i32 = arith.constant 0 : i32
    %c0_i32_0 = arith.constant 0 : i32
    return %arg0, %c0_i32 : i32, i32
  }
  func.func @transform_1(%arg0: i32) -> (i32, i32) {
    %c0_i32 = arith.constant 0 : i32
    %c0_i32_0 = arith.constant 0 : i32
    %c0_i32_1 = arith.constant 0 : i32
    return %c0_i32, %c0_i32_0 : i32, i32
  }
  func.func @transform_2(%arg0: i32) -> (i32, i32) {
    %c0_i32 = arith.constant 0 : i32
    %c0_i32_0 = arith.constant 0 : i32
    return %arg0, %c0_i32 : i32, i32
  }
  func.func @transform_3(%arg0: i32) -> (i32, i32) {
    %c0_i32 = arith.constant 0 : i32
    %c0_i32_0 = arith.constant 0 : i32
    %c0_i32_1 = arith.constant 0 : i32
    return %c0_i32, %c0_i32_0 : i32, i32
  }
  func.func @transform_4(%arg0: i32) -> (i32, i32) {
    %c0_i32 = arith.constant 0 : i32
    %c0_i32_0 = arith.constant 0 : i32
    %c0_i32_1 = arith.constant 0 : i32
    return %c0_i32, %c0_i32_0 : i32, i32
  }
  func.func @transform_5(%arg0: i32) -> (i32, i32) {
    %c0_i32 = arith.constant 0 : i32
    %c0_i32_0 = arith.constant 0 : i32
    %c0_i32_1 = arith.constant 0 : i32
    return %c0_i32, %c0_i32_0 : i32, i32
  }
  func.func @transform_6(%arg0: i32) -> (i32, i32) {
    %c0_i32 = arith.constant 0 : i32
    %c0_i32_0 = arith.constant 0 : i32
    %c0_i32_1 = arith.constant 0 : i32
    return %c0_i32, %c0_i32_0 : i32, i32
  }
  func.func @transform_7(%arg0: i32) -> (i32, i32) {
    %c0_i32 = arith.constant 0 : i32
    %c0_i32_0 = arith.constant 0 : i32
    return %arg0, %c0_i32 : i32, i32
  }
}

module attributes {stable_mosaic.version = 11 : i64} {
  func.func @_node_fused_kernel(%arg0: i32, %arg1: memref<128x128xf32, #tpu.memory_space<vmem>>, %arg2: memref<128x128xf32, #tpu.memory_space<vmem>>, %arg3: memref<128x128xf32, #tpu.memory_space<vmem>>, %arg4: memref<128x128xf32, #tpu.memory_space<vmem>>, %arg5: memref<128x128xf32, #tpu.memory_space<vmem>>, %arg6: memref<128x128xf32, #tpu.memory_space<vmem>>, %arg7: memref<1x128xf32, #tpu.memory_space<vmem>>, %arg8: memref<128x128xf32, #tpu.memory_space<vmem>>, %arg9: memref<128x128xf32, #tpu.memory_space<vmem>>, %arg10: memref<128x128xf32, #tpu.memory_space<vmem>>, %arg11: memref<1x128xf32, #tpu.memory_space<vmem>>, %arg12: memref<128x128xf32, #tpu.memory_space<vmem>>, %arg13: memref<128x128xf32, #tpu.memory_space<vmem>>, %arg14: memref<128x128xf32, #tpu.memory_space<vmem>>) attributes {dimension_semantics = [#tpu.dimension_semantics<parallel>], iteration_bounds = array<i64: 1>, scalar_prefetch = 0 : i64, scratch_operands = 0 : i64, tpu.core_type = #tpu.core_type<tc>, window_params = [{transform_indices = @transform_0, window_bounds = array<i64: 128, 128>}, {pipeline_mode = #tpu.pipeline_mode<synchronous>, transform_indices = @transform_1, window_bounds = array<i64: 128, 128>}, {transform_indices = @transform_2, window_bounds = array<i64: 128, 128>}, {pipeline_mode = #tpu.pipeline_mode<synchronous>, transform_indices = @transform_3, window_bounds = array<i64: 128, 128>}, {transform_indices = @transform_4, window_bounds = array<i64: 128, 128>}, {pipeline_mode = #tpu.pipeline_mode<synchronous>, transform_indices = @transform_5, window_bounds = array<i64: 128, 128>}, {pipeline_mode = #tpu.pipeline_mode<synchronous>, transform_indices = @transform_6, window_bounds = array<i64: 1, 128>}, {pipeline_mode = #tpu.pipeline_mode<synchronous>, transform_indices = @transform_7, window_bounds = array<i64: 128, 128>}, {pipeline_mode = #tpu.pipeline_mode<synchronous>, transform_indices = @transform_8, window_bounds = array<i64: 128, 128>}, {pipeline_mode = #tpu.pipeline_mode<synchronous>, transform_indices = @transform_9, window_bounds = array<i64: 128, 128>}, {pipeline_mode = #tpu.pipeline_mode<synchronous>, transform_indices = @transform_10, window_bounds = array<i64: 1, 128>}, {pipeline_mode = #tpu.pipeline_mode<synchronous>, transform_indices = @transform_11, window_bounds = array<i64: 128, 128>}, {pipeline_mode = #tpu.pipeline_mode<synchronous>, transform_indices = @transform_12, window_bounds = array<i64: 128, 128>}, {transform_indices = @transform_13, window_bounds = array<i64: 128, 128>}]} {
    %c0 = arith.constant 0 : index
    %c0_0 = arith.constant 0 : index
    %0 = vector.load %arg1[%c0, %c0_0] : memref<128x128xf32, #tpu.memory_space<vmem>>, vector<128x128xf32>
    %c0_1 = arith.constant 0 : index
    %c0_2 = arith.constant 0 : index
    %1 = vector.load %arg2[%c0_1, %c0_2] : memref<128x128xf32, #tpu.memory_space<vmem>>, vector<128x128xf32>
    %cst = arith.constant dense<0.000000e+00> : vector<128x128xf32>
    %2 = tpu.matmul %0, %1, %cst {dimension_numbers = #tpu.dot_dimension_numbers<[1], [0], [0], [1], [0, 0, 1, 1], [], []>} : vector<128x128xf32>, vector<128x128xf32>, vector<128x128xf32> -> vector<128x128xf32>
    %c0_3 = arith.constant 0 : index
    %c0_4 = arith.constant 0 : index
    %3 = vector.load %arg6[%c0_3, %c0_4] : memref<128x128xf32, #tpu.memory_space<vmem>>, vector<128x128xf32>
    %cst_5 = arith.constant dense<0.000000e+00> : vector<128x128xf32>
    %4 = tpu.matmul %2, %3, %cst_5 {dimension_numbers = #tpu.dot_dimension_numbers<[1], [0], [0], [1], [0, 0, 1, 1], [], []>} : vector<128x128xf32>, vector<128x128xf32>, vector<128x128xf32> -> vector<128x128xf32>
    %c0_6 = arith.constant 0 : index
    %c0_7 = arith.constant 0 : index
    %5 = vector.load %arg7[%c0_6, %c0_7] : memref<1x128xf32, #tpu.memory_space<vmem>>, vector<1x128xf32>
    %6 = vector.broadcast %5 : vector<1x128xf32> to vector<128x128xf32>
    %7 = arith.addf %4, %6 : vector<128x128xf32>
    %cst_8 = arith.constant 0.000000e+00 : f32
    %8 = vector.broadcast %cst_8 : f32 to vector<128x128xf32>
    %9 = arith.cmpf ogt, %7, %8 : vector<128x128xf32>
    %cst_9 = arith.constant 2.000000e-01 : f32
    %10 = vector.broadcast %cst_9 : f32 to vector<128x128xf32>
    %11 = arith.mulf %10, %7 : vector<128x128xf32>
    %12 = arith.select %9, %7, %11 : vector<128x128xi1>, vector<128x128xf32>
    %c0_10 = arith.constant 0 : index
    %c0_11 = arith.constant 0 : index
    %13 = vector.load %arg8[%c0_10, %c0_11] : memref<128x128xf32, #tpu.memory_space<vmem>>, vector<128x128xf32>
    %cst_12 = arith.constant dense<0.000000e+00> : vector<128x128xf32>
    %14 = tpu.matmul %12, %13, %cst_12 {dimension_numbers = #tpu.dot_dimension_numbers<[1], [0], [0], [1], [0, 0, 1, 1], [], []>} : vector<128x128xf32>, vector<128x128xf32>, vector<128x128xf32> -> vector<128x128xf32>
    %c0_13 = arith.constant 0 : index
    %c0_14 = arith.constant 0 : index
    %15 = vector.load %arg3[%c0_13, %c0_14] : memref<128x128xf32, #tpu.memory_space<vmem>>, vector<128x128xf32>
    %c0_15 = arith.constant 0 : index
    %c0_16 = arith.constant 0 : index
    %16 = vector.load %arg4[%c0_15, %c0_16] : memref<128x128xf32, #tpu.memory_space<vmem>>, vector<128x128xf32>
    %cst_17 = arith.constant dense<0.000000e+00> : vector<128x128xf32>
    %17 = tpu.matmul %15, %16, %cst_17 {dimension_numbers = #tpu.dot_dimension_numbers<[1], [0], [0], [1], [0, 0, 1, 1], [], []>} : vector<128x128xf32>, vector<128x128xf32>, vector<128x128xf32> -> vector<128x128xf32>
    %c0_18 = arith.constant 0 : index
    %c0_19 = arith.constant 0 : index
    %18 = vector.load %arg5[%c0_18, %c0_19] : memref<128x128xf32, #tpu.memory_space<vmem>>, vector<128x128xf32>
    %c0_20 = arith.constant 0 : index
    %c0_21 = arith.constant 0 : index
    %19 = vector.load %arg9[%c0_20, %c0_21] : memref<128x128xf32, #tpu.memory_space<vmem>>, vector<128x128xf32>
    %cst_22 = arith.constant dense<0.000000e+00> : vector<128x128xf32>
    %20 = tpu.matmul %18, %19, %cst_22 {dimension_numbers = #tpu.dot_dimension_numbers<[1], [0], [0], [1], [0, 0, 1, 1], [], []>} : vector<128x128xf32>, vector<128x128xf32>, vector<128x128xf32> -> vector<128x128xf32>
    %c0_23 = arith.constant 0 : index
    %c0_24 = arith.constant 0 : index
    %21 = vector.load %arg10[%c0_23, %c0_24] : memref<128x128xf32, #tpu.memory_space<vmem>>, vector<128x128xf32>
    %cst_25 = arith.constant dense<0.000000e+00> : vector<128x128xf32>
    %22 = tpu.matmul %17, %21, %cst_25 {dimension_numbers = #tpu.dot_dimension_numbers<[1], [0], [0], [1], [0, 0, 1, 1], [], []>} : vector<128x128xf32>, vector<128x128xf32>, vector<128x128xf32> -> vector<128x128xf32>
    %23 = arith.addf %20, %22 : vector<128x128xf32>
    %c0_26 = arith.constant 0 : index
    %c0_27 = arith.constant 0 : index
    %24 = vector.load %arg11[%c0_26, %c0_27] : memref<1x128xf32, #tpu.memory_space<vmem>>, vector<1x128xf32>
    %25 = vector.broadcast %24 : vector<1x128xf32> to vector<128x128xf32>
    %26 = arith.addf %23, %25 : vector<128x128xf32>
    %c0_28 = arith.constant 0 : index
    %c0_29 = arith.constant 0 : index
    %27 = vector.load %arg12[%c0_28, %c0_29] : memref<128x128xf32, #tpu.memory_space<vmem>>, vector<128x128xf32>
    %cst_30 = arith.constant dense<0.000000e+00> : vector<128x128xf32>
    %28 = tpu.matmul %26, %27, %cst_30 {dimension_numbers = #tpu.dot_dimension_numbers<[1], [0], [0], [1], [0, 0, 1, 1], [], []>} : vector<128x128xf32>, vector<128x128xf32>, vector<128x128xf32> -> vector<128x128xf32>
    %29 = arith.mulf %28, %26 : vector<128x128xf32>
    %cst_31 = arith.constant dense<0.000000e+00> : vector<128xf32>
    %30 = vector.multi_reduction <add>, %29, %cst_31 [1] : vector<128x128xf32> to vector<128xf32>
    %31 = vector.shape_cast %30 : vector<128xf32> to vector<128x1xf32>
    %cst_32 = arith.constant 0.176776692 : f32
    %32 = vector.broadcast %cst_32 : f32 to vector<128x1xf32>
    %33 = arith.mulf %31, %32 : vector<128x1xf32>
    %34 = arith.mulf %28, %14 : vector<128x128xf32>
    %cst_33 = arith.constant dense<0.000000e+00> : vector<128xf32>
    %35 = vector.multi_reduction <add>, %34, %cst_33 [1] : vector<128x128xf32> to vector<128xf32>
    %36 = vector.shape_cast %35 : vector<128xf32> to vector<128x1xf32>
    %cst_34 = arith.constant 0.176776692 : f32
    %37 = vector.broadcast %cst_34 : f32 to vector<128x1xf32>
    %38 = arith.mulf %36, %37 : vector<128x1xf32>
    %39 = arith.maximumf %33, %38 : vector<128x1xf32>
    %40 = arith.subf %33, %39 : vector<128x1xf32>
    %41 = math.exp %40 : vector<128x1xf32>
    %42 = arith.subf %38, %39 : vector<128x1xf32>
    %43 = math.exp %42 : vector<128x1xf32>
    %44 = arith.addf %41, %43 : vector<128x1xf32>
    %45 = tpu.reciprocal %44 {approx = true} : vector<128x1xf32> -> vector<128x1xf32>
    %46 = vector.broadcast %41 : vector<128x1xf32> to vector<128x128xf32>
    %47 = arith.mulf %46, %26 : vector<128x128xf32>
    %48 = vector.broadcast %43 : vector<128x1xf32> to vector<128x128xf32>
    %49 = arith.mulf %48, %14 : vector<128x128xf32>
    %50 = arith.addf %47, %49 : vector<128x128xf32>
    %51 = vector.broadcast %45 : vector<128x1xf32> to vector<128x128xf32>
    %52 = arith.mulf %50, %51 : vector<128x128xf32>
    %c0_35 = arith.constant 0 : index
    %c0_36 = arith.constant 0 : index
    %53 = vector.load %arg13[%c0_35, %c0_36] : memref<128x128xf32, #tpu.memory_space<vmem>>, vector<128x128xf32>
    %cst_37 = arith.constant dense<0.000000e+00> : vector<128x128xf32>
    %54 = tpu.matmul %52, %53, %cst_37 {dimension_numbers = #tpu.dot_dimension_numbers<[1], [0], [0], [1], [0, 0, 1, 1], [], []>} : vector<128x128xf32>, vector<128x128xf32>, vector<128x128xf32> -> vector<128x128xf32>
    %55 = tpu.iota {dimensions = array<i32: 1>} : vector<128x128xi32>
    %c8_i32 = arith.constant 8 : i32
    %56 = vector.broadcast %c8_i32 : i32 to vector<128x128xi32>
    %57 = arith.cmpi slt, %55, %56 : vector<128x128xi32>
    %cst_38 = arith.constant -1.000000e+30 : f32
    %58 = vector.broadcast %cst_38 : f32 to vector<128x128xf32>
    %59 = arith.select %57, %54, %58 : vector<128x128xi1>, vector<128x128xf32>
    %cst_39 = arith.constant dense<0xFF800000> : vector<128xf32>
    %60 = vector.multi_reduction <maximumf>, %59, %cst_39 [1] : vector<128x128xf32> to vector<128xf32>
    %61 = vector.shape_cast %60 : vector<128xf32> to vector<128x1xf32>
    %62 = vector.broadcast %61 : vector<128x1xf32> to vector<128x128xf32>
    %63 = arith.subf %59, %62 : vector<128x128xf32>
    %64 = math.exp %63 : vector<128x128xf32>
    %cst_40 = arith.constant dense<0.000000e+00> : vector<128xf32>
    %65 = vector.multi_reduction <add>, %64, %cst_40 [1] : vector<128x128xf32> to vector<128xf32>
    %66 = vector.shape_cast %65 : vector<128xf32> to vector<128x1xf32>
    %67 = math.log %66 : vector<128x1xf32>
    %68 = vector.broadcast %67 : vector<128x1xf32> to vector<128x128xf32>
    %69 = arith.subf %63, %68 : vector<128x128xf32>
    %c0_41 = arith.constant 0 : index
    %c0_42 = arith.constant 0 : index
    %70 = vector.load %arg14[%c0_41, %c0_42] : memref<128x128xf32, #tpu.memory_space<vmem>>, vector<128x128xf32>
    tpu.vector_store %arg14[%c0_41, %c0_42], %69 {strides = array<i32>} : memref<128x128xf32, #tpu.memory_space<vmem>>, vector<128x128xf32>,
    return
  }
  func.func @transform_0(%arg0: i32) -> (i32, i32) {
    %c0_i32 = arith.constant 0 : i32
    %c0_i32_0 = arith.constant 0 : i32
    return %arg0, %c0_i32 : i32, i32
  }
  func.func @transform_1(%arg0: i32) -> (i32, i32) {
    %c0_i32 = arith.constant 0 : i32
    %c0_i32_0 = arith.constant 0 : i32
    %c0_i32_1 = arith.constant 0 : i32
    return %c0_i32, %c0_i32_0 : i32, i32
  }
  func.func @transform_2(%arg0: i32) -> (i32, i32) {
    %c0_i32 = arith.constant 0 : i32
    %c0_i32_0 = arith.constant 0 : i32
    return %arg0, %c0_i32 : i32, i32
  }
  func.func @transform_3(%arg0: i32) -> (i32, i32) {
    %c0_i32 = arith.constant 0 : i32
    %c0_i32_0 = arith.constant 0 : i32
    %c0_i32_1 = arith.constant 0 : i32
    return %c0_i32, %c0_i32_0 : i32, i32
  }
  func.func @transform_4(%arg0: i32) -> (i32, i32) {
    %c0_i32 = arith.constant 0 : i32
    %c0_i32_0 = arith.constant 0 : i32
    return %arg0, %c0_i32 : i32, i32
  }
  func.func @transform_5(%arg0: i32) -> (i32, i32) {
    %c0_i32 = arith.constant 0 : i32
    %c0_i32_0 = arith.constant 0 : i32
    %c0_i32_1 = arith.constant 0 : i32
    return %c0_i32, %c0_i32_0 : i32, i32
  }
  func.func @transform_6(%arg0: i32) -> (i32, i32) {
    %c0_i32 = arith.constant 0 : i32
    %c0_i32_0 = arith.constant 0 : i32
    %c0_i32_1 = arith.constant 0 : i32
    return %c0_i32, %c0_i32_0 : i32, i32
  }
  func.func @transform_7(%arg0: i32) -> (i32, i32) {
    %c0_i32 = arith.constant 0 : i32
    %c0_i32_0 = arith.constant 0 : i32
    %c0_i32_1 = arith.constant 0 : i32
    return %c0_i32, %c0_i32_0 : i32, i32
  }
  func.func @transform_8(%arg0: i32) -> (i32, i32) {
    %c0_i32 = arith.constant 0 : i32
    %c0_i32_0 = arith.constant 0 : i32
    %c0_i32_1 = arith.constant 0 : i32
    return %c0_i32, %c0_i32_0 : i32, i32
  }
  func.func @transform_9(%arg0: i32) -> (i32, i32) {
    %c0_i32 = arith.constant 0 : i32
    %c0_i32_0 = arith.constant 0 : i32
    %c0_i32_1 = arith.constant 0 : i32
    return %c0_i32, %c0_i32_0 : i32, i32
  }
  func.func @transform_10(%arg0: i32) -> (i32, i32) {
    %c0_i32 = arith.constant 0 : i32
    %c0_i32_0 = arith.constant 0 : i32
    %c0_i32_1 = arith.constant 0 : i32
    return %c0_i32, %c0_i32_0 : i32, i32
  }
  func.func @transform_11(%arg0: i32) -> (i32, i32) {
    %c0_i32 = arith.constant 0 : i32
    %c0_i32_0 = arith.constant 0 : i32
    %c0_i32_1 = arith.constant 0 : i32
    return %c0_i32, %c0_i32_0 : i32, i32
  }
  func.func @transform_12(%arg0: i32) -> (i32, i32) {
    %c0_i32 = arith.constant 0 : i32
    %c0_i32_0 = arith.constant 0 : i32
    %c0_i32_1 = arith.constant 0 : i32
    return %c0_i32, %c0_i32_0 : i32, i32
  }
  func.func @transform_13(%arg0: i32) -> (i32, i32) {
    %c0_i32 = arith.constant 0 : i32
    %c0_i32_0 = arith.constant 0 : i32
    return %arg0, %c0_i32 : i32, i32
  }
}

</mosaic_0001>

<llo_original>
// kernel: forward.4
$region0: #{forward.4}
  #allocation0 [shape = 'u32[]', space=smem, size = 0x4, offset = 0x4, fixed_abs, tag = 'smem constant byte address 0x4 - core index']
  #allocation1 [shape = 'u32[144,128]{1,0:T(1,128)}', space=vmem, size = 0x12000, scoped, tag = 'internal scratch']
  %s0 = inlined_call_operand.vmem [shape: f32[128,16], index: 0, kind: input, shape index: {}, may-alias: {0,1}]
  %s1 = inlined_call_operand.vmem [shape: f32[128,16], index: 1, kind: input, shape index: {}, may-alias: {0,1}]
  %s2 = inlined_call_operand.vmem [shape: f32[128,128], index: 2, kind: input, shape index: {}]
  %s3 = inlined_call_operand.vmem [shape: f32[16,128], index: 3, kind: input, shape index: {}]
  %s4 = inlined_call_operand.vmem [shape: f32[16,128], index: 4, kind: input, shape index: {}]
  %s5 = inlined_call_operand.vmem [shape: f32[1,128], index: 5, kind: input, shape index: {}]
  %s6 = inlined_call_operand.vmem [shape: f32[128,128], index: 6, kind: output, shape index: {}]
  %s7 = sld [smem:[#allocation0]]
  $region34: #{forward.4} parent=0
    _
  %s9 = ssub.s32 1, %s7
  %s10 = scalar_select 0, %s9, %s7
  // Predicated region
  $region2: #{forward.4} parent=0 // pred_check
    _
  $region3: #{forward.4} parent=0 // pred_check_branch
    %12 = sbr.rel (0) target = $region5
  $region4: #{forward.4} parent=0 // pred_region
    _
  $region5: #{forward.4} parent=0 // pred_fallthru
    _
  // Predicated region
  $region6: #{forward.4} parent=0 // pred_check
    _
  $region7: #{forward.4} parent=0 // pred_check_branch
    %14 = sbr.rel (0) target = $region9
  $region8: #{forward.4} parent=0 // pred_region
    _
  $region9: #{forward.4} parent=0 // pred_fallthru
    _
  // Predicated region
  $region10: #{forward.4} parent=0 // pred_check
    _
  $region11: #{forward.4} parent=0 // pred_check_branch
    %16 = sbr.rel (0) target = $region13
  $region12: #{forward.4} parent=0 // pred_region
    _
  $region13: #{forward.4} parent=0 // pred_fallthru
    _
  // Predicated region
  $region14: #{forward.4} parent=0 // pred_check
    _
  $region15: #{forward.4} parent=0 // pred_check_branch
    %18 = sbr.rel (0) target = $region17
  $region16: #{forward.4} parent=0 // pred_region
    _
  $region17: #{forward.4} parent=0 // pred_fallthru
    _
  // Predicated region
  $region18: #{forward.4} parent=0 // pred_check
    _
  $region19: #{forward.4} parent=0 // pred_check_branch
    %20 = sbr.rel (0) target = $region21
  $region20: #{forward.4} parent=0 // pred_region
    _
  $region21: #{forward.4} parent=0 // pred_fallthru
    _
  // Predicated region
  $region22: #{forward.4} parent=0 // pred_check
    _
  $region23: #{forward.4} parent=0 // pred_check_branch
    %22 = sbr.rel (0) target = $region25
  $region24: #{forward.4} parent=0 // pred_region
    _
  $region25: #{forward.4} parent=0 // pred_fallthru
    _
  %v23 = vld [vmem:[%s2] sm:$0xff]
  %v24 = vld [vmem:[%s2 + $0x8] sm:$0xff]
  %v25 = vld [vmem:[%s2 + $0x10] sm:$0xff]
  %v26 = vld [vmem:[%s2 + $0x18] sm:$0xff]
  %v27 = vld [vmem:[%s2 + $0x20] sm:$0xff]
  %v28 = vld [vmem:[%s2 + $0x28] sm:$0xff]
  %v29 = vld [vmem:[%s2 + $0x30] sm:$0xff]
  %v30 = vld [vmem:[%s2 + $0x38] sm:$0xff]
  %v31 = vld [vmem:[%s2 + $0x40] sm:$0xff]
  %v32 = vld [vmem:[%s2 + $0x48] sm:$0xff]
  %v33 = vld [vmem:[%s2 + $0x50] sm:$0xff]
  %v34 = vld [vmem:[%s2 + $0x58] sm:$0xff]
  %v35 = vld [vmem:[%s2 + $0x60] sm:$0xff]
  %v36 = vld [vmem:[%s2 + $0x68] sm:$0xff]
  %v37 = vld [vmem:[%s2 + $0x70] sm:$0xff]
  %v38 = vld [vmem:[%s2 + $0x78] sm:$0xff]
  %v39 = vld [vmem:[%s1] sm:$0xff]
  %v40 = vld [vmem:[%s1 + $0x8] sm:$0xff]
  %v41 = vld [vmem:[%s1 + $0x10] sm:$0xff]
  %v42 = vld [vmem:[%s1 + $0x18] sm:$0xff]
  %v43 = vld [vmem:[%s1 + $0x20] sm:$0xff]
  %v44 = vld [vmem:[%s1 + $0x28] sm:$0xff]
  %v45 = vld [vmem:[%s1 + $0x30] sm:$0xff]
  %v46 = vld [vmem:[%s1 + $0x38] sm:$0xff]
  %v47 = vld [vmem:[%s1 + $0x40] sm:$0xff]
  %v48 = vld [vmem:[%s1 + $0x48] sm:$0xff]
  %v49 = vld [vmem:[%s1 + $0x50] sm:$0xff]
  %v50 = vld [vmem:[%s1 + $0x58] sm:$0xff]
  %v51 = vld [vmem:[%s1 + $0x60] sm:$0xff]
  %v52 = vld [vmem:[%s1 + $0x68] sm:$0xff]
  %v53 = vld [vmem:[%s1 + $0x70] sm:$0xff]
  %v54 = vld [vmem:[%s1 + $0x78] sm:$0xff]
  %55 = vmatprep.subr.mxu0 0.0
  %56 = vmatpush1.msra.mxu0 %v39
  %57 = vmatprep.subr.mxu0 0.0
  %58 = vmatpush1.msra.mxu0 %v40
  %59 = vmatprep.subr.mxu0 0.0
  %60 = vmatpush1.msra.mxu0 %v41
  %61 = vmatprep.subr.mxu0 0.0
  %62 = vmatpush1.msra.mxu0 %v42
  %63 = vmatprep.subr.mxu0 0.0
  %64 = vmatpush1.msra.mxu0 %v43
  %65 = vmatprep.subr.mxu0 0.0
  %66 = vmatpush1.msra.mxu0 %v44
  %67 = vmatprep.subr.mxu0 0.0
  %68 = vmatpush1.msra.mxu0 %v45
  %69 = vmatprep.subr.mxu0 0.0
  %70 = vmatpush1.msra.mxu0 %v46
  %71 = vmatprep.subr.mxu0 0.0
  %72 = vmatpush1.msra.mxu0 %v47
  %73 = vmatprep.subr.mxu0 0.0
  %74 = vmatpush1.msra.mxu0 %v48
  %75 = vmatprep.subr.mxu0 0.0
  %76 = vmatpush1.msra.mxu0 %v49
  %77 = vmatprep.subr.mxu0 0.0
  %78 = vmatpush1.msra.mxu0 %v50
  %79 = vmatprep.subr.mxu0 0.0
  %80 = vmatpush1.msra.mxu0 %v51
  %81 = vmatprep.subr.mxu0 0.0
  %82 = vmatpush1.msra.mxu0 %v52
  %83 = vmatprep.subr.mxu0 0.0
  %84 = vmatpush1.msra.mxu0 %v53
  %85 = vmatprep.subr.mxu0 0.0
  %86 = vmatpush1.msra.mxu0 %v54
  %87 = vmatprep.subr.mxu0 0.0
  %88 = vmatpush1.msra.mxu0 0.0
  %89 = vmatprep.subr.mxu0 0.0
  %90 = vmatpush1.msra.mxu0 0.0
  %91 = vmatprep.subr.mxu0 0.0
  %92 = vmatpush1.msra.mxu0 0.0
  %93 = vmatprep.subr.mxu0 0.0
  %94 = vmatpush1.msra.mxu0 0.0
  %95 = vmatprep.subr.mxu0 0.0
  %96 = vmatpush1.msra.mxu0 0.0
  %97 = vmatprep.subr.mxu0 0.0
  %98 = vmatpush1.msra.mxu0 0.0
  %99 = vmatprep.subr.mxu0 0.0
  %100 = vmatpush1.msra.mxu0 0.0
  %101 = vmatprep.subr.mxu0 0.0
  %102 = vmatpush1.msra.mxu0 0.0
  %103 = vmatprep.subr.mxu0 0.0
  %104 = vmatpush1.msra.mxu0 0.0
  %105 = vmatprep.subr.mxu0 0.0
  %106 = vmatpush1.msra.mxu0 0.0
  %107 = vmatprep.subr.mxu0 0.0
  %108 = vmatpush1.msra.mxu0 0.0
  %109 = vmatprep.subr.mxu0 0.0
  %110 = vmatpush1.msra.mxu0 0.0
  %111 = vmatprep.subr.mxu0 0.0
  %112 = vmatpush1.msra.mxu0 0.0
  %113 = vmatprep.subr.mxu0 0.0
  %114 = vmatpush1.msra.mxu0 0.0
  %115 = vmatprep.subr.mxu0 0.0
  %116 = vmatpush1.msra.mxu0 0.0
  %117 = vmatprep.subr.mxu0 0.0
  %118 = vmatpush1.msra.mxu0 0.0
  %119 = vmatprep.mubr.f32.mxu0 0.0
  %120 = vmatmul.mubr.f32.gmra.mrb[0].mxu0 %v23
  %v121 = vpop.f32.mrb[0].mxu0
  %v122 = vadd.f32 0.0, %v121
  %v123 = vpop.f32.mrb[0].mxu0
  %124 = vmatprep.mubr.f32.mxu0 0.0
  %125 = vmatmul.mubr.f32.gmra.mrb[0].mxu0 %v24
  %v126 = vpop.f32.mrb[0].mxu0
  %v127 = vadd.f32 0.0, %v126
  %v128 = vpop.f32.mrb[0].mxu0
  %129 = vmatprep.mubr.f32.mxu0 0.0
  %130 = vmatmul.mubr.f32.gmra.mrb[0].mxu0 %v25
  %v131 = vpop.f32.mrb[0].mxu0
  %v132 = vadd.f32 0.0, %v131
  %v133 = vpop.f32.mrb[0].mxu0
  %134 = vmatprep.mubr.f32.mxu0 0.0
  %135 = vmatmul.mubr.f32.gmra.mrb[0].mxu0 %v26
  %v136 = vpop.f32.mrb[0].mxu0
  %v137 = vadd.f32 0.0, %v136
  %v138 = vpop.f32.mrb[0].mxu0
  %139 = vmatprep.mubr.f32.mxu0 0.0
  %140 = vmatmul.mubr.f32.gmra.mrb[0].mxu0 %v27
  %v141 = vpop.f32.mrb[0].mxu0
  %v142 = vadd.f32 0.0, %v141
  %v143 = vpop.f32.mrb[0].mxu0
  %144 = vmatprep.mubr.f32.mxu0 0.0
  %145 = vmatmul.mubr.f32.gmra.mrb[0].mxu0 %v28
  %v146 = vpop.f32.mrb[0].mxu0
  %v147 = vadd.f32 0.0, %v146
  %v148 = vpop.f32.mrb[0].mxu0
  %149 = vmatprep.mubr.f32.mxu0 0.0
  %150 = vmatmul.mubr.f32.gmra.mrb[0].mxu0 %v29
  %v151 = vpop.f32.mrb[0].mxu0
  %v152 = vadd.f32 0.0, %v151
  %v153 = vpop.f32.mrb[0].mxu0
  %154 = vmatprep.mubr.f32.mxu0 0.0
  %155 = vmatmul.mubr.f32.gmra.mrb[0].mxu0 %v30
  %v156 = vpop.f32.mrb[0].mxu0
  %v157 = vadd.f32 0.0, %v156
  %v158 = vpop.f32.mrb[0].mxu0
  %159 = vmatprep.mubr.f32.mxu0 0.0
  %160 = vmatmul.mubr.f32.gmra.mrb[0].mxu0 %v31
  %v161 = vpop.f32.mrb[0].mxu0
  %v162 = vadd.f32 0.0, %v161
  %v163 = vpop.f32.mrb[0].mxu0
  %164 = vmatprep.mubr.f32.mxu0 0.0
  %165 = vmatmul.mubr.f32.gmra.mrb[0].mxu0 %v32
  %v166 = vpop.f32.mrb[0].mxu0
  %v167 = vadd.f32 0.0, %v166
  %v168 = vpop.f32.mrb[0].mxu0
  %169 = vmatprep.mubr.f32.mxu0 0.0
  %170 = vmatmul.mubr.f32.gmra.mrb[0].mxu0 %v33
  %v171 = vpop.f32.mrb[0].mxu0
  %v172 = vadd.f32 0.0, %v171
  %v173 = vpop.f32.mrb[0].mxu0
  %174 = vmatprep.mubr.f32.mxu0 0.0
  %175 = vmatmul.mubr.f32.gmra.mrb[0].mxu0 %v34
  %v176 = vpop.f32.mrb[0].mxu0
  %v177 = vadd.f32 0.0, %v176
  %v178 = vpop.f32.mrb[0].mxu0
  %179 = vmatprep.mubr.f32.mxu0 0.0
  %180 = vmatmul.mubr.f32.gmra.mrb[0].mxu0 %v35
  %v181 = vpop.f32.mrb[0].mxu0
  %v182 = vadd.f32 0.0, %v181
  %v183 = vpop.f32.mrb[0].mxu0
  %184 = vmatprep.mubr.f32.mxu0 0.0
  %185 = vmatmul.mubr.f32.gmra.mrb[0].mxu0 %v36
  %v186 = vpop.f32.mrb[0].mxu0
  %v187 = vadd.f32 0.0, %v186
  %v188 = vpop.f32.mrb[0].mxu0
  %189 = vmatprep.mubr.f32.mxu0 0.0
  %190 = vmatmul.mubr.f32.gmra.mrb[0].mxu0 %v37
  %v191 = vpop.f32.mrb[0].mxu0
  %v192 = vadd.f32 0.0, %v191
  %v193 = vpop.f32.mrb[0].mxu0
  %194 = vmatprep.mubr.f32.mxu0 0.0
  %195 = vmatmul.mubr.f32.gmra.mrb[0].mxu0 %v38
  %v196 = vpop.f32.mrb[0].mxu0
  %v197 = vadd.f32 0.0, %v196
  %v198 = vpop.f32.mrb[0].mxu0
  %199 = vdwg.mxu0
  %v200 = vld [vmem:[%s0] sm:$0xff]
  %v201 = vld [vmem:[%s0 + $0x8] sm:$0xff]
  %v202 = vld [vmem:[%s0 + $0x10] sm:$0xff]
  %v203 = vld [vmem:[%s0 + $0x18] sm:$0xff]
  %v204 = vld [vmem:[%s0 + $0x20] sm:$0xff]
  %v205 = vld [vmem:[%s0 + $0x28] sm:$0xff]
  %v206 = vld [vmem:[%s0 + $0x30] sm:$0xff]
  %v207 = vld [vmem:[%s0 + $0x38] sm:$0xff]
  %v208 = vld [vmem:[%s0 + $0x40] sm:$0xff]
  %v209 = vld [vmem:[%s0 + $0x48] sm:$0xff]
  %v210 = vld [vmem:[%s0 + $0x50] sm:$0xff]
  %v211 = vld [vmem:[%s0 + $0x58] sm:$0xff]
  %v212 = vld [vmem:[%s0 + $0x60] sm:$0xff]
  %v213 = vld [vmem:[%s0 + $0x68] sm:$0xff]
  %v214 = vld [vmem:[%s0 + $0x70] sm:$0xff]
  %v215 = vld [vmem:[%s0 + $0x78] sm:$0xff]
  %v216 = vld [vmem:[%s3] sm:$0xff]
  %v217 = vld [vmem:[%s3 + $0x8] sm:$0xff]
  %v218 = vld [vmem:[%s4] sm:$0xff]
  %v219 = vld [vmem:[%s4 + $0x8] sm:$0xff]
  %vm220 = vcmask 130048
  %v222 = vsel %vm220, %v122, 0
  %v225 = vsel %vm220, %v127, 0
  %v228 = vsel %vm220, %v132, 0
  %v231 = vsel %vm220, %v137, 0
  %v234 = vsel %vm220, %v142, 0
  %v237 = vsel %vm220, %v147, 0
  %v240 = vsel %vm220, %v152, 0
  %v243 = vsel %vm220, %v157, 0
  %v246 = vsel %vm220, %v162, 0
  %v249 = vsel %vm220, %v167, 0
  %v252 = vsel %vm220, %v172, 0
  %v255 = vsel %vm220, %v177, 0
  %v258 = vsel %vm220, %v182, 0
  %v261 = vsel %vm220, %v187, 0
  %v264 = vsel %vm220, %v192, 0
  %v267 = vsel %vm220, %v197, 0
  %269 = vmatprep.subr.mxu0 0.0
  %270 = vmatpush1.msra.mxu0 %v218
  %271 = vmatprep.subr.mxu0 0.0
  %272 = vmatpush1.msra.mxu0 %v219
  %273 = vmatprep.subr.mxu0 0.0
  %274 = vmatpush1.msra.mxu0 0.0
  %275 = vmatprep.subr.mxu0 0.0
  %276 = vmatpush1.msra.mxu0 0.0
  %277 = vmatprep.subr.mxu0 0.0
  %278 = vmatpush1.msra.mxu0 0.0
  %279 = vmatprep.subr.mxu0 0.0
  %280 = vmatpush1.msra.mxu0 0.0
  %281 = vmatprep.subr.mxu0 0.0
  %282 = vmatpush1.msra.mxu0 0.0
  %283 = vmatprep.subr.mxu0 0.0
  %284 = vmatpush1.msra.mxu0 0.0
  %285 = vmatprep.subr.mxu0 0.0
  %286 = vmatpush1.msra.mxu0 0.0
  %287 = vmatprep.subr.mxu0 0.0
  %288 = vmatpush1.msra.mxu0 0.0
  %289 = vmatprep.subr.mxu0 0.0
  %290 = vmatpush1.msra.mxu0 0.0
  %291 = vmatprep.subr.mxu0 0.0
  %292 = vmatpush1.msra.mxu0 0.0
  %293 = vmatprep.subr.mxu0 0.0
  %294 = vmatpush1.msra.mxu0 0.0
  %295 = vmatprep.subr.mxu0 0.0
  %296 = vmatpush1.msra.mxu0 0.0
  %297 = vmatprep.subr.mxu0 0.0
  %298 = vmatpush1.msra.mxu0 0.0
  %299 = vmatprep.subr.mxu0 0.0
  %300 = vmatpush1.msra.mxu0 0.0
  %301 = vmatprep.subr.mxu0 0.0
  %302 = vmatpush1.msra.mxu0 0.0
  %303 = vmatprep.subr.mxu0 0.0
  %304 = vmatpush1.msra.mxu0 0.0
  %305 = vmatprep.subr.mxu0 0.0
  %306 = vmatpush1.msra.mxu0 0.0
  %307 = vmatprep.subr.mxu0 0.0
  %308 = vmatpush1.msra.mxu0 0.0
  %309 = vmatprep.subr.mxu0 0.0
  %310 = vmatpush1.msra.mxu0 0.0
  %311 = vmatprep.subr.mxu0 0.0
  %312 = vmatpush1.msra.mxu0 0.0
  %313 = vmatprep.subr.mxu0 0.0
  %314 = vmatpush1.msra.mxu0 0.0
  %315 = vmatprep.subr.mxu0 0.0
  %316 = vmatpush1.msra.mxu0 0.0
  %317 = vmatprep.subr.mxu0 0.0
  %318 = vmatpush1.msra.mxu0 0.0
  %319 = vmatprep.subr.mxu0 0.0
  %320 = vmatpush1.msra.mxu0 0.0
  %321 = vmatprep.subr.mxu0 0.0
  %322 = vmatpush1.msra.mxu0 0.0
  %323 = vmatprep.subr.mxu0 0.0
  %324 = vmatpush1.msra.mxu0 0.0
  %325 = vmatprep.subr.mxu0 0.0
  %326 = vmatpush1.msra.mxu0 0.0
  %327 = vmatprep.subr.mxu0 0.0
  %328 = vmatpush1.msra.mxu0 0.0
  %329 = vmatprep.subr.mxu0 0.0
  %330 = vmatpush1.msra.mxu0 0.0
  %331 = vmatprep.subr.mxu0 0.0
  %332 = vmatpush1.msra.mxu0 0.0
  %333 = vmatprep.mubr.f32.mxu0 0.0
  %334 = vmatmul.mubr.f32.gmra.mrb[0].mxu0 %v222
  %v335 = vpop.f32.mrb[0].mxu0
  %v336 = vadd.f32 0.0, %v335
  %v337 = vpop.f32.mrb[0].mxu0
  %338 = vmatprep.mubr.f32.mxu0 0.0
  %339 = vmatmul.mubr.f32.gmra.mrb[0].mxu0 %v225
  %v340 = vpop.f32.mrb[0].mxu0
  %v341 = vadd.f32 0.0, %v340
  %v342 = vpop.f32.mrb[0].mxu0
  %343 = vmatprep.mubr.f32.mxu0 0.0
  %344 = vmatmul.mubr.f32.gmra.mrb[0].mxu0 %v228
  %v345 = vpop.f32.mrb[0].mxu0
  %v346 = vadd.f32 0.0, %v345
  %v347 = vpop.f32.mrb[0].mxu0
  %348 = vmatprep.mubr.f32.mxu0 0.0
  %349 = vmatmul.mubr.f32.gmra.mrb[0].mxu0 %v231
  %v350 = vpop.f32.mrb[0].mxu0
  %v351 = vadd.f32 0.0, %v350
  %v352 = vpop.f32.mrb[0].mxu0
  %353 = vmatprep.mubr.f32.mxu0 0.0
  %354 = vmatmul.mubr.f32.gmra.mrb[0].mxu0 %v234
  %v355 = vpop.f32.mrb[0].mxu0
  %v356 = vadd.f32 0.0, %v355
  %v357 = vpop.f32.mrb[0].mxu0
  %358 = vmatprep.mubr.f32.mxu0 0.0
  %359 = vmatmul.mubr.f32.gmra.mrb[0].mxu0 %v237
  %v360 = vpop.f32.mrb[0].mxu0
  %v361 = vadd.f32 0.0, %v360
  %v362 = vpop.f32.mrb[0].mxu0
  %363 = vmatprep.mubr.f32.mxu0 0.0
  %364 = vmatmul.mubr.f32.gmra.mrb[0].mxu0 %v240
  %v365 = vpop.f32.mrb[0].mxu0
  %v366 = vadd.f32 0.0, %v365
  %v367 = vpop.f32.mrb[0].mxu0
  %368 = vmatprep.mubr.f32.mxu0 0.0
  %369 = vmatmul.mubr.f32.gmra.mrb[0].mxu0 %v243
  %v370 = vpop.f32.mrb[0].mxu0
  %v371 = vadd.f32 0.0, %v370
  %v372 = vpop.f32.mrb[0].mxu0
  %373 = vmatprep.mubr.f32.mxu0 0.0
  %374 = vmatmul.mubr.f32.gmra.mrb[0].mxu0 %v246
  %v375 = vpop.f32.mrb[0].mxu0
  %v376 = vadd.f32 0.0, %v375
  %v377 = vpop.f32.mrb[0].mxu0
  %378 = vmatprep.mubr.f32.mxu0 0.0
  %379 = vmatmul.mubr.f32.gmra.mrb[0].mxu0 %v249
  %v380 = vpop.f32.mrb[0].mxu0
  %v381 = vadd.f32 0.0, %v380
  %v382 = vpop.f32.mrb[0].mxu0
  %383 = vmatprep.mubr.f32.mxu0 0.0
  %384 = vmatmul.mubr.f32.gmra.mrb[0].mxu0 %v252
  %v385 = vpop.f32.mrb[0].mxu0
  %v386 = vadd.f32 0.0, %v385
  %v387 = vpop.f32.mrb[0].mxu0
  %388 = vmatprep.mubr.f32.mxu0 0.0
  %389 = vmatmul.mubr.f32.gmra.mrb[0].mxu0 %v255
  %v390 = vpop.f32.mrb[0].mxu0
  %v391 = vadd.f32 0.0, %v390
  %v392 = vpop.f32.mrb[0].mxu0
  %393 = vmatprep.mubr.f32.mxu0 0.0
  %394 = vmatmul.mubr.f32.gmra.mrb[0].mxu0 %v258
  %v395 = vpop.f32.mrb[0].mxu0
  %v396 = vadd.f32 0.0, %v395
  %v397 = vpop.f32.mrb[0].mxu0
  %398 = vmatprep.mubr.f32.mxu0 0.0
  %399 = vmatmul.mubr.f32.gmra.mrb[0].mxu0 %v261
  %v400 = vpop.f32.mrb[0].mxu0
  %v401 = vadd.f32 0.0, %v400
  %v402 = vpop.f32.mrb[0].mxu0
  %403 = vmatprep.mubr.f32.mxu0 0.0
  %404 = vmatmul.mubr.f32.gmra.mrb[0].mxu0 %v264
  %v405 = vpop.f32.mrb[0].mxu0
  %v406 = vadd.f32 0.0, %v405
  %v407 = vpop.f32.mrb[0].mxu0
  %408 = vmatprep.mubr.f32.mxu0 0.0
  %409 = vmatmul.mubr.f32.gmra.mrb[0].mxu0 %v267
  %v410 = vpop.f32.mrb[0].mxu0
  %v411 = vadd.f32 0.0, %v410
  %v412 = vpop.f32.mrb[0].mxu0
  %413 = vdwg.mxu0
  %v415 = vsel %vm220, %v200, 0
  %v418 = vsel %vm220, %v201, 0
  %v421 = vsel %vm220, %v202, 0
  %v424 = vsel %vm220, %v203, 0
  %v427 = vsel %vm220, %v204, 0
  %v430 = vsel %vm220, %v205, 0
  %v433 = vsel %vm220, %v206, 0
  %v436 = vsel %vm220, %v207, 0
  %v439 = vsel %vm220, %v208, 0
  %v442 = vsel %vm220, %v209, 0
  %v445 = vsel %vm220, %v210, 0
  %v448 = vsel %vm220, %v211, 0
  %v451 = vsel %vm220, %v212, 0
  %v454 = vsel %vm220, %v213, 0
  %v457 = vsel %vm220, %v214, 0
  %v460 = vsel %vm220, %v215, 0
  %462 = vmatprep.subr.mxu0 0.0
  %463 = vmatpush1.msra.mxu0 %v216
  %464 = vmatprep.subr.mxu0 0.0
  %465 = vmatpush1.msra.mxu0 %v217
  %466 = vmatprep.subr.mxu0 0.0
  %467 = vmatpush1.msra.mxu0 0.0
  %468 = vmatprep.subr.mxu0 0.0
  %469 = vmatpush1.msra.mxu0 0.0
  %470 = vmatprep.subr.mxu0 0.0
  %471 = vmatpush1.msra.mxu0 0.0
  %472 = vmatprep.subr.mxu0 0.0
  %473 = vmatpush1.msra.mxu0 0.0
  %474 = vmatprep.subr.mxu0 0.0
  %475 = vmatpush1.msra.mxu0 0.0
  %476 = vmatprep.subr.mxu0 0.0
  %477 = vmatpush1.msra.mxu0 0.0
  %478 = vmatprep.subr.mxu0 0.0
  %479 = vmatpush1.msra.mxu0 0.0
  %480 = vmatprep.subr.mxu0 0.0
  %481 = vmatpush1.msra.mxu0 0.0
  %482 = vmatprep.subr.mxu0 0.0
  %483 = vmatpush1.msra.mxu0 0.0
  %484 = vmatprep.subr.mxu0 0.0
  %485 = vmatpush1.msra.mxu0 0.0
  %486 = vmatprep.subr.mxu0 0.0
  %487 = vmatpush1.msra.mxu0 0.0
  %488 = vmatprep.subr.mxu0 0.0
  %489 = vmatpush1.msra.mxu0 0.0
  %490 = vmatprep.subr.mxu0 0.0
  %491 = vmatpush1.msra.mxu0 0.0
  %492 = vmatprep.subr.mxu0 0.0
  %493 = vmatpush1.msra.mxu0 0.0
  %494 = vmatprep.subr.mxu0 0.0
  %495 = vmatpush1.msra.mxu0 0.0
  %496 = vmatprep.subr.mxu0 0.0
  %497 = vmatpush1.msra.mxu0 0.0
  %498 = vmatprep.subr.mxu0 0.0
  %499 = vmatpush1.msra.mxu0 0.0
  %500 = vmatprep.subr.mxu0 0.0
  %501 = vmatpush1.msra.mxu0 0.0
  %502 = vmatprep.subr.mxu0 0.0
  %503 = vmatpush1.msra.mxu0 0.0
  %504 = vmatprep.subr.mxu0 0.0
  %505 = vmatpush1.msra.mxu0 0.0
  %506 = vmatprep.subr.mxu0 0.0
  %507 = vmatpush1.msra.mxu0 0.0
  %508 = vmatprep.subr.mxu0 0.0
  %509 = vmatpush1.msra.mxu0 0.0
  %510 = vmatprep.subr.mxu0 0.0
  %511 = vmatpush1.msra.mxu0 0.0
  %512 = vmatprep.subr.mxu0 0.0
  %513 = vmatpush1.msra.mxu0 0.0
  %514 = vmatprep.subr.mxu0 0.0
  %515 = vmatpush1.msra.mxu0 0.0
  %516 = vmatprep.subr.mxu0 0.0
  %517 = vmatpush1.msra.mxu0 0.0
  %518 = vmatprep.subr.mxu0 0.0
  %519 = vmatpush1.msra.mxu0 0.0
  %520 = vmatprep.subr.mxu0 0.0
  %521 = vmatpush1.msra.mxu0 0.0
  %522 = vmatprep.subr.mxu0 0.0
  %523 = vmatpush1.msra.mxu0 0.0
  %524 = vmatprep.subr.mxu0 0.0
  %525 = vmatpush1.msra.mxu0 0.0
  %526 = vmatprep.mubr.f32.mxu0 0.0
  %527 = vmatmul.mubr.f32.gmra.mrb[0].mxu0 %v415
  %v528 = vpop.f32.mrb[0].mxu0
  %v529 = vadd.f32 %v336, %v528
  %v530 = vpop.f32.mrb[0].mxu0
  %531 = vmatprep.mubr.f32.mxu0 0.0
  %532 = vmatmul.mubr.f32.gmra.mrb[0].mxu0 %v418
  %v533 = vpop.f32.mrb[0].mxu0
  %v534 = vadd.f32 %v341, %v533
  %v535 = vpop.f32.mrb[0].mxu0
  %536 = vmatprep.mubr.f32.mxu0 0.0
  %537 = vmatmul.mubr.f32.gmra.mrb[0].mxu0 %v421
  %v538 = vpop.f32.mrb[0].mxu0
  %v539 = vadd.f32 %v346, %v538
  %v540 = vpop.f32.mrb[0].mxu0
  %541 = vmatprep.mubr.f32.mxu0 0.0
  %542 = vmatmul.mubr.f32.gmra.mrb[0].mxu0 %v424
  %v543 = vpop.f32.mrb[0].mxu0
  %v544 = vadd.f32 %v351, %v543
  %v545 = vpop.f32.mrb[0].mxu0
  %546 = vmatprep.mubr.f32.mxu0 0.0
  %547 = vmatmul.mubr.f32.gmra.mrb[0].mxu0 %v427
  %v548 = vpop.f32.mrb[0].mxu0
  %v549 = vadd.f32 %v356, %v548
  %v550 = vpop.f32.mrb[0].mxu0
  %551 = vmatprep.mubr.f32.mxu0 0.0
  %552 = vmatmul.mubr.f32.gmra.mrb[0].mxu0 %v430
  %v553 = vpop.f32.mrb[0].mxu0
  %v554 = vadd.f32 %v361, %v553
  %v555 = vpop.f32.mrb[0].mxu0
  %556 = vmatprep.mubr.f32.mxu0 0.0
  %557 = vmatmul.mubr.f32.gmra.mrb[0].mxu0 %v433
  %v558 = vpop.f32.mrb[0].mxu0
  %v559 = vadd.f32 %v366, %v558
  %v560 = vpop.f32.mrb[0].mxu0
  %561 = vmatprep.mubr.f32.mxu0 0.0
  %562 = vmatmul.mubr.f32.gmra.mrb[0].mxu0 %v436
  %v563 = vpop.f32.mrb[0].mxu0
  %v564 = vadd.f32 %v371, %v563
  %v565 = vpop.f32.mrb[0].mxu0
  %566 = vmatprep.mubr.f32.mxu0 0.0
  %567 = vmatmul.mubr.f32.gmra.mrb[0].mxu0 %v439
  %v568 = vpop.f32.mrb[0].mxu0
  %v569 = vadd.f32 %v376, %v568
  %v570 = vpop.f32.mrb[0].mxu0
  %571 = vmatprep.mubr.f32.mxu0 0.0
  %572 = vmatmul.mubr.f32.gmra.mrb[0].mxu0 %v442
  %v573 = vpop.f32.mrb[0].mxu0
  %v574 = vadd.f32 %v381, %v573
  %v575 = vpop.f32.mrb[0].mxu0
  %576 = vmatprep.mubr.f32.mxu0 0.0
  %577 = vmatmul.mubr.f32.gmra.mrb[0].mxu0 %v445
  %v578 = vpop.f32.mrb[0].mxu0
  %v579 = vadd.f32 %v386, %v578
  %v580 = vpop.f32.mrb[0].mxu0
  %581 = vmatprep.mubr.f32.mxu0 0.0
  %582 = vmatmul.mubr.f32.gmra.mrb[0].mxu0 %v448
  %v583 = vpop.f32.mrb[0].mxu0
  %v584 = vadd.f32 %v391, %v583
  %v585 = vpop.f32.mrb[0].mxu0
  %586 = vmatprep.mubr.f32.mxu0 0.0
  %587 = vmatmul.mubr.f32.gmra.mrb[0].mxu0 %v451
  %v588 = vpop.f32.mrb[0].mxu0
  %v589 = vadd.f32 %v396, %v588
  %v590 = vpop.f32.mrb[0].mxu0
  %591 = vmatprep.mubr.f32.mxu0 0.0
  %592 = vmatmul.mubr.f32.gmra.mrb[0].mxu0 %v454
  %v593 = vpop.f32.mrb[0].mxu0
  %v594 = vadd.f32 %v401, %v593
  %v595 = vpop.f32.mrb[0].mxu0
  %596 = vmatprep.mubr.f32.mxu0 0.0
  %597 = vmatmul.mubr.f32.gmra.mrb[0].mxu0 %v457
  %v598 = vpop.f32.mrb[0].mxu0
  %v599 = vadd.f32 %v406, %v598
  %v600 = vpop.f32.mrb[0].mxu0
  %601 = vmatprep.mubr.f32.mxu0 0.0
  %602 = vmatmul.mubr.f32.gmra.mrb[0].mxu0 %v460
  %v603 = vpop.f32.mrb[0].mxu0
  %v604 = vadd.f32 %v411, %v603
  %v605 = vpop.f32.mrb[0].mxu0
  %606 = vdwg.mxu0
  %v607 = vld [vmem:[%s5] sm:$0x1]
  %v609 = vlaneseq
  %v610 = vshrl.u32 %v609, 7
  %v611 = vsub.s32 0, %v610
  %v612 = vrot.slane %v607, %v611
  %v614 = vadd.f32 %v529, %v612
  %v615 = vadd.f32 %v534, %v612
  %v616 = vadd.f32 %v539, %v612
  %v617 = vadd.f32 %v544, %v612
  %v618 = vadd.f32 %v549, %v612
  %v619 = vadd.f32 %v554, %v612
  %v620 = vadd.f32 %v559, %v612
  %v621 = vadd.f32 %v564, %v612
  %v622 = vadd.f32 %v569, %v612
  %v623 = vadd.f32 %v574, %v612
  %v624 = vadd.f32 %v579, %v612
  %v625 = vadd.f32 %v584, %v612
  %v626 = vadd.f32 %v589, %v612
  %v627 = vadd.f32 %v594, %v612
  %v628 = vadd.f32 %v599, %v612
  %v629 = vadd.f32 %v604, %v612
  %v630 = vmax.f32 %v614, 0.0
  %v631 = vmax.f32 %v615, 0.0
  %v632 = vmax.f32 %v616, 0.0
  %v633 = vmax.f32 %v617, 0.0
  %v634 = vmax.f32 %v618, 0.0
  %v635 = vmax.f32 %v619, 0.0
  %v636 = vmax.f32 %v620, 0.0
  %v637 = vmax.f32 %v621, 0.0
  %v638 = vmax.f32 %v622, 0.0
  %v639 = vmax.f32 %v623, 0.0
  %v640 = vmax.f32 %v624, 0.0
  %v641 = vmax.f32 %v625, 0.0
  %v642 = vmax.f32 %v626, 0.0
  %v643 = vmax.f32 %v627, 0.0
  %v644 = vmax.f32 %v628, 0.0
  %v645 = vmax.f32 %v629, 0.0
  %646 = vst [vmem:[%s6] sm:$0xff] %v630
  %647 = vst [vmem:[%s6 + $0x8] sm:$0xff] %v631
  %648 = vst [vmem:[%s6 + $0x10] sm:$0xff] %v632
  %649 = vst [vmem:[%s6 + $0x18] sm:$0xff] %v633
  %650 = vst [vmem:[%s6 + $0x20] sm:$0xff] %v634
  %651 = vst [vmem:[%s6 + $0x28] sm:$0xff] %v635
  %652 = vst [vmem:[%s6 + $0x30] sm:$0xff] %v636
  %653 = vst [vmem:[%s6 + $0x38] sm:$0xff] %v637
  %654 = vst [vmem:[%s6 + $0x40] sm:$0xff] %v638
  %655 = vst [vmem:[%s6 + $0x48] sm:$0xff] %v639
  %656 = vst [vmem:[%s6 + $0x50] sm:$0xff] %v640
  %657 = vst [vmem:[%s6 + $0x58] sm:$0xff] %v641
  %658 = vst [vmem:[%s6 + $0x60] sm:$0xff] %v642
  %659 = vst [vmem:[%s6 + $0x68] sm:$0xff] %v643
  %660 = vst [vmem:[%s6 + $0x70] sm:$0xff] %v644
  %661 = vst [vmem:[%s6 + $0x78] sm:$0xff] %v645
  // Predicated region
  $region26: #{forward.4} parent=0 // pred_check
    _
  $region27: #{forward.4} parent=0 // pred_check_branch
    %663 = sbr.rel (0) target = $region29
  $region28: #{forward.4} parent=0 // pred_region
    _
  $region29: #{forward.4} parent=0 // pred_fallthru
    _
  // Predicated region
  $region30: #{forward.4} parent=0 // pred_check
    _
  $region31: #{forward.4} parent=0 // pred_check_branch
    %665 = sbr.rel (0) target = $region33
  $region32: #{forward.4} parent=0 // pred_region
    _
  $region33: #{forward.4} parent=0 // pred_fallthru
    _

// kernel: forward.3
$region0: #{forward.3}
  #allocation0 [shape = 'u32[]', space=smem, size = 0x4, offset = 0x4, fixed_abs, tag = 'smem constant byte address 0x4 - core index']
  #allocation1 [shape = 'u32[144,128]{1,0:T(1,128)}', space=vmem, size = 0x12000, scoped, tag = 'internal scratch']
  %s0 = inlined_call_operand.vmem [shape: f32[128,8], index: 0, kind: input, shape index: {}, may-alias: {0,1}]
  %s1 = inlined_call_operand.vmem [shape: f32[128,8], index: 1, kind: input, shape index: {}, may-alias: {0,1}]
  %s2 = inlined_call_operand.vmem [shape: f32[128,128], index: 2, kind: input, shape index: {}]
  %s3 = inlined_call_operand.vmem [shape: f32[8,128], index: 3, kind: input, shape index: {}]
  %s4 = inlined_call_operand.vmem [shape: f32[128,128], index: 4, kind: input, shape index: {}]
  %s5 = inlined_call_operand.vmem [shape: f32[128,128], index: 5, kind: input, shape index: {}]
  %s6 = inlined_call_operand.vmem [shape: f32[1,128], index: 6, kind: input, shape index: {}]
  %s7 = inlined_call_operand.vmem [shape: f32[128,128], index: 7, kind: output, shape index: {}]
  %s8 = sld [smem:[#allocation0]]
  $region38: #{forward.3} parent=0
    _
  %s10 = ssub.s32 1, %s8
  %s11 = scalar_select 0, %s10, %s8
  // Predicated region
  $region2: #{forward.3} parent=0 // pred_check
    _
  $region3: #{forward.3} parent=0 // pred_check_branch
    %13 = sbr.rel (0) target = $region5
  $region4: #{forward.3} parent=0 // pred_region
    _
  $region5: #{forward.3} parent=0 // pred_fallthru
    _
  // Predicated region
  $region6: #{forward.3} parent=0 // pred_check
    _
  $region7: #{forward.3} parent=0 // pred_check_branch
    %15 = sbr.rel (0) target = $region9
  $region8: #{forward.3} parent=0 // pred_region
    _
  $region9: #{forward.3} parent=0 // pred_fallthru
    _
  // Predicated region
  $region10: #{forward.3} parent=0 // pred_check
    _
  $region11: #{forward.3} parent=0 // pred_check_branch
    %17 = sbr.rel (0) target = $region13
  $region12: #{forward.3} parent=0 // pred_region
    _
  $region13: #{forward.3} parent=0 // pred_fallthru
    _
  // Predicated region
  $region14: #{forward.3} parent=0 // pred_check
    _
  $region15: #{forward.3} parent=0 // pred_check_branch
    %19 = sbr.rel (0) target = $region17
  $region16: #{forward.3} parent=0 // pred_region
    _
  $region17: #{forward.3} parent=0 // pred_fallthru
    _
  // Predicated region
  $region18: #{forward.3} parent=0 // pred_check
    _
  $region19: #{forward.3} parent=0 // pred_check_branch
    %21 = sbr.rel (0) target = $region21
  $region20: #{forward.3} parent=0 // pred_region
    _
  $region21: #{forward.3} parent=0 // pred_fallthru
    _
  // Predicated region
  $region22: #{forward.3} parent=0 // pred_check
    _
  $region23: #{forward.3} parent=0 // pred_check_branch
    %23 = sbr.rel (0) target = $region25
  $region24: #{forward.3} parent=0 // pred_region
    _
  $region25: #{forward.3} parent=0 // pred_fallthru
    _
  // Predicated region
  $region26: #{forward.3} parent=0 // pred_check
    _
  $region27: #{forward.3} parent=0 // pred_check_branch
    %25 = sbr.rel (0) target = $region29
  $region28: #{forward.3} parent=0 // pred_region
    _
  $region29: #{forward.3} parent=0 // pred_fallthru
    _
  %v26 = vld [vmem:[%s0] sm:$0xff]
  %v27 = vld [vmem:[%s0 + $0x8] sm:$0xff]
  %v28 = vld [vmem:[%s0 + $0x10] sm:$0xff]
  %v29 = vld [vmem:[%s0 + $0x18] sm:$0xff]
  %v30 = vld [vmem:[%s0 + $0x20] sm:$0xff]
  %v31 = vld [vmem:[%s0 + $0x28] sm:$0xff]
  %v32 = vld [vmem:[%s0 + $0x30] sm:$0xff]
  %v33 = vld [vmem:[%s0 + $0x38] sm:$0xff]
  %v34 = vld [vmem:[%s0 + $0x40] sm:$0xff]
  %v35 = vld [vmem:[%s0 + $0x48] sm:$0xff]
  %v36 = vld [vmem:[%s0 + $0x50] sm:$0xff]
  %v37 = vld [vmem:[%s0 + $0x58] sm:$0xff]
  %v38 = vld [vmem:[%s0 + $0x60] sm:$0xff]
  %v39 = vld [vmem:[%s0 + $0x68] sm:$0xff]
  %v40 = vld [vmem:[%s0 + $0x70] sm:$0xff]
  %v41 = vld [vmem:[%s0 + $0x78] sm:$0xff]
  %v42 = vld [vmem:[%s3] sm:$0xff]
  %vm43 = vcmask 64512
  %v45 = vsel %vm43, %v26, 0
  %v48 = vsel %vm43, %v27, 0
  %v51 = vsel %vm43, %v28, 0
  %v54 = vsel %vm43, %v29, 0
  %v57 = vsel %vm43, %v30, 0
  %v60 = vsel %vm43, %v31, 0
  %v63 = vsel %vm43, %v32, 0
  %v66 = vsel %vm43, %v33, 0
  %v69 = vsel %vm43, %v34, 0
  %v72 = vsel %vm43, %v35, 0
  %v75 = vsel %vm43, %v36, 0
  %v78 = vsel %vm43, %v37, 0
  %v81 = vsel %vm43, %v38, 0
  %v84 = vsel %vm43, %v39, 0
  %v87 = vsel %vm43, %v40, 0
  %v90 = vsel %vm43, %v41, 0
  %92 = vmatprep.subr.mxu0 0.0
  %93 = vmatpush1.msra.mxu0 %v42
  %94 = vmatprep.subr.mxu0 0.0
  %95 = vmatpush1.msra.mxu0 0.0
  %96 = vmatprep.subr.mxu0 0.0
  %97 = vmatpush1.msra.mxu0 0.0
  %98 = vmatprep.subr.mxu0 0.0
  %99 = vmatpush1.msra.mxu0 0.0
  %100 = vmatprep.subr.mxu0 0.0
  %101 = vmatpush1.msra.mxu0 0.0
  %102 = vmatprep.subr.mxu0 0.0
  %103 = vmatpush1.msra.mxu0 0.0
  %104 = vmatprep.subr.mxu0 0.0
  %105 = vmatpush1.msra.mxu0 0.0
  %106 = vmatprep.subr.mxu0 0.0
  %107 = vmatpush1.msra.mxu0 0.0
  %108 = vmatprep.subr.mxu0 0.0
  %109 = vmatpush1.msra.mxu0 0.0
  %110 = vmatprep.subr.mxu0 0.0
  %111 = vmatpush1.msra.mxu0 0.0
  %112 = vmatprep.subr.mxu0 0.0
  %113 = vmatpush1.msra.mxu0 0.0
  %114 = vmatprep.subr.mxu0 0.0
  %115 = vmatpush1.msra.mxu0 0.0
  %116 = vmatprep.subr.mxu0 0.0
  %117 = vmatpush1.msra.mxu0 0.0
  %118 = vmatprep.subr.mxu0 0.0
  %119 = vmatpush1.msra.mxu0 0.0
  %120 = vmatprep.subr.mxu0 0.0
  %121 = vmatpush1.msra.mxu0 0.0
  %122 = vmatprep.subr.mxu0 0.0
  %123 = vmatpush1.msra.mxu0 0.0
  %124 = vmatprep.subr.mxu0 0.0
  %125 = vmatpush1.msra.mxu0 0.0
  %126 = vmatprep.subr.mxu0 0.0
  %127 = vmatpush1.msra.mxu0 0.0
  %128 = vmatprep.subr.mxu0 0.0
  %129 = vmatpush1.msra.mxu0 0.0
  %130 = vmatprep.subr.mxu0 0.0
  %131 = vmatpush1.msra.mxu0 0.0
  %132 = vmatprep.subr.mxu0 0.0
  %133 = vmatpush1.msra.mxu0 0.0
  %134 = vmatprep.subr.mxu0 0.0
  %135 = vmatpush1.msra.mxu0 0.0
  %136 = vmatprep.subr.mxu0 0.0
  %137 = vmatpush1.msra.mxu0 0.0
  %138 = vmatprep.subr.mxu0 0.0
  %139 = vmatpush1.msra.mxu0 0.0
  %140 = vmatprep.subr.mxu0 0.0
  %141 = vmatpush1.msra.mxu0 0.0
  %142 = vmatprep.subr.mxu0 0.0
  %143 = vmatpush1.msra.mxu0 0.0
  %144 = vmatprep.subr.mxu0 0.0
  %145 = vmatpush1.msra.mxu0 0.0
  %146 = vmatprep.subr.mxu0 0.0
  %147 = vmatpush1.msra.mxu0 0.0
  %148 = vmatprep.subr.mxu0 0.0
  %149 = vmatpush1.msra.mxu0 0.0
  %150 = vmatprep.subr.mxu0 0.0
  %151 = vmatpush1.msra.mxu0 0.0
  %152 = vmatprep.subr.mxu0 0.0
  %153 = vmatpush1.msra.mxu0 0.0
  %154 = vmatprep.subr.mxu0 0.0
  %155 = vmatpush1.msra.mxu0 0.0
  %156 = vmatprep.mubr.f32.mxu0 0.0
  %157 = vmatmul.mubr.f32.gmra.mrb[0].mxu0 %v45
  %v158 = vpop.f32.mrb[0].mxu0
  %v159 = vadd.f32 0.0, %v158
  %v160 = vpop.f32.mrb[0].mxu0
  %161 = vmatprep.mubr.f32.mxu0 0.0
  %162 = vmatmul.mubr.f32.gmra.mrb[0].mxu0 %v48
  %v163 = vpop.f32.mrb[0].mxu0
  %v164 = vadd.f32 0.0, %v163
  %v165 = vpop.f32.mrb[0].mxu0
  %166 = vmatprep.mubr.f32.mxu0 0.0
  %167 = vmatmul.mubr.f32.gmra.mrb[0].mxu0 %v51
  %v168 = vpop.f32.mrb[0].mxu0
  %v169 = vadd.f32 0.0, %v168
  %v170 = vpop.f32.mrb[0].mxu0
  %171 = vmatprep.mubr.f32.mxu0 0.0
  %172 = vmatmul.mubr.f32.gmra.mrb[0].mxu0 %v54
  %v173 = vpop.f32.mrb[0].mxu0
  %v174 = vadd.f32 0.0, %v173
  %v175 = vpop.f32.mrb[0].mxu0
  %176 = vmatprep.mubr.f32.mxu0 0.0
  %177 = vmatmul.mubr.f32.gmra.mrb[0].mxu0 %v57
  %v178 = vpop.f32.mrb[0].mxu0
  %v179 = vadd.f32 0.0, %v178
  %v180 = vpop.f32.mrb[0].mxu0
  %181 = vmatprep.mubr.f32.mxu0 0.0
  %182 = vmatmul.mubr.f32.gmra.mrb[0].mxu0 %v60
  %v183 = vpop.f32.mrb[0].mxu0
  %v184 = vadd.f32 0.0, %v183
  %v185 = vpop.f32.mrb[0].mxu0
  %186 = vmatprep.mubr.f32.mxu0 0.0
  %187 = vmatmul.mubr.f32.gmra.mrb[0].mxu0 %v63
  %v188 = vpop.f32.mrb[0].mxu0
  %v189 = vadd.f32 0.0, %v188
  %v190 = vpop.f32.mrb[0].mxu0
  %191 = vmatprep.mubr.f32.mxu0 0.0
  %192 = vmatmul.mubr.f32.gmra.mrb[0].mxu0 %v66
  %v193 = vpop.f32.mrb[0].mxu0
  %v194 = vadd.f32 0.0, %v193
  %v195 = vpop.f32.mrb[0].mxu0
  %196 = vmatprep.mubr.f32.mxu0 0.0
  %197 = vmatmul.mubr.f32.gmra.mrb[0].mxu0 %v69
  %v198 = vpop.f32.mrb[0].mxu0
  %v199 = vadd.f32 0.0, %v198
  %v200 = vpop.f32.mrb[0].mxu0
  %201 = vmatprep.mubr.f32.mxu0 0.0
  %202 = vmatmul.mubr.f32.gmra.mrb[0].mxu0 %v72
  %v203 = vpop.f32.mrb[0].mxu0
  %v204 = vadd.f32 0.0, %v203
  %v205 = vpop.f32.mrb[0].mxu0
  %206 = vmatprep.mubr.f32.mxu0 0.0
  %207 = vmatmul.mubr.f32.gmra.mrb[0].mxu0 %v75
  %v208 = vpop.f32.mrb[0].mxu0
  %v209 = vadd.f32 0.0, %v208
  %v210 = vpop.f32.mrb[0].mxu0
  %211 = vmatprep.mubr.f32.mxu0 0.0
  %212 = vmatmul.mubr.f32.gmra.mrb[0].mxu0 %v78
  %v213 = vpop.f32.mrb[0].mxu0
  %v214 = vadd.f32 0.0, %v213
  %v215 = vpop.f32.mrb[0].mxu0
  %216 = vmatprep.mubr.f32.mxu0 0.0
  %217 = vmatmul.mubr.f32.gmra.mrb[0].mxu0 %v81
  %v218 = vpop.f32.mrb[0].mxu0
  %v219 = vadd.f32 0.0, %v218
  %v220 = vpop.f32.mrb[0].mxu0
  %221 = vmatprep.mubr.f32.mxu0 0.0
  %222 = vmatmul.mubr.f32.gmra.mrb[0].mxu0 %v84
  %v223 = vpop.f32.mrb[0].mxu0
  %v224 = vadd.f32 0.0, %v223
  %v225 = vpop.f32.mrb[0].mxu0
  %226 = vmatprep.mubr.f32.mxu0 0.0
  %227 = vmatmul.mubr.f32.gmra.mrb[0].mxu0 %v87
  %v228 = vpop.f32.mrb[0].mxu0
  %v229 = vadd.f32 0.0, %v228
  %v230 = vpop.f32.mrb[0].mxu0
  %231 = vmatprep.mubr.f32.mxu0 0.0
  %232 = vmatmul.mubr.f32.gmra.mrb[0].mxu0 %v90
  %v233 = vpop.f32.mrb[0].mxu0
  %v234 = vadd.f32 0.0, %v233
  %v235 = vpop.f32.mrb[0].mxu0
  %236 = vdwg.mxu0
  %v237 = vmax.f32 %v159, 0.0
  %v238 = vmax.f32 %v164, 0.0
  %v239 = vmax.f32 %v169, 0.0
  %v240 = vmax.f32 %v174, 0.0
  %v241 = vmax.f32 %v179, 0.0
  %v242 = vmax.f32 %v184, 0.0
  %v243 = vmax.f32 %v189, 0.0
  %v244 = vmax.f32 %v194, 0.0
  %v245 = vmax.f32 %v199, 0.0
  %v246 = vmax.f32 %v204, 0.0
  %v247 = vmax.f32 %v209, 0.0
  %v248 = vmax.f32 %v214, 0.0
  %v249 = vmax.f32 %v219, 0.0
  %v250 = vmax.f32 %v224, 0.0
  %v251 = vmax.f32 %v229, 0.0
  %v252 = vmax.f32 %v234, 0.0
  %v253 = vld [vmem:[%s1] sm:$0xff]
  %v254 = vld [vmem:[%s1 + $0x8] sm:$0xff]
  %v255 = vld [vmem:[%s1 + $0x10] sm:$0xff]
  %v256 = vld [vmem:[%s1 + $0x18] sm:$0xff]
  %v257 = vld [vmem:[%s1 + $0x20] sm:$0xff]
  %v258 = vld [vmem:[%s1 + $0x28] sm:$0xff]
  %v259 = vld [vmem:[%s1 + $0x30] sm:$0xff]
  %v260 = vld [vmem:[%s1 + $0x38] sm:$0xff]
  %v261 = vld [vmem:[%s1 + $0x40] sm:$0xff]
  %v262 = vld [vmem:[%s1 + $0x48] sm:$0xff]
  %v263 = vld [vmem:[%s1 + $0x50] sm:$0xff]
  %v264 = vld [vmem:[%s1 + $0x58] sm:$0xff]
  %v265 = vld [vmem:[%s1 + $0x60] sm:$0xff]
  %v266 = vld [vmem:[%s1 + $0x68] sm:$0xff]
  %v267 = vld [vmem:[%s1 + $0x70] sm:$0xff]
  %v268 = vld [vmem:[%s1 + $0x78] sm:$0xff]
  %v270 = vsel %vm43, %v253, 0
  %v273 = vsel %vm43, %v254, 0
  %v276 = vsel %vm43, %v255, 0
  %v279 = vsel %vm43, %v256, 0
  %v282 = vsel %vm43, %v257, 0
  %v285 = vsel %vm43, %v258, 0
  %v288 = vsel %vm43, %v259, 0
  %v291 = vsel %vm43, %v260, 0
  %v294 = vsel %vm43, %v261, 0
  %v297 = vsel %vm43, %v262, 0
  %v300 = vsel %vm43, %v263, 0
  %v303 = vsel %vm43, %v264, 0
  %v306 = vsel %vm43, %v265, 0
  %v309 = vsel %vm43, %v266, 0
  %v312 = vsel %vm43, %v267, 0
  %v315 = vsel %vm43, %v268, 0
  %317 = vmatprep.subr.mxu0 0.0
  %318 = vmatpush1.msra.mxu0 %v42
  %319 = vmatprep.subr.mxu0 0.0
  %320 = vmatpush1.msra.mxu0 0.0
  %321 = vmatprep.subr.mxu0 0.0
  %322 = vmatpush1.msra.mxu0 0.0
  %323 = vmatprep.subr.mxu0 0.0
  %324 = vmatpush1.msra.mxu0 0.0
  %325 = vmatprep.subr.mxu0 0.0
  %326 = vmatpush1.msra.mxu0 0.0
  %327 = vmatprep.subr.mxu0 0.0
  %328 = vmatpush1.msra.mxu0 0.0
  %329 = vmatprep.subr.mxu0 0.0
  %330 = vmatpush1.msra.mxu0 0.0
  %331 = vmatprep.subr.mxu0 0.0
  %332 = vmatpush1.msra.mxu0 0.0
  %333 = vmatprep.subr.mxu0 0.0
  %334 = vmatpush1.msra.mxu0 0.0
  %335 = vmatprep.subr.mxu0 0.0
  %336 = vmatpush1.msra.mxu0 0.0
  %337 = vmatprep.subr.mxu0 0.0
  %338 = vmatpush1.msra.mxu0 0.0
  %339 = vmatprep.subr.mxu0 0.0
  %340 = vmatpush1.msra.mxu0 0.0
  %341 = vmatprep.subr.mxu0 0.0
  %342 = vmatpush1.msra.mxu0 0.0
  %343 = vmatprep.subr.mxu0 0.0
  %344 = vmatpush1.msra.mxu0 0.0
  %345 = vmatprep.subr.mxu0 0.0
  %346 = vmatpush1.msra.mxu0 0.0
  %347 = vmatprep.subr.mxu0 0.0
  %348 = vmatpush1.msra.mxu0 0.0
  %349 = vmatprep.subr.mxu0 0.0
  %350 = vmatpush1.msra.mxu0 0.0
  %351 = vmatprep.subr.mxu0 0.0
  %352 = vmatpush1.msra.mxu0 0.0
  %353 = vmatprep.subr.mxu0 0.0
  %354 = vmatpush1.msra.mxu0 0.0
  %355 = vmatprep.subr.mxu0 0.0
  %356 = vmatpush1.msra.mxu0 0.0
  %357 = vmatprep.subr.mxu0 0.0
  %358 = vmatpush1.msra.mxu0 0.0
  %359 = vmatprep.subr.mxu0 0.0
  %360 = vmatpush1.msra.mxu0 0.0
  %361 = vmatprep.subr.mxu0 0.0
  %362 = vmatpush1.msra.mxu0 0.0
  %363 = vmatprep.subr.mxu0 0.0
  %364 = vmatpush1.msra.mxu0 0.0
  %365 = vmatprep.subr.mxu0 0.0
  %366 = vmatpush1.msra.mxu0 0.0
  %367 = vmatprep.subr.mxu0 0.0
  %368 = vmatpush1.msra.mxu0 0.0
  %369 = vmatprep.subr.mxu0 0.0
  %370 = vmatpush1.msra.mxu0 0.0
  %371 = vmatprep.subr.mxu0 0.0
  %372 = vmatpush1.msra.mxu0 0.0
  %373 = vmatprep.subr.mxu0 0.0
  %374 = vmatpush1.msra.mxu0 0.0
  %375 = vmatprep.subr.mxu0 0.0
  %376 = vmatpush1.msra.mxu0 0.0
  %377 = vmatprep.subr.mxu0 0.0
  %378 = vmatpush1.msra.mxu0 0.0
  %379 = vmatprep.subr.mxu0 0.0
  %380 = vmatpush1.msra.mxu0 0.0
  %381 = vmatprep.mubr.f32.mxu0 0.0
  %382 = vmatmul.mubr.f32.gmra.mrb[0].mxu0 %v270
  %v383 = vpop.f32.mrb[0].mxu0
  %v384 = vadd.f32 0.0, %v383
  %v385 = vpop.f32.mrb[0].mxu0
  %386 = vmatprep.mubr.f32.mxu0 0.0
  %387 = vmatmul.mubr.f32.gmra.mrb[0].mxu0 %v273
  %v388 = vpop.f32.mrb[0].mxu0
  %v389 = vadd.f32 0.0, %v388
  %v390 = vpop.f32.mrb[0].mxu0
  %391 = vmatprep.mubr.f32.mxu0 0.0
  %392 = vmatmul.mubr.f32.gmra.mrb[0].mxu0 %v276
  %v393 = vpop.f32.mrb[0].mxu0
  %v394 = vadd.f32 0.0, %v393
  %v395 = vpop.f32.mrb[0].mxu0
  %396 = vmatprep.mubr.f32.mxu0 0.0
  %397 = vmatmul.mubr.f32.gmra.mrb[0].mxu0 %v279
  %v398 = vpop.f32.mrb[0].mxu0
  %v399 = vadd.f32 0.0, %v398
  %v400 = vpop.f32.mrb[0].mxu0
  %401 = vmatprep.mubr.f32.mxu0 0.0
  %402 = vmatmul.mubr.f32.gmra.mrb[0].mxu0 %v282
  %v403 = vpop.f32.mrb[0].mxu0
  %v404 = vadd.f32 0.0, %v403
  %v405 = vpop.f32.mrb[0].mxu0
  %406 = vmatprep.mubr.f32.mxu0 0.0
  %407 = vmatmul.mubr.f32.gmra.mrb[0].mxu0 %v285
  %v408 = vpop.f32.mrb[0].mxu0
  %v409 = vadd.f32 0.0, %v408
  %v410 = vpop.f32.mrb[0].mxu0
  %411 = vmatprep.mubr.f32.mxu0 0.0
  %412 = vmatmul.mubr.f32.gmra.mrb[0].mxu0 %v288
  %v413 = vpop.f32.mrb[0].mxu0
  %v414 = vadd.f32 0.0, %v413
  %v415 = vpop.f32.mrb[0].mxu0
  %416 = vmatprep.mubr.f32.mxu0 0.0
  %417 = vmatmul.mubr.f32.gmra.mrb[0].mxu0 %v291
  %v418 = vpop.f32.mrb[0].mxu0
  %v419 = vadd.f32 0.0, %v418
  %v420 = vpop.f32.mrb[0].mxu0
  %421 = vmatprep.mubr.f32.mxu0 0.0
  %422 = vmatmul.mubr.f32.gmra.mrb[0].mxu0 %v294
  %v423 = vpop.f32.mrb[0].mxu0
  %v424 = vadd.f32 0.0, %v423
  %v425 = vpop.f32.mrb[0].mxu0
  %426 = vmatprep.mubr.f32.mxu0 0.0
  %427 = vmatmul.mubr.f32.gmra.mrb[0].mxu0 %v297
  %v428 = vpop.f32.mrb[0].mxu0
  %v429 = vadd.f32 0.0, %v428
  %v430 = vpop.f32.mrb[0].mxu0
  %431 = vmatprep.mubr.f32.mxu0 0.0
  %432 = vmatmul.mubr.f32.gmra.mrb[0].mxu0 %v300
  %v433 = vpop.f32.mrb[0].mxu0
  %v434 = vadd.f32 0.0, %v433
  %v435 = vpop.f32.mrb[0].mxu0
  %436 = vmatprep.mubr.f32.mxu0 0.0
  %437 = vmatmul.mubr.f32.gmra.mrb[0].mxu0 %v303
  %v438 = vpop.f32.mrb[0].mxu0
  %v439 = vadd.f32 0.0, %v438
  %v440 = vpop.f32.mrb[0].mxu0
  %441 = vmatprep.mubr.f32.mxu0 0.0
  %442 = vmatmul.mubr.f32.gmra.mrb[0].mxu0 %v306
  %v443 = vpop.f32.mrb[0].mxu0
  %v444 = vadd.f32 0.0, %v443
  %v445 = vpop.f32.mrb[0].mxu0
  %446 = vmatprep.mubr.f32.mxu0 0.0
  %447 = vmatmul.mubr.f32.gmra.mrb[0].mxu0 %v309
  %v448 = vpop.f32.mrb[0].mxu0
  %v449 = vadd.f32 0.0, %v448
  %v450 = vpop.f32.mrb[0].mxu0
  %451 = vmatprep.mubr.f32.mxu0 0.0
  %452 = vmatmul.mubr.f32.gmra.mrb[0].mxu0 %v312
  %v453 = vpop.f32.mrb[0].mxu0
  %v454 = vadd.f32 0.0, %v453
  %v455 = vpop.f32.mrb[0].mxu0
  %456 = vmatprep.mubr.f32.mxu0 0.0
  %457 = vmatmul.mubr.f32.gmra.mrb[0].mxu0 %v315
  %v458 = vpop.f32.mrb[0].mxu0
  %v459 = vadd.f32 0.0, %v458
  %v460 = vpop.f32.mrb[0].mxu0
  %461 = vdwg.mxu0
  %v462 = vmax.f32 %v384, 0.0
  %v463 = vmax.f32 %v389, 0.0
  %v464 = vmax.f32 %v394, 0.0
  %v465 = vmax.f32 %v399, 0.0
  %v466 = vmax.f32 %v404, 0.0
  %v467 = vmax.f32 %v409, 0.0
  %v468 = vmax.f32 %v414, 0.0
  %v469 = vmax.f32 %v419, 0.0
  %v470 = vmax.f32 %v424, 0.0
  %v471 = vmax.f32 %v429, 0.0
  %v472 = vmax.f32 %v434, 0.0
  %v473 = vmax.f32 %v439, 0.0
  %v474 = vmax.f32 %v444, 0.0
  %v475 = vmax.f32 %v449, 0.0
  %v476 = vmax.f32 %v454, 0.0
  %v477 = vmax.f32 %v459, 0.0
  %v478 = vld [vmem:[%s2] sm:$0xff]
  %v479 = vld [vmem:[%s2 + $0x8] sm:$0xff]
  %v480 = vld [vmem:[%s2 + $0x10] sm:$0xff]
  %v481 = vld [vmem:[%s2 + $0x18] sm:$0xff]
  %v482 = vld [vmem:[%s2 + $0x20] sm:$0xff]
  %v483 = vld [vmem:[%s2 + $0x28] sm:$0xff]
  %v484 = vld [vmem:[%s2 + $0x30] sm:$0xff]
  %v485 = vld [vmem:[%s2 + $0x38] sm:$0xff]
  %v486 = vld [vmem:[%s2 + $0x40] sm:$0xff]
  %v487 = vld [vmem:[%s2 + $0x48] sm:$0xff]
  %v488 = vld [vmem:[%s2 + $0x50] sm:$0xff]
  %v489 = vld [vmem:[%s2 + $0x58] sm:$0xff]
  %v490 = vld [vmem:[%s2 + $0x60] sm:$0xff]
  %v491 = vld [vmem:[%s2 + $0x68] sm:$0xff]
  %v492 = vld [vmem:[%s2 + $0x70] sm:$0xff]
  %v493 = vld [vmem:[%s2 + $0x78] sm:$0xff]
  %494 = vmatprep.subr.mxu0 0.0
  %495 = vmatpush1.msra.mxu0 %v462
  %496 = vmatprep.subr.mxu0 0.0
  %497 = vmatpush1.msra.mxu0 %v463
  %498 = vmatprep.subr.mxu0 0.0
  %499 = vmatpush1.msra.mxu0 %v464
  %500 = vmatprep.subr.mxu0 0.0
  %501 = vmatpush1.msra.mxu0 %v465
  %502 = vmatprep.subr.mxu0 0.0
  %503 = vmatpush1.msra.mxu0 %v466
  %504 = vmatprep.subr.mxu0 0.0
  %505 = vmatpush1.msra.mxu0 %v467
  %506 = vmatprep.subr.mxu0 0.0
  %507 = vmatpush1.msra.mxu0 %v468
  %508 = vmatprep.subr.mxu0 0.0
  %509 = vmatpush1.msra.mxu0 %v469
  %510 = vmatprep.subr.mxu0 0.0
  %511 = vmatpush1.msra.mxu0 %v470
  %512 = vmatprep.subr.mxu0 0.0
  %513 = vmatpush1.msra.mxu0 %v471
  %514 = vmatprep.subr.mxu0 0.0
  %515 = vmatpush1.msra.mxu0 %v472
  %516 = vmatprep.subr.mxu0 0.0
  %517 = vmatpush1.msra.mxu0 %v473
  %518 = vmatprep.subr.mxu0 0.0
  %519 = vmatpush1.msra.mxu0 %v474
  %520 = vmatprep.subr.mxu0 0.0
  %521 = vmatpush1.msra.mxu0 %v475
  %522 = vmatprep.subr.mxu0 0.0
  %523 = vmatpush1.msra.mxu0 %v476
  %524 = vmatprep.subr.mxu0 0.0
  %525 = vmatpush1.msra.mxu0 %v477
  %526 = vmatprep.subr.mxu0 0.0
  %527 = vmatpush1.msra.mxu0 0.0
  %528 = vmatprep.subr.mxu0 0.0
  %529 = vmatpush1.msra.mxu0 0.0
  %530 = vmatprep.subr.mxu0 0.0
  %531 = vmatpush1.msra.mxu0 0.0
  %532 = vmatprep.subr.mxu0 0.0
  %533 = vmatpush1.msra.mxu0 0.0
  %534 = vmatprep.subr.mxu0 0.0
  %535 = vmatpush1.msra.mxu0 0.0
  %536 = vmatprep.subr.mxu0 0.0
  %537 = vmatpush1.msra.mxu0 0.0
  %538 = vmatprep.subr.mxu0 0.0
  %539 = vmatpush1.msra.mxu0 0.0
  %540 = vmatprep.subr.mxu0 0.0
  %541 = vmatpush1.msra.mxu0 0.0
  %542 = vmatprep.subr.mxu0 0.0
  %543 = vmatpush1.msra.mxu0 0.0
  %544 = vmatprep.subr.mxu0 0.0
  %545 = vmatpush1.msra.mxu0 0.0
  %546 = vmatprep.subr.mxu0 0.0
  %547 = vmatpush1.msra.mxu0 0.0
  %548 = vmatprep.subr.mxu0 0.0
  %549 = vmatpush1.msra.mxu0 0.0
  %550 = vmatprep.subr.mxu0 0.0
  %551 = vmatpush1.msra.mxu0 0.0
  %552 = vmatprep.subr.mxu0 0.0
  %553 = vmatpush1.msra.mxu0 0.0
  %554 = vmatprep.subr.mxu0 0.0
  %555 = vmatpush1.msra.mxu0 0.0
  %556 = vmatprep.subr.mxu0 0.0
  %557 = vmatpush1.msra.mxu0 0.0
  %558 = vmatprep.mubr.f32.mxu0 0.0
  %559 = vmatmul.mubr.f32.gmra.mrb[0].mxu0 %v478
  %v560 = vpop.f32.mrb[0].mxu0
  %v561 = vadd.f32 0.0, %v560
  %v562 = vpop.f32.mrb[0].mxu0
  %563 = vmatprep.mubr.f32.mxu0 0.0
  %564 = vmatmul.mubr.f32.gmra.mrb[0].mxu0 %v479
  %v565 = vpop.f32.mrb[0].mxu0
  %v566 = vadd.f32 0.0, %v565
  %v567 = vpop.f32.mrb[0].mxu0
  %568 = vmatprep.mubr.f32.mxu0 0.0
  %569 = vmatmul.mubr.f32.gmra.mrb[0].mxu0 %v480
  %v570 = vpop.f32.mrb[0].mxu0
  %v571 = vadd.f32 0.0, %v570
  %v572 = vpop.f32.mrb[0].mxu0
  %573 = vmatprep.mubr.f32.mxu0 0.0
  %574 = vmatmul.mubr.f32.gmra.mrb[0].mxu0 %v481
  %v575 = vpop.f32.mrb[0].mxu0
  %v576 = vadd.f32 0.0, %v575
  %v577 = vpop.f32.mrb[0].mxu0
  %578 = vmatprep.mubr.f32.mxu0 0.0
  %579 = vmatmul.mubr.f32.gmra.mrb[0].mxu0 %v482
  %v580 = vpop.f32.mrb[0].mxu0
  %v581 = vadd.f32 0.0, %v580
  %v582 = vpop.f32.mrb[0].mxu0
  %583 = vmatprep.mubr.f32.mxu0 0.0
  %584 = vmatmul.mubr.f32.gmra.mrb[0].mxu0 %v483
  %v585 = vpop.f32.mrb[0].mxu0
  %v586 = vadd.f32 0.0, %v585
  %v587 = vpop.f32.mrb[0].mxu0
  %588 = vmatprep.mubr.f32.mxu0 0.0
  %589 = vmatmul.mubr.f32.gmra.mrb[0].mxu0 %v484
  %v590 = vpop.f32.mrb[0].mxu0
  %v591 = vadd.f32 0.0, %v590
  %v592 = vpop.f32.mrb[0].mxu0
  %593 = vmatprep.mubr.f32.mxu0 0.0
  %594 = vmatmul.mubr.f32.gmra.mrb[0].mxu0 %v485
  %v595 = vpop.f32.mrb[0].mxu0
  %v596 = vadd.f32 0.0, %v595
  %v597 = vpop.f32.mrb[0].mxu0
  %598 = vmatprep.mubr.f32.mxu0 0.0
  %599 = vmatmul.mubr.f32.gmra.mrb[0].mxu0 %v486
  %v600 = vpop.f32.mrb[0].mxu0
  %v601 = vadd.f32 0.0, %v600
  %v602 = vpop.f32.mrb[0].mxu0
  %603 = vmatprep.mubr.f32.mxu0 0.0
  %604 = vmatmul.mubr.f32.gmra.mrb[0].mxu0 %v487
  %v605 = vpop.f32.mrb[0].mxu0
  %v606 = vadd.f32 0.0, %v605
  %v607 = vpop.f32.mrb[0].mxu0
  %608 = vmatprep.mubr.f32.mxu0 0.0
  %609 = vmatmul.mubr.f32.gmra.mrb[0].mxu0 %v488
  %v610 = vpop.f32.mrb[0].mxu0
  %v611 = vadd.f32 0.0, %v610
  %v612 = vpop.f32.mrb[0].mxu0
  %613 = vmatprep.mubr.f32.mxu0 0.0
  %614 = vmatmul.mubr.f32.gmra.mrb[0].mxu0 %v489
  %v615 = vpop.f32.mrb[0].mxu0
  %v616 = vadd.f32 0.0, %v615
  %v617 = vpop.f32.mrb[0].mxu0
  %618 = vmatprep.mubr.f32.mxu0 0.0
  %619 = vmatmul.mubr.f32.gmra.mrb[0].mxu0 %v490
  %v620 = vpop.f32.mrb[0].mxu0
  %v621 = vadd.f32 0.0, %v620
  %v622 = vpop.f32.mrb[0].mxu0
  %623 = vmatprep.mubr.f32.mxu0 0.0
  %624 = vmatmul.mubr.f32.gmra.mrb[0].mxu0 %v491
  %v625 = vpop.f32.mrb[0].mxu0
  %v626 = vadd.f32 0.0, %v625
  %v627 = vpop.f32.mrb[0].mxu0
  %628 = vmatprep.mubr.f32.mxu0 0.0
  %629 = vmatmul.mubr.f32.gmra.mrb[0].mxu0 %v492
  %v630 = vpop.f32.mrb[0].mxu0
  %v631 = vadd.f32 0.0, %v630
  %v632 = vpop.f32.mrb[0].mxu0
  %633 = vmatprep.mubr.f32.mxu0 0.0
  %634 = vmatmul.mubr.f32.gmra.mrb[0].mxu0 %v493
  %v635 = vpop.f32.mrb[0].mxu0
  %v636 = vadd.f32 0.0, %v635
  %v637 = vpop.f32.mrb[0].mxu0
  %638 = vdwg.mxu0
  %v639 = vld [vmem:[%s4] sm:$0xff]
  %v640 = vld [vmem:[%s4 + $0x8] sm:$0xff]
  %v641 = vld [vmem:[%s4 + $0x10] sm:$0xff]
  %v642 = vld [vmem:[%s4 + $0x18] sm:$0xff]
  %v643 = vld [vmem:[%s4 + $0x20] sm:$0xff]
  %v644 = vld [vmem:[%s4 + $0x28] sm:$0xff]
  %v645 = vld [vmem:[%s4 + $0x30] sm:$0xff]
  %v646 = vld [vmem:[%s4 + $0x38] sm:$0xff]
  %v647 = vld [vmem:[%s4 + $0x40] sm:$0xff]
  %v648 = vld [vmem:[%s4 + $0x48] sm:$0xff]
  %v649 = vld [vmem:[%s4 + $0x50] sm:$0xff]
  %v650 = vld [vmem:[%s4 + $0x58] sm:$0xff]
  %v651 = vld [vmem:[%s4 + $0x60] sm:$0xff]
  %v652 = vld [vmem:[%s4 + $0x68] sm:$0xff]
  %v653 = vld [vmem:[%s4 + $0x70] sm:$0xff]
  %v654 = vld [vmem:[%s4 + $0x78] sm:$0xff]
  %v655 = vld [vmem:[%s5] sm:$0xff]
  %v656 = vld [vmem:[%s5 + $0x8] sm:$0xff]
  %v657 = vld [vmem:[%s5 + $0x10] sm:$0xff]
  %v658 = vld [vmem:[%s5 + $0x18] sm:$0xff]
  %v659 = vld [vmem:[%s5 + $0x20] sm:$0xff]
  %v660 = vld [vmem:[%s5 + $0x28] sm:$0xff]
  %v661 = vld [vmem:[%s5 + $0x30] sm:$0xff]
  %v662 = vld [vmem:[%s5 + $0x38] sm:$0xff]
  %v663 = vld [vmem:[%s5 + $0x40] sm:$0xff]
  %v664 = vld [vmem:[%s5 + $0x48] sm:$0xff]
  %v665 = vld [vmem:[%s5 + $0x50] sm:$0xff]
  %v666 = vld [vmem:[%s5 + $0x58] sm:$0xff]
  %v667 = vld [vmem:[%s5 + $0x60] sm:$0xff]
  %v668 = vld [vmem:[%s5 + $0x68] sm:$0xff]
  %v669 = vld [vmem:[%s5 + $0x70] sm:$0xff]
  %v670 = vld [vmem:[%s5 + $0x78] sm:$0xff]
  %671 = vmatprep.subr.mxu0 0.0
  %672 = vmatpush1.msra.mxu0 %v655
  %673 = vmatprep.subr.mxu0 0.0
  %674 = vmatpush1.msra.mxu0 %v656
  %675 = vmatprep.subr.mxu0 0.0
  %676 = vmatpush1.msra.mxu0 %v657
  %677 = vmatprep.subr.mxu0 0.0
  %678 = vmatpush1.msra.mxu0 %v658
  %679 = vmatprep.subr.mxu0 0.0
  %680 = vmatpush1.msra.mxu0 %v659
  %681 = vmatprep.subr.mxu0 0.0
  %682 = vmatpush1.msra.mxu0 %v660
  %683 = vmatprep.subr.mxu0 0.0
  %684 = vmatpush1.msra.mxu0 %v661
  %685 = vmatprep.subr.mxu0 0.0
  %686 = vmatpush1.msra.mxu0 %v662
  %687 = vmatprep.subr.mxu0 0.0
  %688 = vmatpush1.msra.mxu0 %v663
  %689 = vmatprep.subr.mxu0 0.0
  %690 = vmatpush1.msra.mxu0 %v664
  %691 = vmatprep.subr.mxu0 0.0
  %692 = vmatpush1.msra.mxu0 %v665
  %693 = vmatprep.subr.mxu0 0.0
  %694 = vmatpush1.msra.mxu0 %v666
  %695 = vmatprep.subr.mxu0 0.0
  %696 = vmatpush1.msra.mxu0 %v667
  %697 = vmatprep.subr.mxu0 0.0
  %698 = vmatpush1.msra.mxu0 %v668
  %699 = vmatprep.subr.mxu0 0.0
  %700 = vmatpush1.msra.mxu0 %v669
  %701 = vmatprep.subr.mxu0 0.0
  %702 = vmatpush1.msra.mxu0 %v670
  %703 = vmatprep.subr.mxu0 0.0
  %704 = vmatpush1.msra.mxu0 0.0
  %705 = vmatprep.subr.mxu0 0.0
  %706 = vmatpush1.msra.mxu0 0.0
  %707 = vmatprep.subr.mxu0 0.0
  %708 = vmatpush1.msra.mxu0 0.0
  %709 = vmatprep.subr.mxu0 0.0
  %710 = vmatpush1.msra.mxu0 0.0
  %711 = vmatprep.subr.mxu0 0.0
  %712 = vmatpush1.msra.mxu0 0.0
  %713 = vmatprep.subr.mxu0 0.0
  %714 = vmatpush1.msra.mxu0 0.0
  %715 = vmatprep.subr.mxu0 0.0
  %716 = vmatpush1.msra.mxu0 0.0
  %717 = vmatprep.subr.mxu0 0.0
  %718 = vmatpush1.msra.mxu0 0.0
  %719 = vmatprep.subr.mxu0 0.0
  %720 = vmatpush1.msra.mxu0 0.0
  %721 = vmatprep.subr.mxu0 0.0
  %722 = vmatpush1.msra.mxu0 0.0
  %723 = vmatprep.subr.mxu0 0.0
  %724 = vmatpush1.msra.mxu0 0.0
  %725 = vmatprep.subr.mxu0 0.0
  %726 = vmatpush1.msra.mxu0 0.0
  %727 = vmatprep.subr.mxu0 0.0
  %728 = vmatpush1.msra.mxu0 0.0
  %729 = vmatprep.subr.mxu0 0.0
  %730 = vmatpush1.msra.mxu0 0.0
  %731 = vmatprep.subr.mxu0 0.0
  %732 = vmatpush1.msra.mxu0 0.0
  %733 = vmatprep.subr.mxu0 0.0
  %734 = vmatpush1.msra.mxu0 0.0
  %735 = vmatprep.mubr.f32.mxu0 0.0
  %736 = vmatmul.mubr.f32.gmra.mrb[0].mxu0 %v561
  %v737 = vpop.f32.mrb[0].mxu0
  %v738 = vadd.f32 0.0, %v737
  %v739 = vpop.f32.mrb[0].mxu0
  %740 = vmatprep.mubr.f32.mxu0 0.0
  %741 = vmatmul.mubr.f32.gmra.mrb[0].mxu0 %v566
  %v742 = vpop.f32.mrb[0].mxu0
  %v743 = vadd.f32 0.0, %v742
  %v744 = vpop.f32.mrb[0].mxu0
  %745 = vmatprep.mubr.f32.mxu0 0.0
  %746 = vmatmul.mubr.f32.gmra.mrb[0].mxu0 %v571
  %v747 = vpop.f32.mrb[0].mxu0
  %v748 = vadd.f32 0.0, %v747
  %v749 = vpop.f32.mrb[0].mxu0
  %750 = vmatprep.mubr.f32.mxu0 0.0
  %751 = vmatmul.mubr.f32.gmra.mrb[0].mxu0 %v576
  %v752 = vpop.f32.mrb[0].mxu0
  %v753 = vadd.f32 0.0, %v752
  %v754 = vpop.f32.mrb[0].mxu0
  %755 = vmatprep.mubr.f32.mxu0 0.0
  %756 = vmatmul.mubr.f32.gmra.mrb[0].mxu0 %v581
  %v757 = vpop.f32.mrb[0].mxu0
  %v758 = vadd.f32 0.0, %v757
  %v759 = vpop.f32.mrb[0].mxu0
  %760 = vmatprep.mubr.f32.mxu0 0.0
  %761 = vmatmul.mubr.f32.gmra.mrb[0].mxu0 %v586
  %v762 = vpop.f32.mrb[0].mxu0
  %v763 = vadd.f32 0.0, %v762
  %v764 = vpop.f32.mrb[0].mxu0
  %765 = vmatprep.mubr.f32.mxu0 0.0
  %766 = vmatmul.mubr.f32.gmra.mrb[0].mxu0 %v591
  %v767 = vpop.f32.mrb[0].mxu0
  %v768 = vadd.f32 0.0, %v767
  %v769 = vpop.f32.mrb[0].mxu0
  %770 = vmatprep.mubr.f32.mxu0 0.0
  %771 = vmatmul.mubr.f32.gmra.mrb[0].mxu0 %v596
  %v772 = vpop.f32.mrb[0].mxu0
  %v773 = vadd.f32 0.0, %v772
  %v774 = vpop.f32.mrb[0].mxu0
  %775 = vmatprep.mubr.f32.mxu0 0.0
  %776 = vmatmul.mubr.f32.gmra.mrb[0].mxu0 %v601
  %v777 = vpop.f32.mrb[0].mxu0
  %v778 = vadd.f32 0.0, %v777
  %v779 = vpop.f32.mrb[0].mxu0
  %780 = vmatprep.mubr.f32.mxu0 0.0
  %781 = vmatmul.mubr.f32.gmra.mrb[0].mxu0 %v606
  %v782 = vpop.f32.mrb[0].mxu0
  %v783 = vadd.f32 0.0, %v782
  %v784 = vpop.f32.mrb[0].mxu0
  %785 = vmatprep.mubr.f32.mxu0 0.0
  %786 = vmatmul.mubr.f32.gmra.mrb[0].mxu0 %v611
  %v787 = vpop.f32.mrb[0].mxu0
  %v788 = vadd.f32 0.0, %v787
  %v789 = vpop.f32.mrb[0].mxu0
  %790 = vmatprep.mubr.f32.mxu0 0.0
  %791 = vmatmul.mubr.f32.gmra.mrb[0].mxu0 %v616
  %v792 = vpop.f32.mrb[0].mxu0
  %v793 = vadd.f32 0.0, %v792
  %v794 = vpop.f32.mrb[0].mxu0
  %795 = vmatprep.mubr.f32.mxu0 0.0
  %796 = vmatmul.mubr.f32.gmra.mrb[0].mxu0 %v621
  %v797 = vpop.f32.mrb[0].mxu0
  %v798 = vadd.f32 0.0, %v797
  %v799 = vpop.f32.mrb[0].mxu0
  %800 = vmatprep.mubr.f32.mxu0 0.0
  %801 = vmatmul.mubr.f32.gmra.mrb[0].mxu0 %v626
  %v802 = vpop.f32.mrb[0].mxu0
  %v803 = vadd.f32 0.0, %v802
  %v804 = vpop.f32.mrb[0].mxu0
  %805 = vmatprep.mubr.f32.mxu0 0.0
  %806 = vmatmul.mubr.f32.gmra.mrb[0].mxu0 %v631
  %v807 = vpop.f32.mrb[0].mxu0
  %v808 = vadd.f32 0.0, %v807
  %v809 = vpop.f32.mrb[0].mxu0
  %810 = vmatprep.mubr.f32.mxu0 0.0
  %811 = vmatmul.mubr.f32.gmra.mrb[0].mxu0 %v636
  %v812 = vpop.f32.mrb[0].mxu0
  %v813 = vadd.f32 0.0, %v812
  %v814 = vpop.f32.mrb[0].mxu0
  %815 = vdwg.mxu0
  %816 = vmatprep.subr.mxu0 0.0
  %817 = vmatpush1.msra.mxu0 %v639
  %818 = vmatprep.subr.mxu0 0.0
  %819 = vmatpush1.msra.mxu0 %v640
  %820 = vmatprep.subr.mxu0 0.0
  %821 = vmatpush1.msra.mxu0 %v641
  %822 = vmatprep.subr.mxu0 0.0
  %823 = vmatpush1.msra.mxu0 %v642
  %824 = vmatprep.subr.mxu0 0.0
  %825 = vmatpush1.msra.mxu0 %v643
  %826 = vmatprep.subr.mxu0 0.0
  %827 = vmatpush1.msra.mxu0 %v644
  %828 = vmatprep.subr.mxu0 0.0
  %829 = vmatpush1.msra.mxu0 %v645
  %830 = vmatprep.subr.mxu0 0.0
  %831 = vmatpush1.msra.mxu0 %v646
  %832 = vmatprep.subr.mxu0 0.0
  %833 = vmatpush1.msra.mxu0 %v647
  %834 = vmatprep.subr.mxu0 0.0
  %835 = vmatpush1.msra.mxu0 %v648
  %836 = vmatprep.subr.mxu0 0.0
  %837 = vmatpush1.msra.mxu0 %v649
  %838 = vmatprep.subr.mxu0 0.0
  %839 = vmatpush1.msra.mxu0 %v650
  %840 = vmatprep.subr.mxu0 0.0
  %841 = vmatpush1.msra.mxu0 %v651
  %842 = vmatprep.subr.mxu0 0.0
  %843 = vmatpush1.msra.mxu0 %v652
  %844 = vmatprep.subr.mxu0 0.0
  %845 = vmatpush1.msra.mxu0 %v653
  %846 = vmatprep.subr.mxu0 0.0
  %847 = vmatpush1.msra.mxu0 %v654
  %848 = vmatprep.subr.mxu0 0.0
  %849 = vmatpush1.msra.mxu0 0.0
  %850 = vmatprep.subr.mxu0 0.0
  %851 = vmatpush1.msra.mxu0 0.0
  %852 = vmatprep.subr.mxu0 0.0
  %853 = vmatpush1.msra.mxu0 0.0
  %854 = vmatprep.subr.mxu0 0.0
  %855 = vmatpush1.msra.mxu0 0.0
  %856 = vmatprep.subr.mxu0 0.0
  %857 = vmatpush1.msra.mxu0 0.0
  %858 = vmatprep.subr.mxu0 0.0
  %859 = vmatpush1.msra.mxu0 0.0
  %860 = vmatprep.subr.mxu0 0.0
  %861 = vmatpush1.msra.mxu0 0.0
  %862 = vmatprep.subr.mxu0 0.0
  %863 = vmatpush1.msra.mxu0 0.0
  %864 = vmatprep.subr.mxu0 0.0
  %865 = vmatpush1.msra.mxu0 0.0
  %866 = vmatprep.subr.mxu0 0.0
  %867 = vmatpush1.msra.mxu0 0.0
  %868 = vmatprep.subr.mxu0 0.0
  %869 = vmatpush1.msra.mxu0 0.0
  %870 = vmatprep.subr.mxu0 0.0
  %871 = vmatpush1.msra.mxu0 0.0
  %872 = vmatprep.subr.mxu0 0.0
  %873 = vmatpush1.msra.mxu0 0.0
  %874 = vmatprep.subr.mxu0 0.0
  %875 = vmatpush1.msra.mxu0 0.0
  %876 = vmatprep.subr.mxu0 0.0
  %877 = vmatpush1.msra.mxu0 0.0
  %878 = vmatprep.subr.mxu0 0.0
  %879 = vmatpush1.msra.mxu0 0.0
  %880 = vmatprep.mubr.f32.mxu0 0.0
  %881 = vmatmul.mubr.f32.gmra.mrb[0].mxu0 %v237
  %v882 = vpop.f32.mrb[0].mxu0
  %v883 = vadd.f32 %v738, %v882
  %v884 = vpop.f32.mrb[0].mxu0
  %885 = vmatprep.mubr.f32.mxu0 0.0
  %886 = vmatmul.mubr.f32.gmra.mrb[0].mxu0 %v238
  %v887 = vpop.f32.mrb[0].mxu0
  %v888 = vadd.f32 %v743, %v887
  %v889 = vpop.f32.mrb[0].mxu0
  %890 = vmatprep.mubr.f32.mxu0 0.0
  %891 = vmatmul.mubr.f32.gmra.mrb[0].mxu0 %v239
  %v892 = vpop.f32.mrb[0].mxu0
  %v893 = vadd.f32 %v748, %v892
  %v894 = vpop.f32.mrb[0].mxu0
  %895 = vmatprep.mubr.f32.mxu0 0.0
  %896 = vmatmul.mubr.f32.gmra.mrb[0].mxu0 %v240
  %v897 = vpop.f32.mrb[0].mxu0
  %v898 = vadd.f32 %v753, %v897
  %v899 = vpop.f32.mrb[0].mxu0
  %900 = vmatprep.mubr.f32.mxu0 0.0
  %901 = vmatmul.mubr.f32.gmra.mrb[0].mxu0 %v241
  %v902 = vpop.f32.mrb[0].mxu0
  %v903 = vadd.f32 %v758, %v902
  %v904 = vpop.f32.mrb[0].mxu0
  %905 = vmatprep.mubr.f32.mxu0 0.0
  %906 = vmatmul.mubr.f32.gmra.mrb[0].mxu0 %v242
  %v907 = vpop.f32.mrb[0].mxu0
  %v908 = vadd.f32 %v763, %v907
  %v909 = vpop.f32.mrb[0].mxu0
  %910 = vmatprep.mubr.f32.mxu0 0.0
  %911 = vmatmul.mubr.f32.gmra.mrb[0].mxu0 %v243
  %v912 = vpop.f32.mrb[0].mxu0
  %v913 = vadd.f32 %v768, %v912
  %v914 = vpop.f32.mrb[0].mxu0
  %915 = vmatprep.mubr.f32.mxu0 0.0
  %916 = vmatmul.mubr.f32.gmra.mrb[0].mxu0 %v244
  %v917 = vpop.f32.mrb[0].mxu0
  %v918 = vadd.f32 %v773, %v917
  %v919 = vpop.f32.mrb[0].mxu0
  %920 = vmatprep.mubr.f32.mxu0 0.0
  %921 = vmatmul.mubr.f32.gmra.mrb[0].mxu0 %v245
  %v922 = vpop.f32.mrb[0].mxu0
  %v923 = vadd.f32 %v778, %v922
  %v924 = vpop.f32.mrb[0].mxu0
  %925 = vmatprep.mubr.f32.mxu0 0.0
  %926 = vmatmul.mubr.f32.gmra.mrb[0].mxu0 %v246
  %v927 = vpop.f32.mrb[0].mxu0
  %v928 = vadd.f32 %v783, %v927
  %v929 = vpop.f32.mrb[0].mxu0
  %930 = vmatprep.mubr.f32.mxu0 0.0
  %931 = vmatmul.mubr.f32.gmra.mrb[0].mxu0 %v247
  %v932 = vpop.f32.mrb[0].mxu0
  %v933 = vadd.f32 %v788, %v932
  %v934 = vpop.f32.mrb[0].mxu0
  %935 = vmatprep.mubr.f32.mxu0 0.0
  %936 = vmatmul.mubr.f32.gmra.mrb[0].mxu0 %v248
  %v937 = vpop.f32.mrb[0].mxu0
  %v938 = vadd.f32 %v793, %v937
  %v939 = vpop.f32.mrb[0].mxu0
  %940 = vmatprep.mubr.f32.mxu0 0.0
  %941 = vmatmul.mubr.f32.gmra.mrb[0].mxu0 %v249
  %v942 = vpop.f32.mrb[0].mxu0
  %v943 = vadd.f32 %v798, %v942
  %v944 = vpop.f32.mrb[0].mxu0
  %945 = vmatprep.mubr.f32.mxu0 0.0
  %946 = vmatmul.mubr.f32.gmra.mrb[0].mxu0 %v250
  %v947 = vpop.f32.mrb[0].mxu0
  %v948 = vadd.f32 %v803, %v947
  %v949 = vpop.f32.mrb[0].mxu0
  %950 = vmatprep.mubr.f32.mxu0 0.0
  %951 = vmatmul.mubr.f32.gmra.mrb[0].mxu0 %v251
  %v952 = vpop.f32.mrb[0].mxu0
  %v953 = vadd.f32 %v808, %v952
  %v954 = vpop.f32.mrb[0].mxu0
  %955 = vmatprep.mubr.f32.mxu0 0.0
  %956 = vmatmul.mubr.f32.gmra.mrb[0].mxu0 %v252
  %v957 = vpop.f32.mrb[0].mxu0
  %v958 = vadd.f32 %v813, %v957
  %v959 = vpop.f32.mrb[0].mxu0
  %960 = vdwg.mxu0
  %v961 = vld [vmem:[%s6] sm:$0x1]
  %v963 = vlaneseq
  %v964 = vshrl.u32 %v963, 7
  %v965 = vsub.s32 0, %v964
  %v966 = vrot.slane %v961, %v965
  %v968 = vadd.f32 %v883, %v966
  %v969 = vadd.f32 %v888, %v966
  %v970 = vadd.f32 %v893, %v966
  %v971 = vadd.f32 %v898, %v966
  %v972 = vadd.f32 %v903, %v966
  %v973 = vadd.f32 %v908, %v966
  %v974 = vadd.f32 %v913, %v966
  %v975 = vadd.f32 %v918, %v966
  %v976 = vadd.f32 %v923, %v966
  %v977 = vadd.f32 %v928, %v966
  %v978 = vadd.f32 %v933, %v966
  %v979 = vadd.f32 %v938, %v966
  %v980 = vadd.f32 %v943, %v966
  %v981 = vadd.f32 %v948, %v966
  %v982 = vadd.f32 %v953, %v966
  %v983 = vadd.f32 %v958, %v966
  %v984 = vmax.f32 %v968, 0.0
  %v985 = vmax.f32 %v969, 0.0
  %v986 = vmax.f32 %v970, 0.0
  %v987 = vmax.f32 %v971, 0.0
  %v988 = vmax.f32 %v972, 0.0
  %v989 = vmax.f32 %v973, 0.0
  %v990 = vmax.f32 %v974, 0.0
  %v991 = vmax.f32 %v975, 0.0
  %v992 = vmax.f32 %v976, 0.0
  %v993 = vmax.f32 %v977, 0.0
  %v994 = vmax.f32 %v978, 0.0
  %v995 = vmax.f32 %v979, 0.0
  %v996 = vmax.f32 %v980, 0.0
  %v997 = vmax.f32 %v981, 0.0
  %v998 = vmax.f32 %v982, 0.0
  %v999 = vmax.f32 %v983, 0.0
  %1000 = vst [vmem:[%s7] sm:$0xff] %v984
  %1001 = vst [vmem:[%s7 + $0x8] sm:$0xff] %v985
  %1002 = vst [vmem:[%s7 + $0x10] sm:$0xff] %v986
  %1003 = vst [vmem:[%s7 + $0x18] sm:$0xff] %v987
  %1004 = vst [vmem:[%s7 + $0x20] sm:$0xff] %v988
  %1005 = vst [vmem:[%s7 + $0x28] sm:$0xff] %v989
  %1006 = vst [vmem:[%s7 + $0x30] sm:$0xff] %v990
  %1007 = vst [vmem:[%s7 + $0x38] sm:$0xff] %v991
  %1008 = vst [vmem:[%s7 + $0x40] sm:$0xff] %v992
  %1009 = vst [vmem:[%s7 + $0x48] sm:$0xff] %v993
  %1010 = vst [vmem:[%s7 + $0x50] sm:$0xff] %v994
  %1011 = vst [vmem:[%s7 + $0x58] sm:$0xff] %v995
  %1012 = vst [vmem:[%s7 + $0x60] sm:$0xff] %v996
  %1013 = vst [vmem:[%s7 + $0x68] sm:$0xff] %v997
  %1014 = vst [vmem:[%s7 + $0x70] sm:$0xff] %v998
  %1015 = vst [vmem:[%s7 + $0x78] sm:$0xff] %v999
  // Predicated region
  $region30: #{forward.3} parent=0 // pred_check
    _
  $region31: #{forward.3} parent=0 // pred_check_branch
    %1017 = sbr.rel (0) target = $region33
  $region32: #{forward.3} parent=0 // pred_region
    _
  $region33: #{forward.3} parent=0 // pred_fallthru
    _
  // Predicated region
  $region34: #{forward.3} parent=0 // pred_check
    _
  $region35: #{forward.3} parent=0 // pred_check_branch
    %1019 = sbr.rel (0) target = $region37
  $region36: #{forward.3} parent=0 // pred_region
    _
  $region37: #{forward.3} parent=0 // pred_fallthru
    _

// kernel: forward.5
$region0: #{forward.5}
  #allocation0 [shape = 'u32[]', space=smem, size = 0x4, offset = 0x4, fixed_abs, tag = 'smem constant byte address 0x4 - core index']
  #allocation1 [shape = 'u32[144,128]{1,0:T(1,128)}', space=vmem, size = 0x12000, scoped, tag = 'internal scratch']
  %s0 = inlined_call_operand.vmem [shape: f32[128,128], index: 0, kind: input, shape index: {}]
  %s1 = inlined_call_operand.vmem [shape: f32[128,128], index: 1, kind: input, shape index: {}]
  %s2 = inlined_call_operand.vmem [shape: f32[128,128], index: 2, kind: input, shape index: {}]
  %s3 = inlined_call_operand.vmem [shape: f32[128,128], index: 3, kind: input, shape index: {}, may-alias: {3,4}]
  %s4 = inlined_call_operand.vmem [shape: f32[128,128], index: 4, kind: input, shape index: {}, may-alias: {3,4}]
  %s5 = inlined_call_operand.vmem [shape: f32[128,128], index: 5, kind: input, shape index: {}]
  %s6 = inlined_call_operand.vmem [shape: f32[1,128], index: 6, kind: input, shape index: {}]
  %s7 = inlined_call_operand.vmem [shape: f32[128,128], index: 7, kind: input, shape index: {}]
  %s8 = inlined_call_operand.vmem [shape: f32[128,128], index: 8, kind: input, shape index: {}]
  %s9 = inlined_call_operand.vmem [shape: f32[128,128], index: 9, kind: input, shape index: {}]
  %s10 = inlined_call_operand.vmem [shape: f32[1,128], index: 10, kind: input, shape index: {}]
  %s11 = inlined_call_operand.vmem [shape: f32[128,128], index: 11, kind: input, shape index: {}]
  %s12 = inlined_call_operand.vmem [shape: f32[128,128], index: 12, kind: input, shape index: {}]
  %s13 = inlined_call_operand.vmem [shape: f32[128,128], index: 13, kind: output, shape index: {}]
  %s14 = sld [smem:[#allocation0]]
  $region62: #{forward.5} parent=0
    _
  %s16 = ssub.s32 1, %s14
  %s17 = scalar_select 0, %s16, %s14
  // Predicated region
  $region2: #{forward.5} parent=0 // pred_check
    _
  $region3: #{forward.5} parent=0 // pred_check_branch
    %19 = sbr.rel (0) target = $region5
  $region4: #{forward.5} parent=0 // pred_region
    _
  $region5: #{forward.5} parent=0 // pred_fallthru
    _
  // Predicated region
  $region6: #{forward.5} parent=0 // pred_check
    _
  $region7: #{forward.5} parent=0 // pred_check_branch
    %21 = sbr.rel (0) target = $region9
  $region8: #{forward.5} parent=0 // pred_region
    _
  $region9: #{forward.5} parent=0 // pred_fallthru
    _
  // Predicated region
  $region10: #{forward.5} parent=0 // pred_check
    _
  $region11: #{forward.5} parent=0 // pred_check_branch
    %23 = sbr.rel (0) target = $region13
  $region12: #{forward.5} parent=0 // pred_region
    _
  $region13: #{forward.5} parent=0 // pred_fallthru
    _
  // Predicated region
  $region14: #{forward.5} parent=0 // pred_check
    _
  $region15: #{forward.5} parent=0 // pred_check_branch
    %25 = sbr.rel (0) target = $region17
  $region16: #{forward.5} parent=0 // pred_region
    _
  $region17: #{forward.5} parent=0 // pred_fallthru
    _
  // Predicated region
  $region18: #{forward.5} parent=0 // pred_check
    _
  $region19: #{forward.5} parent=0 // pred_check_branch
    %27 = sbr.rel (0) target = $region21
  $region20: #{forward.5} parent=0 // pred_region
    _
  $region21: #{forward.5} parent=0 // pred_fallthru
    _
  // Predicated region
  $region22: #{forward.5} parent=0 // pred_check
    _
  $region23: #{forward.5} parent=0 // pred_check_branch
    %29 = sbr.rel (0) target = $region25
  $region24: #{forward.5} parent=0 // pred_region
    _
  $region25: #{forward.5} parent=0 // pred_fallthru
    _
  // Predicated region
  $region26: #{forward.5} parent=0 // pred_check
    _
  $region27: #{forward.5} parent=0 // pred_check_branch
    %31 = sbr.rel (0) target = $region29
  $region28: #{forward.5} parent=0 // pred_region
    _
  $region29: #{forward.5} parent=0 // pred_fallthru
    _
  // Predicated region
  $region30: #{forward.5} parent=0 // pred_check
    _
  $region31: #{forward.5} parent=0 // pred_check_branch
    %33 = sbr.rel (0) target = $region33
  $region32: #{forward.5} parent=0 // pred_region
    _
  $region33: #{forward.5} parent=0 // pred_fallthru
    _
  // Predicated region
  $region34: #{forward.5} parent=0 // pred_check
    _
  $region35: #{forward.5} parent=0 // pred_check_branch
    %35 = sbr.rel (0) target = $region37
  $region36: #{forward.5} parent=0 // pred_region
    _
  $region37: #{forward.5} parent=0 // pred_fallthru
    _
  // Predicated region
  $region38: #{forward.5} parent=0 // pred_check
    _
  $region39: #{forward.5} parent=0 // pred_check_branch
    %37 = sbr.rel (0) target = $region41
  $region40: #{forward.5} parent=0 // pred_region
    _
  $region41: #{forward.5} parent=0 // pred_fallthru
    _
  // Predicated region
  $region42: #{forward.5} parent=0 // pred_check
    _
  $region43: #{forward.5} parent=0 // pred_check_branch
    %39 = sbr.rel (0) target = $region45
  $region44: #{forward.5} parent=0 // pred_region
    _
  $region45: #{forward.5} parent=0 // pred_fallthru
    _
  // Predicated region
  $region46: #{forward.5} parent=0 // pred_check
    _
  $region47: #{forward.5} parent=0 // pred_check_branch
    %41 = sbr.rel (0) target = $region49
  $region48: #{forward.5} parent=0 // pred_region
    _
  $region49: #{forward.5} parent=0 // pred_fallthru
    _
  // Predicated region
  $region50: #{forward.5} parent=0 // pred_check
    _
  $region51: #{forward.5} parent=0 // pred_check_branch
    %43 = sbr.rel (0) target = $region53
  $region52: #{forward.5} parent=0 // pred_region
    _
  $region53: #{forward.5} parent=0 // pred_fallthru
    _
  %v44 = vld [vmem:[%s0] sm:$0xff]
  %v45 = vld [vmem:[%s0 + $0x8] sm:$0xff]
  %v46 = vld [vmem:[%s0 + $0x10] sm:$0xff]
  %v47 = vld [vmem:[%s0 + $0x18] sm:$0xff]
  %v48 = vld [vmem:[%s0 + $0x20] sm:$0xff]
  %v49 = vld [vmem:[%s0 + $0x28] sm:$0xff]
  %v50 = vld [vmem:[%s0 + $0x30] sm:$0xff]
  %v51 = vld [vmem:[%s0 + $0x38] sm:$0xff]
  %v52 = vld [vmem:[%s0 + $0x40] sm:$0xff]
  %v53 = vld [vmem:[%s0 + $0x48] sm:$0xff]
  %v54 = vld [vmem:[%s0 + $0x50] sm:$0xff]
  %v55 = vld [vmem:[%s0 + $0x58] sm:$0xff]
  %v56 = vld [vmem:[%s0 + $0x60] sm:$0xff]
  %v57 = vld [vmem:[%s0 + $0x68] sm:$0xff]
  %v58 = vld [vmem:[%s0 + $0x70] sm:$0xff]
  %v59 = vld [vmem:[%s0 + $0x78] sm:$0xff]
  %v60 = vld [vmem:[%s1] sm:$0xff]
  %v61 = vld [vmem:[%s1 + $0x8] sm:$0xff]
  %v62 = vld [vmem:[%s1 + $0x10] sm:$0xff]
  %v63 = vld [vmem:[%s1 + $0x18] sm:$0xff]
  %v64 = vld [vmem:[%s1 + $0x20] sm:$0xff]
  %v65 = vld [vmem:[%s1 + $0x28] sm:$0xff]
  %v66 = vld [vmem:[%s1 + $0x30] sm:$0xff]
  %v67 = vld [vmem:[%s1 + $0x38] sm:$0xff]
  %v68 = vld [vmem:[%s1 + $0x40] sm:$0xff]
  %v69 = vld [vmem:[%s1 + $0x48] sm:$0xff]
  %v70 = vld [vmem:[%s1 + $0x50] sm:$0xff]
  %v71 = vld [vmem:[%s1 + $0x58] sm:$0xff]
  %v72 = vld [vmem:[%s1 + $0x60] sm:$0xff]
  %v73 = vld [vmem:[%s1 + $0x68] sm:$0xff]
  %v74 = vld [vmem:[%s1 + $0x70] sm:$0xff]
  %v75 = vld [vmem:[%s1 + $0x78] sm:$0xff]
  %76 = vmatprep.subr.mxu0 0.0
  %77 = vmatpush1.msra.mxu0 %v60
  %78 = vmatprep.subr.mxu0 0.0
  %79 = vmatpush1.msra.mxu0 %v61
  %80 = vmatprep.subr.mxu0 0.0
  %81 = vmatpush1.msra.mxu0 %v62
  %82 = vmatprep.subr.mxu0 0.0
  %83 = vmatpush1.msra.mxu0 %v63
  %84 = vmatprep.subr.mxu0 0.0
  %85 = vmatpush1.msra.mxu0 %v64
  %86 = vmatprep.subr.mxu0 0.0
  %87 = vmatpush1.msra.mxu0 %v65
  %88 = vmatprep.subr.mxu0 0.0
  %89 = vmatpush1.msra.mxu0 %v66
  %90 = vmatprep.subr.mxu0 0.0
  %91 = vmatpush1.msra.mxu0 %v67
  %92 = vmatprep.subr.mxu0 0.0
  %93 = vmatpush1.msra.mxu0 %v68
  %94 = vmatprep.subr.mxu0 0.0
  %95 = vmatpush1.msra.mxu0 %v69
  %96 = vmatprep.subr.mxu0 0.0
  %97 = vmatpush1.msra.mxu0 %v70
  %98 = vmatprep.subr.mxu0 0.0
  %99 = vmatpush1.msra.mxu0 %v71
  %100 = vmatprep.subr.mxu0 0.0
  %101 = vmatpush1.msra.mxu0 %v72
  %102 = vmatprep.subr.mxu0 0.0
  %103 = vmatpush1.msra.mxu0 %v73
  %104 = vmatprep.subr.mxu0 0.0
  %105 = vmatpush1.msra.mxu0 %v74
  %106 = vmatprep.subr.mxu0 0.0
  %107 = vmatpush1.msra.mxu0 %v75
  %108 = vmatprep.subr.mxu0 0.0
  %109 = vmatpush1.msra.mxu0 0.0
  %110 = vmatprep.subr.mxu0 0.0
  %111 = vmatpush1.msra.mxu0 0.0
  %112 = vmatprep.subr.mxu0 0.0
  %113 = vmatpush1.msra.mxu0 0.0
  %114 = vmatprep.subr.mxu0 0.0
  %115 = vmatpush1.msra.mxu0 0.0
  %116 = vmatprep.subr.mxu0 0.0
  %117 = vmatpush1.msra.mxu0 0.0
  %118 = vmatprep.subr.mxu0 0.0
  %119 = vmatpush1.msra.mxu0 0.0
  %120 = vmatprep.subr.mxu0 0.0
  %121 = vmatpush1.msra.mxu0 0.0
  %122 = vmatprep.subr.mxu0 0.0
  %123 = vmatpush1.msra.mxu0 0.0
  %124 = vmatprep.subr.mxu0 0.0
  %125 = vmatpush1.msra.mxu0 0.0
  %126 = vmatprep.subr.mxu0 0.0
  %127 = vmatpush1.msra.mxu0 0.0
  %128 = vmatprep.subr.mxu0 0.0
  %129 = vmatpush1.msra.mxu0 0.0
  %130 = vmatprep.subr.mxu0 0.0
  %131 = vmatpush1.msra.mxu0 0.0
  %132 = vmatprep.subr.mxu0 0.0
  %133 = vmatpush1.msra.mxu0 0.0
  %134 = vmatprep.subr.mxu0 0.0
  %135 = vmatpush1.msra.mxu0 0.0
  %136 = vmatprep.subr.mxu0 0.0
  %137 = vmatpush1.msra.mxu0 0.0
  %138 = vmatprep.subr.mxu0 0.0
  %139 = vmatpush1.msra.mxu0 0.0
  %140 = vmatprep.mubr.f32.mxu0 0.0
  %141 = vmatmul.mubr.f32.gmra.mrb[0].mxu0 %v44
  %v142 = vpop.f32.mrb[0].mxu0
  %v143 = vadd.f32 0.0, %v142
  %v144 = vpop.f32.mrb[0].mxu0
  %145 = vmatprep.mubr.f32.mxu0 0.0
  %146 = vmatmul.mubr.f32.gmra.mrb[0].mxu0 %v45
  %v147 = vpop.f32.mrb[0].mxu0
  %v148 = vadd.f32 0.0, %v147
  %v149 = vpop.f32.mrb[0].mxu0
  %150 = vmatprep.mubr.f32.mxu0 0.0
  %151 = vmatmul.mubr.f32.gmra.mrb[0].mxu0 %v46
  %v152 = vpop.f32.mrb[0].mxu0
  %v153 = vadd.f32 0.0, %v152
  %v154 = vpop.f32.mrb[0].mxu0
  %155 = vmatprep.mubr.f32.mxu0 0.0
  %156 = vmatmul.mubr.f32.gmra.mrb[0].mxu0 %v47
  %v157 = vpop.f32.mrb[0].mxu0
  %v158 = vadd.f32 0.0, %v157
  %v159 = vpop.f32.mrb[0].mxu0
  %160 = vmatprep.mubr.f32.mxu0 0.0
  %161 = vmatmul.mubr.f32.gmra.mrb[0].mxu0 %v48
  %v162 = vpop.f32.mrb[0].mxu0
  %v163 = vadd.f32 0.0, %v162
  %v164 = vpop.f32.mrb[0].mxu0
  %165 = vmatprep.mubr.f32.mxu0 0.0
  %166 = vmatmul.mubr.f32.gmra.mrb[0].mxu0 %v49
  %v167 = vpop.f32.mrb[0].mxu0
  %v168 = vadd.f32 0.0, %v167
  %v169 = vpop.f32.mrb[0].mxu0
  %170 = vmatprep.mubr.f32.mxu0 0.0
  %171 = vmatmul.mubr.f32.gmra.mrb[0].mxu0 %v50
  %v172 = vpop.f32.mrb[0].mxu0
  %v173 = vadd.f32 0.0, %v172
  %v174 = vpop.f32.mrb[0].mxu0
  %175 = vmatprep.mubr.f32.mxu0 0.0
  %176 = vmatmul.mubr.f32.gmra.mrb[0].mxu0 %v51
  %v177 = vpop.f32.mrb[0].mxu0
  %v178 = vadd.f32 0.0, %v177
  %v179 = vpop.f32.mrb[0].mxu0
  %180 = vmatprep.mubr.f32.mxu0 0.0
  %181 = vmatmul.mubr.f32.gmra.mrb[0].mxu0 %v52
  %v182 = vpop.f32.mrb[0].mxu0
  %v183 = vadd.f32 0.0, %v182
  %v184 = vpop.f32.mrb[0].mxu0
  %185 = vmatprep.mubr.f32.mxu0 0.0
  %186 = vmatmul.mubr.f32.gmra.mrb[0].mxu0 %v53
  %v187 = vpop.f32.mrb[0].mxu0
  %v188 = vadd.f32 0.0, %v187
  %v189 = vpop.f32.mrb[0].mxu0
  %190 = vmatprep.mubr.f32.mxu0 0.0
  %191 = vmatmul.mubr.f32.gmra.mrb[0].mxu0 %v54
  %v192 = vpop.f32.mrb[0].mxu0
  %v193 = vadd.f32 0.0, %v192
  %v194 = vpop.f32.mrb[0].mxu0
  %195 = vmatprep.mubr.f32.mxu0 0.0
  %196 = vmatmul.mubr.f32.gmra.mrb[0].mxu0 %v55
  %v197 = vpop.f32.mrb[0].mxu0
  %v198 = vadd.f32 0.0, %v197
  %v199 = vpop.f32.mrb[0].mxu0
  %200 = vmatprep.mubr.f32.mxu0 0.0
  %201 = vmatmul.mubr.f32.gmra.mrb[0].mxu0 %v56
  %v202 = vpop.f32.mrb[0].mxu0
  %v203 = vadd.f32 0.0, %v202
  %v204 = vpop.f32.mrb[0].mxu0
  %205 = vmatprep.mubr.f32.mxu0 0.0
  %206 = vmatmul.mubr.f32.gmra.mrb[0].mxu0 %v57
  %v207 = vpop.f32.mrb[0].mxu0
  %v208 = vadd.f32 0.0, %v207
  %v209 = vpop.f32.mrb[0].mxu0
  %210 = vmatprep.mubr.f32.mxu0 0.0
  %211 = vmatmul.mubr.f32.gmra.mrb[0].mxu0 %v58
  %v212 = vpop.f32.mrb[0].mxu0
  %v213 = vadd.f32 0.0, %v212
  %v214 = vpop.f32.mrb[0].mxu0
  %215 = vmatprep.mubr.f32.mxu0 0.0
  %216 = vmatmul.mubr.f32.gmra.mrb[0].mxu0 %v59
  %v217 = vpop.f32.mrb[0].mxu0
  %v218 = vadd.f32 0.0, %v217
  %v219 = vpop.f32.mrb[0].mxu0
  %220 = vdwg.mxu0
  %v221 = vld [vmem:[%s5] sm:$0xff]
  %v222 = vld [vmem:[%s5 + $0x8] sm:$0xff]
  %v223 = vld [vmem:[%s5 + $0x10] sm:$0xff]
  %v224 = vld [vmem:[%s5 + $0x18] sm:$0xff]
  %v225 = vld [vmem:[%s5 + $0x20] sm:$0xff]
  %v226 = vld [vmem:[%s5 + $0x28] sm:$0xff]
  %v227 = vld [vmem:[%s5 + $0x30] sm:$0xff]
  %v228 = vld [vmem:[%s5 + $0x38] sm:$0xff]
  %v229 = vld [vmem:[%s5 + $0x40] sm:$0xff]
  %v230 = vld [vmem:[%s5 + $0x48] sm:$0xff]
  %v231 = vld [vmem:[%s5 + $0x50] sm:$0xff]
  %v232 = vld [vmem:[%s5 + $0x58] sm:$0xff]
  %v233 = vld [vmem:[%s5 + $0x60] sm:$0xff]
  %v234 = vld [vmem:[%s5 + $0x68] sm:$0xff]
  %v235 = vld [vmem:[%s5 + $0x70] sm:$0xff]
  %v236 = vld [vmem:[%s5 + $0x78] sm:$0xff]
  %v237 = vld [vmem:[%s6] sm:$0x1]
  %v239 = vlaneseq
  %v240 = vshrl.u32 %v239, 7
  %v241 = vsub.s32 0, %v240
  %v242 = vrot.slane %v237, %v241
  %244 = vmatprep.subr.mxu0 0.0
  %245 = vmatpush1.msra.mxu0 %v221
  %246 = vmatprep.subr.mxu0 0.0
  %247 = vmatpush1.msra.mxu0 %v222
  %248 = vmatprep.subr.mxu0 0.0
  %249 = vmatpush1.msra.mxu0 %v223
  %250 = vmatprep.subr.mxu0 0.0
  %251 = vmatpush1.msra.mxu0 %v224
  %252 = vmatprep.subr.mxu0 0.0
  %253 = vmatpush1.msra.mxu0 %v225
  %254 = vmatprep.subr.mxu0 0.0
  %255 = vmatpush1.msra.mxu0 %v226
  %256 = vmatprep.subr.mxu0 0.0
  %257 = vmatpush1.msra.mxu0 %v227
  %258 = vmatprep.subr.mxu0 0.0
  %259 = vmatpush1.msra.mxu0 %v228
  %260 = vmatprep.subr.mxu0 0.0
  %261 = vmatpush1.msra.mxu0 %v229
  %262 = vmatprep.subr.mxu0 0.0
  %263 = vmatpush1.msra.mxu0 %v230
  %264 = vmatprep.subr.mxu0 0.0
  %265 = vmatpush1.msra.mxu0 %v231
  %266 = vmatprep.subr.mxu0 0.0
  %267 = vmatpush1.msra.mxu0 %v232
  %268 = vmatprep.subr.mxu0 0.0
  %269 = vmatpush1.msra.mxu0 %v233
  %270 = vmatprep.subr.mxu0 0.0
  %271 = vmatpush1.msra.mxu0 %v234
  %272 = vmatprep.subr.mxu0 0.0
  %273 = vmatpush1.msra.mxu0 %v235
  %274 = vmatprep.subr.mxu0 0.0
  %275 = vmatpush1.msra.mxu0 %v236
  %276 = vmatprep.subr.mxu0 0.0
  %277 = vmatpush1.msra.mxu0 0.0
  %278 = vmatprep.subr.mxu0 0.0
  %279 = vmatpush1.msra.mxu0 0.0
  %280 = vmatprep.subr.mxu0 0.0
  %281 = vmatpush1.msra.mxu0 0.0
  %282 = vmatprep.subr.mxu0 0.0
  %283 = vmatpush1.msra.mxu0 0.0
  %284 = vmatprep.subr.mxu0 0.0
  %285 = vmatpush1.msra.mxu0 0.0
  %286 = vmatprep.subr.mxu0 0.0
  %287 = vmatpush1.msra.mxu0 0.0
  %288 = vmatprep.subr.mxu0 0.0
  %289 = vmatpush1.msra.mxu0 0.0
  %290 = vmatprep.subr.mxu0 0.0
  %291 = vmatpush1.msra.mxu0 0.0
  %292 = vmatprep.subr.mxu0 0.0
  %293 = vmatpush1.msra.mxu0 0.0
  %294 = vmatprep.subr.mxu0 0.0
  %295 = vmatpush1.msra.mxu0 0.0
  %296 = vmatprep.subr.mxu0 0.0
  %297 = vmatpush1.msra.mxu0 0.0
  %298 = vmatprep.subr.mxu0 0.0
  %299 = vmatpush1.msra.mxu0 0.0
  %300 = vmatprep.subr.mxu0 0.0
  %301 = vmatpush1.msra.mxu0 0.0
  %302 = vmatprep.subr.mxu0 0.0
  %303 = vmatpush1.msra.mxu0 0.0
  %304 = vmatprep.subr.mxu0 0.0
  %305 = vmatpush1.msra.mxu0 0.0
  %306 = vmatprep.subr.mxu0 0.0
  %307 = vmatpush1.msra.mxu0 0.0
  %308 = vmatprep.mubr.f32.mxu0 0.0
  %309 = vmatmul.mubr.f32.gmra.mrb[0].mxu0 %v143
  %v310 = vpop.f32.mrb[0].mxu0
  %v311 = vadd.f32 %v242, %v310
  %v312 = vpop.f32.mrb[0].mxu0
  %313 = vmatprep.mubr.f32.mxu0 0.0
  %314 = vmatmul.mubr.f32.gmra.mrb[0].mxu0 %v148
  %v315 = vpop.f32.mrb[0].mxu0
  %v316 = vadd.f32 %v242, %v315
  %v317 = vpop.f32.mrb[0].mxu0
  %318 = vmatprep.mubr.f32.mxu0 0.0
  %319 = vmatmul.mubr.f32.gmra.mrb[0].mxu0 %v153
  %v320 = vpop.f32.mrb[0].mxu0
  %v321 = vadd.f32 %v242, %v320
  %v322 = vpop.f32.mrb[0].mxu0
  %323 = vmatprep.mubr.f32.mxu0 0.0
  %324 = vmatmul.mubr.f32.gmra.mrb[0].mxu0 %v158
  %v325 = vpop.f32.mrb[0].mxu0
  %v326 = vadd.f32 %v242, %v325
  %v327 = vpop.f32.mrb[0].mxu0
  %328 = vmatprep.mubr.f32.mxu0 0.0
  %329 = vmatmul.mubr.f32.gmra.mrb[0].mxu0 %v163
  %v330 = vpop.f32.mrb[0].mxu0
  %v331 = vadd.f32 %v242, %v330
  %v332 = vpop.f32.mrb[0].mxu0
  %333 = vmatprep.mubr.f32.mxu0 0.0
  %334 = vmatmul.mubr.f32.gmra.mrb[0].mxu0 %v168
  %v335 = vpop.f32.mrb[0].mxu0
  %v336 = vadd.f32 %v242, %v335
  %v337 = vpop.f32.mrb[0].mxu0
  %338 = vmatprep.mubr.f32.mxu0 0.0
  %339 = vmatmul.mubr.f32.gmra.mrb[0].mxu0 %v173
  %v340 = vpop.f32.mrb[0].mxu0
  %v341 = vadd.f32 %v242, %v340
  %v342 = vpop.f32.mrb[0].mxu0
  %343 = vmatprep.mubr.f32.mxu0 0.0
  %344 = vmatmul.mubr.f32.gmra.mrb[0].mxu0 %v178
  %v345 = vpop.f32.mrb[0].mxu0
  %v346 = vadd.f32 %v242, %v345
  %v347 = vpop.f32.mrb[0].mxu0
  %348 = vmatprep.mubr.f32.mxu0 0.0
  %349 = vmatmul.mubr.f32.gmra.mrb[0].mxu0 %v183
  %v350 = vpop.f32.mrb[0].mxu0
  %v351 = vadd.f32 %v242, %v350
  %v352 = vpop.f32.mrb[0].mxu0
  %353 = vmatprep.mubr.f32.mxu0 0.0
  %354 = vmatmul.mubr.f32.gmra.mrb[0].mxu0 %v188
  %v355 = vpop.f32.mrb[0].mxu0
  %v356 = vadd.f32 %v242, %v355
  %v357 = vpop.f32.mrb[0].mxu0
  %358 = vmatprep.mubr.f32.mxu0 0.0
  %359 = vmatmul.mubr.f32.gmra.mrb[0].mxu0 %v193
  %v360 = vpop.f32.mrb[0].mxu0
  %v361 = vadd.f32 %v242, %v360
  %v362 = vpop.f32.mrb[0].mxu0
  %363 = vmatprep.mubr.f32.mxu0 0.0
  %364 = vmatmul.mubr.f32.gmra.mrb[0].mxu0 %v198
  %v365 = vpop.f32.mrb[0].mxu0
  %v366 = vadd.f32 %v242, %v365
  %v367 = vpop.f32.mrb[0].mxu0
  %368 = vmatprep.mubr.f32.mxu0 0.0
  %369 = vmatmul.mubr.f32.gmra.mrb[0].mxu0 %v203
  %v370 = vpop.f32.mrb[0].mxu0
  %v371 = vadd.f32 %v242, %v370
  %v372 = vpop.f32.mrb[0].mxu0
  %373 = vmatprep.mubr.f32.mxu0 0.0
  %374 = vmatmul.mubr.f32.gmra.mrb[0].mxu0 %v208
  %v375 = vpop.f32.mrb[0].mxu0
  %v376 = vadd.f32 %v242, %v375
  %v377 = vpop.f32.mrb[0].mxu0
  %378 = vmatprep.mubr.f32.mxu0 0.0
  %379 = vmatmul.mubr.f32.gmra.mrb[0].mxu0 %v213
  %v380 = vpop.f32.mrb[0].mxu0
  %v381 = vadd.f32 %v242, %v380
  %v382 = vpop.f32.mrb[0].mxu0
  %383 = vmatprep.mubr.f32.mxu0 0.0
  %384 = vmatmul.mubr.f32.gmra.mrb[0].mxu0 %v218
  %v385 = vpop.f32.mrb[0].mxu0
  %v386 = vadd.f32 %v242, %v385
  %v387 = vpop.f32.mrb[0].mxu0
  %388 = vdwg.mxu0
  %vm389 = vcmp.gt.f32.partialorder %v311, 0.0
  %vm390 = vcmp.gt.f32.partialorder %v316, 0.0
  %vm391 = vcmp.gt.f32.partialorder %v321, 0.0
  %vm392 = vcmp.gt.f32.partialorder %v326, 0.0
  %vm393 = vcmp.gt.f32.partialorder %v331, 0.0
  %vm394 = vcmp.gt.f32.partialorder %v336, 0.0
  %vm395 = vcmp.gt.f32.partialorder %v341, 0.0
  %vm396 = vcmp.gt.f32.partialorder %v346, 0.0
  %vm397 = vcmp.gt.f32.partialorder %v351, 0.0
  %vm398 = vcmp.gt.f32.partialorder %v356, 0.0
  %vm399 = vcmp.gt.f32.partialorder %v361, 0.0
  %vm400 = vcmp.gt.f32.partialorder %v366, 0.0
  %vm401 = vcmp.gt.f32.partialorder %v371, 0.0
  %vm402 = vcmp.gt.f32.partialorder %v376, 0.0
  %vm403 = vcmp.gt.f32.partialorder %v381, 0.0
  %vm404 = vcmp.gt.f32.partialorder %v386, 0.0
  %v405 = vmul.f32 %v311, 0.2
  %v406 = vmul.f32 %v316, 0.2
  %v407 = vmul.f32 %v321, 0.2
  %v408 = vmul.f32 %v326, 0.2
  %v409 = vmul.f32 %v331, 0.2
  %v410 = vmul.f32 %v336, 0.2
  %v411 = vmul.f32 %v341, 0.2
  %v412 = vmul.f32 %v346, 0.2
  %v413 = vmul.f32 %v351, 0.2
  %v414 = vmul.f32 %v356, 0.2
  %v415 = vmul.f32 %v361, 0.2
  %v416 = vmul.f32 %v366, 0.2
  %v417 = vmul.f32 %v371, 0.2
  %v418 = vmul.f32 %v376, 0.2
  %v419 = vmul.f32 %v381, 0.2
  %v420 = vmul.f32 %v386, 0.2
  %v421 = vsel %vm389, %v311, %v405
  %v422 = vsel %vm390, %v316, %v406
  %v423 = vsel %vm391, %v321, %v407
  %v424 = vsel %vm392, %v326, %v408
  %v425 = vsel %vm393, %v331, %v409
  %v426 = vsel %vm394, %v336, %v410
  %v427 = vsel %vm395, %v341, %v411
  %v428 = vsel %vm396, %v346, %v412
  %v429 = vsel %vm397, %v351, %v413
  %v430 = vsel %vm398, %v356, %v414
  %v431 = vsel %vm399, %v361, %v415
  %v432 = vsel %vm400, %v366, %v416
  %v433 = vsel %vm401, %v371, %v417
  %v434 = vsel %vm402, %v376, %v418
  %v435 = vsel %vm403, %v381, %v419
  %v436 = vsel %vm404, %v386, %v420
  %v437 = vld [vmem:[%s7] sm:$0xff]
  %v438 = vld [vmem:[%s7 + $0x8] sm:$0xff]
  %v439 = vld [vmem:[%s7 + $0x10] sm:$0xff]
  %v440 = vld [vmem:[%s7 + $0x18] sm:$0xff]
  %v441 = vld [vmem:[%s7 + $0x20] sm:$0xff]
  %v442 = vld [vmem:[%s7 + $0x28] sm:$0xff]
  %v443 = vld [vmem:[%s7 + $0x30] sm:$0xff]
  %v444 = vld [vmem:[%s7 + $0x38] sm:$0xff]
  %v445 = vld [vmem:[%s7 + $0x40] sm:$0xff]
  %v446 = vld [vmem:[%s7 + $0x48] sm:$0xff]
  %v447 = vld [vmem:[%s7 + $0x50] sm:$0xff]
  %v448 = vld [vmem:[%s7 + $0x58] sm:$0xff]
  %v449 = vld [vmem:[%s7 + $0x60] sm:$0xff]
  %v450 = vld [vmem:[%s7 + $0x68] sm:$0xff]
  %v451 = vld [vmem:[%s7 + $0x70] sm:$0xff]
  %v452 = vld [vmem:[%s7 + $0x78] sm:$0xff]
  %453 = vmatprep.subr.mxu0 0.0
  %454 = vmatpush1.msra.mxu0 %v437
  %455 = vmatprep.subr.mxu0 0.0
  %456 = vmatpush1.msra.mxu0 %v438
  %457 = vmatprep.subr.mxu0 0.0
  %458 = vmatpush1.msra.mxu0 %v439
  %459 = vmatprep.subr.mxu0 0.0
  %460 = vmatpush1.msra.mxu0 %v440
  %461 = vmatprep.subr.mxu0 0.0
  %462 = vmatpush1.msra.mxu0 %v441
  %463 = vmatprep.subr.mxu0 0.0
  %464 = vmatpush1.msra.mxu0 %v442
  %465 = vmatprep.subr.mxu0 0.0
  %466 = vmatpush1.msra.mxu0 %v443
  %467 = vmatprep.subr.mxu0 0.0
  %468 = vmatpush1.msra.mxu0 %v444
  %469 = vmatprep.subr.mxu0 0.0
  %470 = vmatpush1.msra.mxu0 %v445
  %471 = vmatprep.subr.mxu0 0.0
  %472 = vmatpush1.msra.mxu0 %v446
  %473 = vmatprep.subr.mxu0 0.0
  %474 = vmatpush1.msra.mxu0 %v447
  %475 = vmatprep.subr.mxu0 0.0
  %476 = vmatpush1.msra.mxu0 %v448
  %477 = vmatprep.subr.mxu0 0.0
  %478 = vmatpush1.msra.mxu0 %v449
  %479 = vmatprep.subr.mxu0 0.0
  %480 = vmatpush1.msra.mxu0 %v450
  %481 = vmatprep.subr.mxu0 0.0
  %482 = vmatpush1.msra.mxu0 %v451
  %483 = vmatprep.subr.mxu0 0.0
  %484 = vmatpush1.msra.mxu0 %v452
  %485 = vmatprep.subr.mxu0 0.0
  %486 = vmatpush1.msra.mxu0 0.0
  %487 = vmatprep.subr.mxu0 0.0
  %488 = vmatpush1.msra.mxu0 0.0
  %489 = vmatprep.subr.mxu0 0.0
  %490 = vmatpush1.msra.mxu0 0.0
  %491 = vmatprep.subr.mxu0 0.0
  %492 = vmatpush1.msra.mxu0 0.0
  %493 = vmatprep.subr.mxu0 0.0
  %494 = vmatpush1.msra.mxu0 0.0
  %495 = vmatprep.subr.mxu0 0.0
  %496 = vmatpush1.msra.mxu0 0.0
  %497 = vmatprep.subr.mxu0 0.0
  %498 = vmatpush1.msra.mxu0 0.0
  %499 = vmatprep.subr.mxu0 0.0
  %500 = vmatpush1.msra.mxu0 0.0
  %501 = vmatprep.subr.mxu0 0.0
  %502 = vmatpush1.msra.mxu0 0.0
  %503 = vmatprep.subr.mxu0 0.0
  %504 = vmatpush1.msra.mxu0 0.0
  %505 = vmatprep.subr.mxu0 0.0
  %506 = vmatpush1.msra.mxu0 0.0
  %507 = vmatprep.subr.mxu0 0.0
  %508 = vmatpush1.msra.mxu0 0.0
  %509 = vmatprep.subr.mxu0 0.0
  %510 = vmatpush1.msra.mxu0 0.0
  %511 = vmatprep.subr.mxu0 0.0
  %512 = vmatpush1.msra.mxu0 0.0
  %513 = vmatprep.subr.mxu0 0.0
  %514 = vmatpush1.msra.mxu0 0.0
  %515 = vmatprep.subr.mxu0 0.0
  %516 = vmatpush1.msra.mxu0 0.0
  %517 = vmatprep.mubr.f32.mxu0 0.0
  %518 = vmatmul.mubr.f32.gmra.mrb[0].mxu0 %v421
  %v519 = vpop.f32.mrb[0].mxu0
  %v520 = vadd.f32 0.0, %v519
  %v521 = vpop.f32.mrb[0].mxu0
  %522 = vmatprep.mubr.f32.mxu0 0.0
  %523 = vmatmul.mubr.f32.gmra.mrb[0].mxu0 %v422
  %v524 = vpop.f32.mrb[0].mxu0
  %v525 = vadd.f32 0.0, %v524
  %v526 = vpop.f32.mrb[0].mxu0
  %527 = vmatprep.mubr.f32.mxu0 0.0
  %528 = vmatmul.mubr.f32.gmra.mrb[0].mxu0 %v423
  %v529 = vpop.f32.mrb[0].mxu0
  %v530 = vadd.f32 0.0, %v529
  %v531 = vpop.f32.mrb[0].mxu0
  %532 = vmatprep.mubr.f32.mxu0 0.0
  %533 = vmatmul.mubr.f32.gmra.mrb[0].mxu0 %v424
  %v534 = vpop.f32.mrb[0].mxu0
  %v535 = vadd.f32 0.0, %v534
  %v536 = vpop.f32.mrb[0].mxu0
  %537 = vmatprep.mubr.f32.mxu0 0.0
  %538 = vmatmul.mubr.f32.gmra.mrb[0].mxu0 %v425
  %v539 = vpop.f32.mrb[0].mxu0
  %v540 = vadd.f32 0.0, %v539
  %v541 = vpop.f32.mrb[0].mxu0
  %542 = vmatprep.mubr.f32.mxu0 0.0
  %543 = vmatmul.mubr.f32.gmra.mrb[0].mxu0 %v426
  %v544 = vpop.f32.mrb[0].mxu0
  %v545 = vadd.f32 0.0, %v544
  %v546 = vpop.f32.mrb[0].mxu0
  %547 = vmatprep.mubr.f32.mxu0 0.0
  %548 = vmatmul.mubr.f32.gmra.mrb[0].mxu0 %v427
  %v549 = vpop.f32.mrb[0].mxu0
  %v550 = vadd.f32 0.0, %v549
  %v551 = vpop.f32.mrb[0].mxu0
  %552 = vmatprep.mubr.f32.mxu0 0.0
  %553 = vmatmul.mubr.f32.gmra.mrb[0].mxu0 %v428
  %v554 = vpop.f32.mrb[0].mxu0
  %v555 = vadd.f32 0.0, %v554
  %v556 = vpop.f32.mrb[0].mxu0
  %557 = vmatprep.mubr.f32.mxu0 0.0
  %558 = vmatmul.mubr.f32.gmra.mrb[0].mxu0 %v429
  %v559 = vpop.f32.mrb[0].mxu0
  %v560 = vadd.f32 0.0, %v559
  %v561 = vpop.f32.mrb[0].mxu0
  %562 = vmatprep.mubr.f32.mxu0 0.0
  %563 = vmatmul.mubr.f32.gmra.mrb[0].mxu0 %v430
  %v564 = vpop.f32.mrb[0].mxu0
  %v565 = vadd.f32 0.0, %v564
  %v566 = vpop.f32.mrb[0].mxu0
  %567 = vmatprep.mubr.f32.mxu0 0.0
  %568 = vmatmul.mubr.f32.gmra.mrb[0].mxu0 %v431
  %v569 = vpop.f32.mrb[0].mxu0
  %v570 = vadd.f32 0.0, %v569
  %v571 = vpop.f32.mrb[0].mxu0
  %572 = vmatprep.mubr.f32.mxu0 0.0
  %573 = vmatmul.mubr.f32.gmra.mrb[0].mxu0 %v432
  %v574 = vpop.f32.mrb[0].mxu0
  %v575 = vadd.f32 0.0, %v574
  %v576 = vpop.f32.mrb[0].mxu0
  %577 = vmatprep.mubr.f32.mxu0 0.0
  %578 = vmatmul.mubr.f32.gmra.mrb[0].mxu0 %v433
  %v579 = vpop.f32.mrb[0].mxu0
  %v580 = vadd.f32 0.0, %v579
  %v581 = vpop.f32.mrb[0].mxu0
  %582 = vmatprep.mubr.f32.mxu0 0.0
  %583 = vmatmul.mubr.f32.gmra.mrb[0].mxu0 %v434
  %v584 = vpop.f32.mrb[0].mxu0
  %v585 = vadd.f32 0.0, %v584
  %v586 = vpop.f32.mrb[0].mxu0
  %587 = vmatprep.mubr.f32.mxu0 0.0
  %588 = vmatmul.mubr.f32.gmra.mrb[0].mxu0 %v435
  %v589 = vpop.f32.mrb[0].mxu0
  %v590 = vadd.f32 0.0, %v589
  %v591 = vpop.f32.mrb[0].mxu0
  %592 = vmatprep.mubr.f32.mxu0 0.0
  %593 = vmatmul.mubr.f32.gmra.mrb[0].mxu0 %v436
  %v594 = vpop.f32.mrb[0].mxu0
  %v595 = vadd.f32 0.0, %v594
  %v596 = vpop.f32.mrb[0].mxu0
  %597 = vdwg.mxu0
  %v598 = vld [vmem:[%s2] sm:$0xff]
  %v599 = vld [vmem:[%s2 + $0x8] sm:$0xff]
  %v600 = vld [vmem:[%s2 + $0x10] sm:$0xff]
  %v601 = vld [vmem:[%s2 + $0x18] sm:$0xff]
  %v602 = vld [vmem:[%s2 + $0x20] sm:$0xff]
  %v603 = vld [vmem:[%s2 + $0x28] sm:$0xff]
  %v604 = vld [vmem:[%s2 + $0x30] sm:$0xff]
  %v605 = vld [vmem:[%s2 + $0x38] sm:$0xff]
  %v606 = vld [vmem:[%s2 + $0x40] sm:$0xff]
  %v607 = vld [vmem:[%s2 + $0x48] sm:$0xff]
  %v608 = vld [vmem:[%s2 + $0x50] sm:$0xff]
  %v609 = vld [vmem:[%s2 + $0x58] sm:$0xff]
  %v610 = vld [vmem:[%s2 + $0x60] sm:$0xff]
  %v611 = vld [vmem:[%s2 + $0x68] sm:$0xff]
  %v612 = vld [vmem:[%s2 + $0x70] sm:$0xff]
  %v613 = vld [vmem:[%s2 + $0x78] sm:$0xff]
  %v614 = vld [vmem:[%s3] sm:$0xff]
  %v615 = vld [vmem:[%s3 + $0x8] sm:$0xff]
  %v616 = vld [vmem:[%s3 + $0x10] sm:$0xff]
  %v617 = vld [vmem:[%s3 + $0x18] sm:$0xff]
  %v618 = vld [vmem:[%s3 + $0x20] sm:$0xff]
  %v619 = vld [vmem:[%s3 + $0x28] sm:$0xff]
  %v620 = vld [vmem:[%s3 + $0x30] sm:$0xff]
  %v621 = vld [vmem:[%s3 + $0x38] sm:$0xff]
  %v622 = vld [vmem:[%s3 + $0x40] sm:$0xff]
  %v623 = vld [vmem:[%s3 + $0x48] sm:$0xff]
  %v624 = vld [vmem:[%s3 + $0x50] sm:$0xff]
  %v625 = vld [vmem:[%s3 + $0x58] sm:$0xff]
  %v626 = vld [vmem:[%s3 + $0x60] sm:$0xff]
  %v627 = vld [vmem:[%s3 + $0x68] sm:$0xff]
  %v628 = vld [vmem:[%s3 + $0x70] sm:$0xff]
  %v629 = vld [vmem:[%s3 + $0x78] sm:$0xff]
  %630 = vmatprep.subr.mxu0 0.0
  %631 = vmatpush1.msra.mxu0 %v614
  %632 = vmatprep.subr.mxu0 0.0
  %633 = vmatpush1.msra.mxu0 %v615
  %634 = vmatprep.subr.mxu0 0.0
  %635 = vmatpush1.msra.mxu0 %v616
  %636 = vmatprep.subr.mxu0 0.0
  %637 = vmatpush1.msra.mxu0 %v617
  %638 = vmatprep.subr.mxu0 0.0
  %639 = vmatpush1.msra.mxu0 %v618
  %640 = vmatprep.subr.mxu0 0.0
  %641 = vmatpush1.msra.mxu0 %v619
  %642 = vmatprep.subr.mxu0 0.0
  %643 = vmatpush1.msra.mxu0 %v620
  %644 = vmatprep.subr.mxu0 0.0
  %645 = vmatpush1.msra.mxu0 %v621
  %646 = vmatprep.subr.mxu0 0.0
  %647 = vmatpush1.msra.mxu0 %v622
  %648 = vmatprep.subr.mxu0 0.0
  %649 = vmatpush1.msra.mxu0 %v623
  %650 = vmatprep.subr.mxu0 0.0
  %651 = vmatpush1.msra.mxu0 %v624
  %652 = vmatprep.subr.mxu0 0.0
  %653 = vmatpush1.msra.mxu0 %v625
  %654 = vmatprep.subr.mxu0 0.0
  %655 = vmatpush1.msra.mxu0 %v626
  %656 = vmatprep.subr.mxu0 0.0
  %657 = vmatpush1.msra.mxu0 %v627
  %658 = vmatprep.subr.mxu0 0.0
  %659 = vmatpush1.msra.mxu0 %v628
  %660 = vmatprep.subr.mxu0 0.0
  %661 = vmatpush1.msra.mxu0 %v629
  %662 = vmatprep.subr.mxu0 0.0
  %663 = vmatpush1.msra.mxu0 0.0
  %664 = vmatprep.subr.mxu0 0.0
  %665 = vmatpush1.msra.mxu0 0.0
  %666 = vmatprep.subr.mxu0 0.0
  %667 = vmatpush1.msra.mxu0 0.0
  %668 = vmatprep.subr.mxu0 0.0
  %669 = vmatpush1.msra.mxu0 0.0
  %670 = vmatprep.subr.mxu0 0.0
  %671 = vmatpush1.msra.mxu0 0.0
  %672 = vmatprep.subr.mxu0 0.0
  %673 = vmatpush1.msra.mxu0 0.0
  %674 = vmatprep.subr.mxu0 0.0
  %675 = vmatpush1.msra.mxu0 0.0
  %676 = vmatprep.subr.mxu0 0.0
  %677 = vmatpush1.msra.mxu0 0.0
  %678 = vmatprep.subr.mxu0 0.0
  %679 = vmatpush1.msra.mxu0 0.0
  %680 = vmatprep.subr.mxu0 0.0
  %681 = vmatpush1.msra.mxu0 0.0
  %682 = vmatprep.subr.mxu0 0.0
  %683 = vmatpush1.msra.mxu0 0.0
  %684 = vmatprep.subr.mxu0 0.0
  %685 = vmatpush1.msra.mxu0 0.0
  %686 = vmatprep.subr.mxu0 0.0
  %687 = vmatpush1.msra.mxu0 0.0
  %688 = vmatprep.subr.mxu0 0.0
  %689 = vmatpush1.msra.mxu0 0.0
  %690 = vmatprep.subr.mxu0 0.0
  %691 = vmatpush1.msra.mxu0 0.0
  %692 = vmatprep.subr.mxu0 0.0
  %693 = vmatpush1.msra.mxu0 0.0
  %694 = vmatprep.mubr.f32.mxu0 0.0
  %695 = vmatmul.mubr.f32.gmra.mrb[0].mxu0 %v598
  %v696 = vpop.f32.mrb[0].mxu0
  %v697 = vadd.f32 0.0, %v696
  %v698 = vpop.f32.mrb[0].mxu0
  %699 = vmatprep.mubr.f32.mxu0 0.0
  %700 = vmatmul.mubr.f32.gmra.mrb[0].mxu0 %v599
  %v701 = vpop.f32.mrb[0].mxu0
  %v702 = vadd.f32 0.0, %v701
  %v703 = vpop.f32.mrb[0].mxu0
  %704 = vmatprep.mubr.f32.mxu0 0.0
  %705 = vmatmul.mubr.f32.gmra.mrb[0].mxu0 %v600
  %v706 = vpop.f32.mrb[0].mxu0
  %v707 = vadd.f32 0.0, %v706
  %v708 = vpop.f32.mrb[0].mxu0
  %709 = vmatprep.mubr.f32.mxu0 0.0
  %710 = vmatmul.mubr.f32.gmra.mrb[0].mxu0 %v601
  %v711 = vpop.f32.mrb[0].mxu0
  %v712 = vadd.f32 0.0, %v711
  %v713 = vpop.f32.mrb[0].mxu0
  %714 = vmatprep.mubr.f32.mxu0 0.0
  %715 = vmatmul.mubr.f32.gmra.mrb[0].mxu0 %v602
  %v716 = vpop.f32.mrb[0].mxu0
  %v717 = vadd.f32 0.0, %v716
  %v718 = vpop.f32.mrb[0].mxu0
  %719 = vmatprep.mubr.f32.mxu0 0.0
  %720 = vmatmul.mubr.f32.gmra.mrb[0].mxu0 %v603
  %v721 = vpop.f32.mrb[0].mxu0
  %v722 = vadd.f32 0.0, %v721
  %v723 = vpop.f32.mrb[0].mxu0
  %724 = vmatprep.mubr.f32.mxu0 0.0
  %725 = vmatmul.mubr.f32.gmra.mrb[0].mxu0 %v604
  %v726 = vpop.f32.mrb[0].mxu0
  %v727 = vadd.f32 0.0, %v726
  %v728 = vpop.f32.mrb[0].mxu0
  %729 = vmatprep.mubr.f32.mxu0 0.0
  %730 = vmatmul.mubr.f32.gmra.mrb[0].mxu0 %v605
  %v731 = vpop.f32.mrb[0].mxu0
  %v732 = vadd.f32 0.0, %v731
  %v733 = vpop.f32.mrb[0].mxu0
  %734 = vmatprep.mubr.f32.mxu0 0.0
  %735 = vmatmul.mubr.f32.gmra.mrb[0].mxu0 %v606
  %v736 = vpop.f32.mrb[0].mxu0
  %v737 = vadd.f32 0.0, %v736
  %v738 = vpop.f32.mrb[0].mxu0
  %739 = vmatprep.mubr.f32.mxu0 0.0
  %740 = vmatmul.mubr.f32.gmra.mrb[0].mxu0 %v607
  %v741 = vpop.f32.mrb[0].mxu0
  %v742 = vadd.f32 0.0, %v741
  %v743 = vpop.f32.mrb[0].mxu0
  %744 = vmatprep.mubr.f32.mxu0 0.0
  %745 = vmatmul.mubr.f32.gmra.mrb[0].mxu0 %v608
  %v746 = vpop.f32.mrb[0].mxu0
  %v747 = vadd.f32 0.0, %v746
  %v748 = vpop.f32.mrb[0].mxu0
  %749 = vmatprep.mubr.f32.mxu0 0.0
  %750 = vmatmul.mubr.f32.gmra.mrb[0].mxu0 %v609
  %v751 = vpop.f32.mrb[0].mxu0
  %v752 = vadd.f32 0.0, %v751
  %v753 = vpop.f32.mrb[0].mxu0
  %754 = vmatprep.mubr.f32.mxu0 0.0
  %755 = vmatmul.mubr.f32.gmra.mrb[0].mxu0 %v610
  %v756 = vpop.f32.mrb[0].mxu0
  %v757 = vadd.f32 0.0, %v756
  %v758 = vpop.f32.mrb[0].mxu0
  %759 = vmatprep.mubr.f32.mxu0 0.0
  %760 = vmatmul.mubr.f32.gmra.mrb[0].mxu0 %v611
  %v761 = vpop.f32.mrb[0].mxu0
  %v762 = vadd.f32 0.0, %v761
  %v763 = vpop.f32.mrb[0].mxu0
  %764 = vmatprep.mubr.f32.mxu0 0.0
  %765 = vmatmul.mubr.f32.gmra.mrb[0].mxu0 %v612
  %v766 = vpop.f32.mrb[0].mxu0
  %v767 = vadd.f32 0.0, %v766
  %v768 = vpop.f32.mrb[0].mxu0
  %769 = vmatprep.mubr.f32.mxu0 0.0
  %770 = vmatmul.mubr.f32.gmra.mrb[0].mxu0 %v613
  %v771 = vpop.f32.mrb[0].mxu0
  %v772 = vadd.f32 0.0, %v771
  %v773 = vpop.f32.mrb[0].mxu0
  %774 = vdwg.mxu0
  %v775 = vld [vmem:[%s4] sm:$0xff]
  %v776 = vld [vmem:[%s4 + $0x8] sm:$0xff]
  %v777 = vld [vmem:[%s4 + $0x10] sm:$0xff]
  %v778 = vld [vmem:[%s4 + $0x18] sm:$0xff]
  %v779 = vld [vmem:[%s4 + $0x20] sm:$0xff]
  %v780 = vld [vmem:[%s4 + $0x28] sm:$0xff]
  %v781 = vld [vmem:[%s4 + $0x30] sm:$0xff]
  %v782 = vld [vmem:[%s4 + $0x38] sm:$0xff]
  %v783 = vld [vmem:[%s4 + $0x40] sm:$0xff]
  %v784 = vld [vmem:[%s4 + $0x48] sm:$0xff]
  %v785 = vld [vmem:[%s4 + $0x50] sm:$0xff]
  %v786 = vld [vmem:[%s4 + $0x58] sm:$0xff]
  %v787 = vld [vmem:[%s4 + $0x60] sm:$0xff]
  %v788 = vld [vmem:[%s4 + $0x68] sm:$0xff]
  %v789 = vld [vmem:[%s4 + $0x70] sm:$0xff]
  %v790 = vld [vmem:[%s4 + $0x78] sm:$0xff]
  %v791 = vld [vmem:[%s8] sm:$0xff]
  %v792 = vld [vmem:[%s8 + $0x8] sm:$0xff]
  %v793 = vld [vmem:[%s8 + $0x10] sm:$0xff]
  %v794 = vld [vmem:[%s8 + $0x18] sm:$0xff]
  %v795 = vld [vmem:[%s8 + $0x20] sm:$0xff]
  %v796 = vld [vmem:[%s8 + $0x28] sm:$0xff]
  %v797 = vld [vmem:[%s8 + $0x30] sm:$0xff]
  %v798 = vld [vmem:[%s8 + $0x38] sm:$0xff]
  %v799 = vld [vmem:[%s8 + $0x40] sm:$0xff]
  %v800 = vld [vmem:[%s8 + $0x48] sm:$0xff]
  %v801 = vld [vmem:[%s8 + $0x50] sm:$0xff]
  %v802 = vld [vmem:[%s8 + $0x58] sm:$0xff]
  %v803 = vld [vmem:[%s8 + $0x60] sm:$0xff]
  %v804 = vld [vmem:[%s8 + $0x68] sm:$0xff]
  %v805 = vld [vmem:[%s8 + $0x70] sm:$0xff]
  %v806 = vld [vmem:[%s8 + $0x78] sm:$0xff]
  %v807 = vld [vmem:[%s9] sm:$0xff]
  %v808 = vld [vmem:[%s9 + $0x8] sm:$0xff]
  %v809 = vld [vmem:[%s9 + $0x10] sm:$0xff]
  %v810 = vld [vmem:[%s9 + $0x18] sm:$0xff]
  %v811 = vld [vmem:[%s9 + $0x20] sm:$0xff]
  %v812 = vld [vmem:[%s9 + $0x28] sm:$0xff]
  %v813 = vld [vmem:[%s9 + $0x30] sm:$0xff]
  %v814 = vld [vmem:[%s9 + $0x38] sm:$0xff]
  %v815 = vld [vmem:[%s9 + $0x40] sm:$0xff]
  %v816 = vld [vmem:[%s9 + $0x48] sm:$0xff]
  %v817 = vld [vmem:[%s9 + $0x50] sm:$0xff]
  %v818 = vld [vmem:[%s9 + $0x58] sm:$0xff]
  %v819 = vld [vmem:[%s9 + $0x60] sm:$0xff]
  %v820 = vld [vmem:[%s9 + $0x68] sm:$0xff]
  %v821 = vld [vmem:[%s9 + $0x70] sm:$0xff]
  %v822 = vld [vmem:[%s9 + $0x78] sm:$0xff]
  %823 = vmatprep.subr.mxu0 0.0
  %824 = vmatpush1.msra.mxu0 %v807
  %825 = vmatprep.subr.mxu0 0.0
  %826 = vmatpush1.msra.mxu0 %v808
  %827 = vmatprep.subr.mxu0 0.0
  %828 = vmatpush1.msra.mxu0 %v809
  %829 = vmatprep.subr.mxu0 0.0
  %830 = vmatpush1.msra.mxu0 %v810
  %831 = vmatprep.subr.mxu0 0.0
  %832 = vmatpush1.msra.mxu0 %v811
  %833 = vmatprep.subr.mxu0 0.0
  %834 = vmatpush1.msra.mxu0 %v812
  %835 = vmatprep.subr.mxu0 0.0
  %836 = vmatpush1.msra.mxu0 %v813
  %837 = vmatprep.subr.mxu0 0.0
  %838 = vmatpush1.msra.mxu0 %v814
  %839 = vmatprep.subr.mxu0 0.0
  %840 = vmatpush1.msra.mxu0 %v815
  %841 = vmatprep.subr.mxu0 0.0
  %842 = vmatpush1.msra.mxu0 %v816
  %843 = vmatprep.subr.mxu0 0.0
  %844 = vmatpush1.msra.mxu0 %v817
  %845 = vmatprep.subr.mxu0 0.0
  %846 = vmatpush1.msra.mxu0 %v818
  %847 = vmatprep.subr.mxu0 0.0
  %848 = vmatpush1.msra.mxu0 %v819
  %849 = vmatprep.subr.mxu0 0.0
  %850 = vmatpush1.msra.mxu0 %v820
  %851 = vmatprep.subr.mxu0 0.0
  %852 = vmatpush1.msra.mxu0 %v821
  %853 = vmatprep.subr.mxu0 0.0
  %854 = vmatpush1.msra.mxu0 %v822
  %855 = vmatprep.subr.mxu0 0.0
  %856 = vmatpush1.msra.mxu0 0.0
  %857 = vmatprep.subr.mxu0 0.0
  %858 = vmatpush1.msra.mxu0 0.0
  %859 = vmatprep.subr.mxu0 0.0
  %860 = vmatpush1.msra.mxu0 0.0
  %861 = vmatprep.subr.mxu0 0.0
  %862 = vmatpush1.msra.mxu0 0.0
  %863 = vmatprep.subr.mxu0 0.0
  %864 = vmatpush1.msra.mxu0 0.0
  %865 = vmatprep.subr.mxu0 0.0
  %866 = vmatpush1.msra.mxu0 0.0
  %867 = vmatprep.subr.mxu0 0.0
  %868 = vmatpush1.msra.mxu0 0.0
  %869 = vmatprep.subr.mxu0 0.0
  %870 = vmatpush1.msra.mxu0 0.0
  %871 = vmatprep.subr.mxu0 0.0
  %872 = vmatpush1.msra.mxu0 0.0
  %873 = vmatprep.subr.mxu0 0.0
  %874 = vmatpush1.msra.mxu0 0.0
  %875 = vmatprep.subr.mxu0 0.0
  %876 = vmatpush1.msra.mxu0 0.0
  %877 = vmatprep.subr.mxu0 0.0
  %878 = vmatpush1.msra.mxu0 0.0
  %879 = vmatprep.subr.mxu0 0.0
  %880 = vmatpush1.msra.mxu0 0.0
  %881 = vmatprep.subr.mxu0 0.0
  %882 = vmatpush1.msra.mxu0 0.0
  %883 = vmatprep.subr.mxu0 0.0
  %884 = vmatpush1.msra.mxu0 0.0
  %885 = vmatprep.subr.mxu0 0.0
  %886 = vmatpush1.msra.mxu0 0.0
  %887 = vmatprep.mubr.f32.mxu0 0.0
  %888 = vmatmul.mubr.f32.gmra.mrb[0].mxu0 %v697
  %v889 = vpop.f32.mrb[0].mxu0
  %v890 = vadd.f32 0.0, %v889
  %v891 = vpop.f32.mrb[0].mxu0
  %892 = vmatprep.mubr.f32.mxu0 0.0
  %893 = vmatmul.mubr.f32.gmra.mrb[0].mxu0 %v702
  %v894 = vpop.f32.mrb[0].mxu0
  %v895 = vadd.f32 0.0, %v894
  %v896 = vpop.f32.mrb[0].mxu0
  %897 = vmatprep.mubr.f32.mxu0 0.0
  %898 = vmatmul.mubr.f32.gmra.mrb[0].mxu0 %v707
  %v899 = vpop.f32.mrb[0].mxu0
  %v900 = vadd.f32 0.0, %v899
  %v901 = vpop.f32.mrb[0].mxu0
  %902 = vmatprep.mubr.f32.mxu0 0.0
  %903 = vmatmul.mubr.f32.gmra.mrb[0].mxu0 %v712
  %v904 = vpop.f32.mrb[0].mxu0
  %v905 = vadd.f32 0.0, %v904
  %v906 = vpop.f32.mrb[0].mxu0
  %907 = vmatprep.mubr.f32.mxu0 0.0
  %908 = vmatmul.mubr.f32.gmra.mrb[0].mxu0 %v717
  %v909 = vpop.f32.mrb[0].mxu0
  %v910 = vadd.f32 0.0, %v909
  %v911 = vpop.f32.mrb[0].mxu0
  %912 = vmatprep.mubr.f32.mxu0 0.0
  %913 = vmatmul.mubr.f32.gmra.mrb[0].mxu0 %v722
  %v914 = vpop.f32.mrb[0].mxu0
  %v915 = vadd.f32 0.0, %v914
  %v916 = vpop.f32.mrb[0].mxu0
  %917 = vmatprep.mubr.f32.mxu0 0.0
  %918 = vmatmul.mubr.f32.gmra.mrb[0].mxu0 %v727
  %v919 = vpop.f32.mrb[0].mxu0
  %v920 = vadd.f32 0.0, %v919
  %v921 = vpop.f32.mrb[0].mxu0
  %922 = vmatprep.mubr.f32.mxu0 0.0
  %923 = vmatmul.mubr.f32.gmra.mrb[0].mxu0 %v732
  %v924 = vpop.f32.mrb[0].mxu0
  %v925 = vadd.f32 0.0, %v924
  %v926 = vpop.f32.mrb[0].mxu0
  %927 = vmatprep.mubr.f32.mxu0 0.0
  %928 = vmatmul.mubr.f32.gmra.mrb[0].mxu0 %v737
  %v929 = vpop.f32.mrb[0].mxu0
  %v930 = vadd.f32 0.0, %v929
  %v931 = vpop.f32.mrb[0].mxu0
  %932 = vmatprep.mubr.f32.mxu0 0.0
  %933 = vmatmul.mubr.f32.gmra.mrb[0].mxu0 %v742
  %v934 = vpop.f32.mrb[0].mxu0
  %v935 = vadd.f32 0.0, %v934
  %v936 = vpop.f32.mrb[0].mxu0
  %937 = vmatprep.mubr.f32.mxu0 0.0
  %938 = vmatmul.mubr.f32.gmra.mrb[0].mxu0 %v747
  %v939 = vpop.f32.mrb[0].mxu0
  %v940 = vadd.f32 0.0, %v939
  %v941 = vpop.f32.mrb[0].mxu0
  %942 = vmatprep.mubr.f32.mxu0 0.0
  %943 = vmatmul.mubr.f32.gmra.mrb[0].mxu0 %v752
  %v944 = vpop.f32.mrb[0].mxu0
  %v945 = vadd.f32 0.0, %v944
  %v946 = vpop.f32.mrb[0].mxu0
  %947 = vmatprep.mubr.f32.mxu0 0.0
  %948 = vmatmul.mubr.f32.gmra.mrb[0].mxu0 %v757
  %v949 = vpop.f32.mrb[0].mxu0
  %v950 = vadd.f32 0.0, %v949
  %v951 = vpop.f32.mrb[0].mxu0
  %952 = vmatprep.mubr.f32.mxu0 0.0
  %953 = vmatmul.mubr.f32.gmra.mrb[0].mxu0 %v762
  %v954 = vpop.f32.mrb[0].mxu0
  %v955 = vadd.f32 0.0, %v954
  %v956 = vpop.f32.mrb[0].mxu0
  %957 = vmatprep.mubr.f32.mxu0 0.0
  %958 = vmatmul.mubr.f32.gmra.mrb[0].mxu0 %v767
  %v959 = vpop.f32.mrb[0].mxu0
  %v960 = vadd.f32 0.0, %v959
  %v961 = vpop.f32.mrb[0].mxu0
  %962 = vmatprep.mubr.f32.mxu0 0.0
  %963 = vmatmul.mubr.f32.gmra.mrb[0].mxu0 %v772
  %v964 = vpop.f32.mrb[0].mxu0
  %v965 = vadd.f32 0.0, %v964
  %v966 = vpop.f32.mrb[0].mxu0
  %967 = vdwg.mxu0
  %968 = vmatprep.subr.mxu0 0.0
  %969 = vmatpush1.msra.mxu0 %v791
  %970 = vmatprep.subr.mxu0 0.0
  %971 = vmatpush1.msra.mxu0 %v792
  %972 = vmatprep.subr.mxu0 0.0
  %973 = vmatpush1.msra.mxu0 %v793
  %974 = vmatprep.subr.mxu0 0.0
  %975 = vmatpush1.msra.mxu0 %v794
  %976 = vmatprep.subr.mxu0 0.0
  %977 = vmatpush1.msra.mxu0 %v795
  %978 = vmatprep.subr.mxu0 0.0
  %979 = vmatpush1.msra.mxu0 %v796
  %980 = vmatprep.subr.mxu0 0.0
  %981 = vmatpush1.msra.mxu0 %v797
  %982 = vmatprep.subr.mxu0 0.0
  %983 = vmatpush1.msra.mxu0 %v798
  %984 = vmatprep.subr.mxu0 0.0
  %985 = vmatpush1.msra.mxu0 %v799
  %986 = vmatprep.subr.mxu0 0.0
  %987 = vmatpush1.msra.mxu0 %v800
  %988 = vmatprep.subr.mxu0 0.0
  %989 = vmatpush1.msra.mxu0 %v801
  %990 = vmatprep.subr.mxu0 0.0
  %991 = vmatpush1.msra.mxu0 %v802
  %992 = vmatprep.subr.mxu0 0.0
  %993 = vmatpush1.msra.mxu0 %v803
  %994 = vmatprep.subr.mxu0 0.0
  %995 = vmatpush1.msra.mxu0 %v804
  %996 = vmatprep.subr.mxu0 0.0
  %997 = vmatpush1.msra.mxu0 %v805
  %998 = vmatprep.subr.mxu0 0.0
  %999 = vmatpush1.msra.mxu0 %v806
  %1000 = vmatprep.subr.mxu0 0.0
  %1001 = vmatpush1.msra.mxu0 0.0
  %1002 = vmatprep.subr.mxu0 0.0
  %1003 = vmatpush1.msra.mxu0 0.0
  %1004 = vmatprep.subr.mxu0 0.0
  %1005 = vmatpush1.msra.mxu0 0.0
  %1006 = vmatprep.subr.mxu0 0.0
  %1007 = vmatpush1.msra.mxu0 0.0
  %1008 = vmatprep.subr.mxu0 0.0
  %1009 = vmatpush1.msra.mxu0 0.0
  %1010 = vmatprep.subr.mxu0 0.0
  %1011 = vmatpush1.msra.mxu0 0.0
  %1012 = vmatprep.subr.mxu0 0.0
  %1013 = vmatpush1.msra.mxu0 0.0
  %1014 = vmatprep.subr.mxu0 0.0
  %1015 = vmatpush1.msra.mxu0 0.0
  %1016 = vmatprep.subr.mxu0 0.0
  %1017 = vmatpush1.msra.mxu0 0.0
  %1018 = vmatprep.subr.mxu0 0.0
  %1019 = vmatpush1.msra.mxu0 0.0
  %1020 = vmatprep.subr.mxu0 0.0
  %1021 = vmatpush1.msra.mxu0 0.0
  %1022 = vmatprep.subr.mxu0 0.0
  %1023 = vmatpush1.msra.mxu0 0.0
  %1024 = vmatprep.subr.mxu0 0.0
  %1025 = vmatpush1.msra.mxu0 0.0
  %1026 = vmatprep.subr.mxu0 0.0
  %1027 = vmatpush1.msra.mxu0 0.0
  %1028 = vmatprep.subr.mxu0 0.0
  %1029 = vmatpush1.msra.mxu0 0.0
  %1030 = vmatprep.subr.mxu0 0.0
  %1031 = vmatpush1.msra.mxu0 0.0
  %1032 = vmatprep.mubr.f32.mxu0 0.0
  %1033 = vmatmul.mubr.f32.gmra.mrb[0].mxu0 %v775
  %v1034 = vpop.f32.mrb[0].mxu0
  %v1035 = vadd.f32 %v890, %v1034
  %v1036 = vpop.f32.mrb[0].mxu0
  %1037 = vmatprep.mubr.f32.mxu0 0.0
  %1038 = vmatmul.mubr.f32.gmra.mrb[0].mxu0 %v776
  %v1039 = vpop.f32.mrb[0].mxu0
  %v1040 = vadd.f32 %v895, %v1039
  %v1041 = vpop.f32.mrb[0].mxu0
  %1042 = vmatprep.mubr.f32.mxu0 0.0
  %1043 = vmatmul.mubr.f32.gmra.mrb[0].mxu0 %v777
  %v1044 = vpop.f32.mrb[0].mxu0
  %v1045 = vadd.f32 %v900, %v1044
  %v1046 = vpop.f32.mrb[0].mxu0
  %1047 = vmatprep.mubr.f32.mxu0 0.0
  %1048 = vmatmul.mubr.f32.gmra.mrb[0].mxu0 %v778
  %v1049 = vpop.f32.mrb[0].mxu0
  %v1050 = vadd.f32 %v905, %v1049
  %v1051 = vpop.f32.mrb[0].mxu0
  %1052 = vmatprep.mubr.f32.mxu0 0.0
  %1053 = vmatmul.mubr.f32.gmra.mrb[0].mxu0 %v779
  %v1054 = vpop.f32.mrb[0].mxu0
  %v1055 = vadd.f32 %v910, %v1054
  %v1056 = vpop.f32.mrb[0].mxu0
  %1057 = vmatprep.mubr.f32.mxu0 0.0
  %1058 = vmatmul.mubr.f32.gmra.mrb[0].mxu0 %v780
  %v1059 = vpop.f32.mrb[0].mxu0
  %v1060 = vadd.f32 %v915, %v1059
  %v1061 = vpop.f32.mrb[0].mxu0
  %1062 = vmatprep.mubr.f32.mxu0 0.0
  %1063 = vmatmul.mubr.f32.gmra.mrb[0].mxu0 %v781
  %v1064 = vpop.f32.mrb[0].mxu0
  %v1065 = vadd.f32 %v920, %v1064
  %v1066 = vpop.f32.mrb[0].mxu0
  %1067 = vmatprep.mubr.f32.mxu0 0.0
  %1068 = vmatmul.mubr.f32.gmra.mrb[0].mxu0 %v782
  %v1069 = vpop.f32.mrb[0].mxu0
  %v1070 = vadd.f32 %v925, %v1069
  %v1071 = vpop.f32.mrb[0].mxu0
  %1072 = vmatprep.mubr.f32.mxu0 0.0
  %1073 = vmatmul.mubr.f32.gmra.mrb[0].mxu0 %v783
  %v1074 = vpop.f32.mrb[0].mxu0
  %v1075 = vadd.f32 %v930, %v1074
  %v1076 = vpop.f32.mrb[0].mxu0
  %1077 = vmatprep.mubr.f32.mxu0 0.0
  %1078 = vmatmul.mubr.f32.gmra.mrb[0].mxu0 %v784
  %v1079 = vpop.f32.mrb[0].mxu0
  %v1080 = vadd.f32 %v935, %v1079
  %v1081 = vpop.f32.mrb[0].mxu0
  %1082 = vmatprep.mubr.f32.mxu0 0.0
  %1083 = vmatmul.mubr.f32.gmra.mrb[0].mxu0 %v785
  %v1084 = vpop.f32.mrb[0].mxu0
  %v1085 = vadd.f32 %v940, %v1084
  %v1086 = vpop.f32.mrb[0].mxu0
  %1087 = vmatprep.mubr.f32.mxu0 0.0
  %1088 = vmatmul.mubr.f32.gmra.mrb[0].mxu0 %v786
  %v1089 = vpop.f32.mrb[0].mxu0
  %v1090 = vadd.f32 %v945, %v1089
  %v1091 = vpop.f32.mrb[0].mxu0
  %1092 = vmatprep.mubr.f32.mxu0 0.0
  %1093 = vmatmul.mubr.f32.gmra.mrb[0].mxu0 %v787
  %v1094 = vpop.f32.mrb[0].mxu0
  %v1095 = vadd.f32 %v950, %v1094
  %v1096 = vpop.f32.mrb[0].mxu0
  %1097 = vmatprep.mubr.f32.mxu0 0.0
  %1098 = vmatmul.mubr.f32.gmra.mrb[0].mxu0 %v788
  %v1099 = vpop.f32.mrb[0].mxu0
  %v1100 = vadd.f32 %v955, %v1099
  %v1101 = vpop.f32.mrb[0].mxu0
  %1102 = vmatprep.mubr.f32.mxu0 0.0
  %1103 = vmatmul.mubr.f32.gmra.mrb[0].mxu0 %v789
  %v1104 = vpop.f32.mrb[0].mxu0
  %v1105 = vadd.f32 %v960, %v1104
  %v1106 = vpop.f32.mrb[0].mxu0
  %1107 = vmatprep.mubr.f32.mxu0 0.0
  %1108 = vmatmul.mubr.f32.gmra.mrb[0].mxu0 %v790
  %v1109 = vpop.f32.mrb[0].mxu0
  %v1110 = vadd.f32 %v965, %v1109
  %v1111 = vpop.f32.mrb[0].mxu0
  %1112 = vdwg.mxu0
  %v1113 = vld [vmem:[%s10] sm:$0x1]
  %v1115 = vlaneseq
  %v1116 = vshrl.u32 %v1115, 7
  %v1117 = vsub.s32 0, %v1116
  %v1118 = vrot.slane %v1113, %v1117
  %v1120 = vadd.f32 %v1035, %v1118
  %v1121 = vadd.f32 %v1040, %v1118
  %v1122 = vadd.f32 %v1045, %v1118
  %v1123 = vadd.f32 %v1050, %v1118
  %v1124 = vadd.f32 %v1055, %v1118
  %v1125 = vadd.f32 %v1060, %v1118
  %v1126 = vadd.f32 %v1065, %v1118
  %v1127 = vadd.f32 %v1070, %v1118
  %v1128 = vadd.f32 %v1075, %v1118
  %v1129 = vadd.f32 %v1080, %v1118
  %v1130 = vadd.f32 %v1085, %v1118
  %v1131 = vadd.f32 %v1090, %v1118
  %v1132 = vadd.f32 %v1095, %v1118
  %v1133 = vadd.f32 %v1100, %v1118
  %v1134 = vadd.f32 %v1105, %v1118
  %v1135 = vadd.f32 %v1110, %v1118
  %v1136 = vld [vmem:[%s11] sm:$0xff]
  %v1137 = vld [vmem:[%s11 + $0x8] sm:$0xff]
  %v1138 = vld [vmem:[%s11 + $0x10] sm:$0xff]
  %v1139 = vld [vmem:[%s11 + $0x18] sm:$0xff]
  %v1140 = vld [vmem:[%s11 + $0x20] sm:$0xff]
  %v1141 = vld [vmem:[%s11 + $0x28] sm:$0xff]
  %v1142 = vld [vmem:[%s11 + $0x30] sm:$0xff]
  %v1143 = vld [vmem:[%s11 + $0x38] sm:$0xff]
  %v1144 = vld [vmem:[%s11 + $0x40] sm:$0xff]
  %v1145 = vld [vmem:[%s11 + $0x48] sm:$0xff]
  %v1146 = vld [vmem:[%s11 + $0x50] sm:$0xff]
  %v1147 = vld [vmem:[%s11 + $0x58] sm:$0xff]
  %v1148 = vld [vmem:[%s11 + $0x60] sm:$0xff]
  %v1149 = vld [vmem:[%s11 + $0x68] sm:$0xff]
  %v1150 = vld [vmem:[%s11 + $0x70] sm:$0xff]
  %v1151 = vld [vmem:[%s11 + $0x78] sm:$0xff]
  %1152 = vmatprep.subr.mxu0 0.0
  %1153 = vmatpush1.msra.mxu0 %v1136
  %1154 = vmatprep.subr.mxu0 0.0
  %1155 = vmatpush1.msra.mxu0 %v1137
  %1156 = vmatprep.subr.mxu0 0.0
  %1157 = vmatpush1.msra.mxu0 %v1138
  %1158 = vmatprep.subr.mxu0 0.0
  %1159 = vmatpush1.msra.mxu0 %v1139
  %1160 = vmatprep.subr.mxu0 0.0
  %1161 = vmatpush1.msra.mxu0 %v1140
  %1162 = vmatprep.subr.mxu0 0.0
  %1163 = vmatpush1.msra.mxu0 %v1141
  %1164 = vmatprep.subr.mxu0 0.0
  %1165 = vmatpush1.msra.mxu0 %v1142
  %1166 = vmatprep.subr.mxu0 0.0
  %1167 = vmatpush1.msra.mxu0 %v1143
  %1168 = vmatprep.subr.mxu0 0.0
  %1169 = vmatpush1.msra.mxu0 %v1144
  %1170 = vmatprep.subr.mxu0 0.0
  %1171 = vmatpush1.msra.mxu0 %v1145
  %1172 = vmatprep.subr.mxu0 0.0
  %1173 = vmatpush1.msra.mxu0 %v1146
  %1174 = vmatprep.subr.mxu0 0.0
  %1175 = vmatpush1.msra.mxu0 %v1147
  %1176 = vmatprep.subr.mxu0 0.0
  %1177 = vmatpush1.msra.mxu0 %v1148
  %1178 = vmatprep.subr.mxu0 0.0
  %1179 = vmatpush1.msra.mxu0 %v1149
  %1180 = vmatprep.subr.mxu0 0.0
  %1181 = vmatpush1.msra.mxu0 %v1150
  %1182 = vmatprep.subr.mxu0 0.0
  %1183 = vmatpush1.msra.mxu0 %v1151
  %1184 = vmatprep.subr.mxu0 0.0
  %1185 = vmatpush1.msra.mxu0 0.0
  %1186 = vmatprep.subr.mxu0 0.0
  %1187 = vmatpush1.msra.mxu0 0.0
  %1188 = vmatprep.subr.mxu0 0.0
  %1189 = vmatpush1.msra.mxu0 0.0
  %1190 = vmatprep.subr.mxu0 0.0
  %1191 = vmatpush1.msra.mxu0 0.0
  %1192 = vmatprep.subr.mxu0 0.0
  %1193 = vmatpush1.msra.mxu0 0.0
  %1194 = vmatprep.subr.mxu0 0.0
  %1195 = vmatpush1.msra.mxu0 0.0
  %1196 = vmatprep.subr.mxu0 0.0
  %1197 = vmatpush1.msra.mxu0 0.0
  %1198 = vmatprep.subr.mxu0 0.0
  %1199 = vmatpush1.msra.mxu0 0.0
  %1200 = vmatprep.subr.mxu0 0.0
  %1201 = vmatpush1.msra.mxu0 0.0
  %1202 = vmatprep.subr.mxu0 0.0
  %1203 = vmatpush1.msra.mxu0 0.0
  %1204 = vmatprep.subr.mxu0 0.0
  %1205 = vmatpush1.msra.mxu0 0.0
  %1206 = vmatprep.subr.mxu0 0.0
  %1207 = vmatpush1.msra.mxu0 0.0
  %1208 = vmatprep.subr.mxu0 0.0
  %1209 = vmatpush1.msra.mxu0 0.0
  %1210 = vmatprep.subr.mxu0 0.0
  %1211 = vmatpush1.msra.mxu0 0.0
  %1212 = vmatprep.subr.mxu0 0.0
  %1213 = vmatpush1.msra.mxu0 0.0
  %1214 = vmatprep.subr.mxu0 0.0
  %1215 = vmatpush1.msra.mxu0 0.0
  %1216 = vmatprep.mubr.f32.mxu0 0.0
  %1217 = vmatmul.mubr.f32.gmra.mrb[0].mxu0 %v1120
  %v1218 = vpop.f32.mrb[0].mxu0
  %v1219 = vadd.f32 0.0, %v1218
  %v1220 = vpop.f32.mrb[0].mxu0
  %1221 = vmatprep.mubr.f32.mxu0 0.0
  %1222 = vmatmul.mubr.f32.gmra.mrb[0].mxu0 %v1121
  %v1223 = vpop.f32.mrb[0].mxu0
  %v1224 = vadd.f32 0.0, %v1223
  %v1225 = vpop.f32.mrb[0].mxu0
  %1226 = vmatprep.mubr.f32.mxu0 0.0
  %1227 = vmatmul.mubr.f32.gmra.mrb[0].mxu0 %v1122
  %v1228 = vpop.f32.mrb[0].mxu0
  %v1229 = vadd.f32 0.0, %v1228
  %v1230 = vpop.f32.mrb[0].mxu0
  %1231 = vmatprep.mubr.f32.mxu0 0.0
  %1232 = vmatmul.mubr.f32.gmra.mrb[0].mxu0 %v1123
  %v1233 = vpop.f32.mrb[0].mxu0
  %v1234 = vadd.f32 0.0, %v1233
  %v1235 = vpop.f32.mrb[0].mxu0
  %1236 = vmatprep.mubr.f32.mxu0 0.0
  %1237 = vmatmul.mubr.f32.gmra.mrb[0].mxu0 %v1124
  %v1238 = vpop.f32.mrb[0].mxu0
  %v1239 = vadd.f32 0.0, %v1238
  %v1240 = vpop.f32.mrb[0].mxu0
  %1241 = vmatprep.mubr.f32.mxu0 0.0
  %1242 = vmatmul.mubr.f32.gmra.mrb[0].mxu0 %v1125
  %v1243 = vpop.f32.mrb[0].mxu0
  %v1244 = vadd.f32 0.0, %v1243
  %v1245 = vpop.f32.mrb[0].mxu0
  %1246 = vmatprep.mubr.f32.mxu0 0.0
  %1247 = vmatmul.mubr.f32.gmra.mrb[0].mxu0 %v1126
  %v1248 = vpop.f32.mrb[0].mxu0
  %v1249 = vadd.f32 0.0, %v1248
  %v1250 = vpop.f32.mrb[0].mxu0
  %1251 = vmatprep.mubr.f32.mxu0 0.0
  %1252 = vmatmul.mubr.f32.gmra.mrb[0].mxu0 %v1127
  %v1253 = vpop.f32.mrb[0].mxu0
  %v1254 = vadd.f32 0.0, %v1253
  %v1255 = vpop.f32.mrb[0].mxu0
  %1256 = vmatprep.mubr.f32.mxu0 0.0
  %1257 = vmatmul.mubr.f32.gmra.mrb[0].mxu0 %v1128
  %v1258 = vpop.f32.mrb[0].mxu0
  %v1259 = vadd.f32 0.0, %v1258
  %v1260 = vpop.f32.mrb[0].mxu0
  %1261 = vmatprep.mubr.f32.mxu0 0.0
  %1262 = vmatmul.mubr.f32.gmra.mrb[0].mxu0 %v1129
  %v1263 = vpop.f32.mrb[0].mxu0
  %v1264 = vadd.f32 0.0, %v1263
  %v1265 = vpop.f32.mrb[0].mxu0
  %1266 = vmatprep.mubr.f32.mxu0 0.0
  %1267 = vmatmul.mubr.f32.gmra.mrb[0].mxu0 %v1130
  %v1268 = vpop.f32.mrb[0].mxu0
  %v1269 = vadd.f32 0.0, %v1268
  %v1270 = vpop.f32.mrb[0].mxu0
  %1271 = vmatprep.mubr.f32.mxu0 0.0
  %1272 = vmatmul.mubr.f32.gmra.mrb[0].mxu0 %v1131
  %v1273 = vpop.f32.mrb[0].mxu0
  %v1274 = vadd.f32 0.0, %v1273
  %v1275 = vpop.f32.mrb[0].mxu0
  %1276 = vmatprep.mubr.f32.mxu0 0.0
  %1277 = vmatmul.mubr.f32.gmra.mrb[0].mxu0 %v1132
  %v1278 = vpop.f32.mrb[0].mxu0
  %v1279 = vadd.f32 0.0, %v1278
  %v1280 = vpop.f32.mrb[0].mxu0
  %1281 = vmatprep.mubr.f32.mxu0 0.0
  %1282 = vmatmul.mubr.f32.gmra.mrb[0].mxu0 %v1133
  %v1283 = vpop.f32.mrb[0].mxu0
  %v1284 = vadd.f32 0.0, %v1283
  %v1285 = vpop.f32.mrb[0].mxu0
  %1286 = vmatprep.mubr.f32.mxu0 0.0
  %1287 = vmatmul.mubr.f32.gmra.mrb[0].mxu0 %v1134
  %v1288 = vpop.f32.mrb[0].mxu0
  %v1289 = vadd.f32 0.0, %v1288
  %v1290 = vpop.f32.mrb[0].mxu0
  %1291 = vmatprep.mubr.f32.mxu0 0.0
  %1292 = vmatmul.mubr.f32.gmra.mrb[0].mxu0 %v1135
  %v1293 = vpop.f32.mrb[0].mxu0
  %v1294 = vadd.f32 0.0, %v1293
  %v1295 = vpop.f32.mrb[0].mxu0
  %1296 = vdwg.mxu0
  %v1297 = vmul.f32 %v1219, %v1120
  %v1298 = vmul.f32 %v1224, %v1121
  %v1299 = vmul.f32 %v1229, %v1122
  %v1300 = vmul.f32 %v1234, %v1123
  %v1301 = vmul.f32 %v1239, %v1124
  %v1302 = vmul.f32 %v1244, %v1125
  %v1303 = vmul.f32 %v1249, %v1126
  %v1304 = vmul.f32 %v1254, %v1127
  %v1305 = vmul.f32 %v1259, %v1128
  %v1306 = vmul.f32 %v1264, %v1129
  %v1307 = vmul.f32 %v1269, %v1130
  %v1308 = vmul.f32 %v1274, %v1131
  %v1309 = vmul.f32 %v1279, %v1132
  %v1310 = vmul.f32 %v1284, %v1133
  %v1311 = vmul.f32 %v1289, %v1134
  %v1312 = vmul.f32 %v1294, %v1135
  %1313 = vadd.xlane.f32.xlu0 %v1297
  %v1314 = vpop.xlane.xlu0 %1313
  %1315 = vadd.xlane.f32.xlu0 %v1298
  %v1316 = vpop.xlane.xlu0 %1315
  %1317 = vadd.xlane.f32.xlu0 %v1299
  %v1318 = vpop.xlane.xlu0 %1317
  %1319 = vadd.xlane.f32.xlu0 %v1300
  %v1320 = vpop.xlane.xlu0 %1319
  %1321 = vadd.xlane.f32.xlu0 %v1301
  %v1322 = vpop.xlane.xlu0 %1321
  %1323 = vadd.xlane.f32.xlu0 %v1302
  %v1324 = vpop.xlane.xlu0 %1323
  %1325 = vadd.xlane.f32.xlu0 %v1303
  %v1326 = vpop.xlane.xlu0 %1325
  %1327 = vadd.xlane.f32.xlu0 %v1304
  %v1328 = vpop.xlane.xlu0 %1327
  %1329 = vadd.xlane.f32.xlu0 %v1305
  %v1330 = vpop.xlane.xlu0 %1329
  %1331 = vadd.xlane.f32.xlu0 %v1306
  %v1332 = vpop.xlane.xlu0 %1331
  %1333 = vadd.xlane.f32.xlu0 %v1307
  %v1334 = vpop.xlane.xlu0 %1333
  %1335 = vadd.xlane.f32.xlu0 %v1308
  %v1336 = vpop.xlane.xlu0 %1335
  %1337 = vadd.xlane.f32.xlu0 %v1309
  %v1338 = vpop.xlane.xlu0 %1337
  %1339 = vadd.xlane.f32.xlu0 %v1310
  %v1340 = vpop.xlane.xlu0 %1339
  %1341 = vadd.xlane.f32.xlu0 %v1311
  %v1342 = vpop.xlane.xlu0 %1341
  %1343 = vadd.xlane.f32.xlu0 %v1312
  %v1344 = vpop.xlane.xlu0 %1343
  %v1345 = vmul.f32 %v1314, 0.17677669
  %v1346 = vmul.f32 %v1316, 0.17677669
  %v1347 = vmul.f32 %v1318, 0.17677669
  %v1348 = vmul.f32 %v1320, 0.17677669
  %v1349 = vmul.f32 %v1322, 0.17677669
  %v1350 = vmul.f32 %v1324, 0.17677669
  %v1351 = vmul.f32 %v1326, 0.17677669
  %v1352 = vmul.f32 %v1328, 0.17677669
  %v1353 = vmul.f32 %v1330, 0.17677669
  %v1354 = vmul.f32 %v1332, 0.17677669
  %v1355 = vmul.f32 %v1334, 0.17677669
  %v1356 = vmul.f32 %v1336, 0.17677669
  %v1357 = vmul.f32 %v1338, 0.17677669
  %v1358 = vmul.f32 %v1340, 0.17677669
  %v1359 = vmul.f32 %v1342, 0.17677669
  %v1360 = vmul.f32 %v1344, 0.17677669
  %v1361 = vmul.f32 %v1219, %v520
  %v1362 = vmul.f32 %v1224, %v525
  %v1363 = vmul.f32 %v1229, %v530
  %v1364 = vmul.f32 %v1234, %v535
  %v1365 = vmul.f32 %v1239, %v540
  %v1366 = vmul.f32 %v1244, %v545
  %v1367 = vmul.f32 %v1249, %v550
  %v1368 = vmul.f32 %v1254, %v555
  %v1369 = vmul.f32 %v1259, %v560
  %v1370 = vmul.f32 %v1264, %v565
  %v1371 = vmul.f32 %v1269, %v570
  %v1372 = vmul.f32 %v1274, %v575
  %v1373 = vmul.f32 %v1279, %v580
  %v1374 = vmul.f32 %v1284, %v585
  %v1375 = vmul.f32 %v1289, %v590
  %v1376 = vmul.f32 %v1294, %v595
  %1377 = vadd.xlane.f32.xlu0 %v1361
  %v1378 = vpop.xlane.xlu0 %1377
  %1379 = vadd.xlane.f32.xlu0 %v1362
  %v1380 = vpop.xlane.xlu0 %1379
  %1381 = vadd.xlane.f32.xlu0 %v1363
  %v1382 = vpop.xlane.xlu0 %1381
  %1383 = vadd.xlane.f32.xlu0 %v1364
  %v1384 = vpop.xlane.xlu0 %1383
  %1385 = vadd.xlane.f32.xlu0 %v1365
  %v1386 = vpop.xlane.xlu0 %1385
  %1387 = vadd.xlane.f32.xlu0 %v1366
  %v1388 = vpop.xlane.xlu0 %1387
  %1389 = vadd.xlane.f32.xlu0 %v1367
  %v1390 = vpop.xlane.xlu0 %1389
  %1391 = vadd.xlane.f32.xlu0 %v1368
  %v1392 = vpop.xlane.xlu0 %1391
  %1393 = vadd.xlane.f32.xlu0 %v1369
  %v1394 = vpop.xlane.xlu0 %1393
  %1395 = vadd.xlane.f32.xlu0 %v1370
  %v1396 = vpop.xlane.xlu0 %1395
  %1397 = vadd.xlane.f32.xlu0 %v1371
  %v1398 = vpop.xlane.xlu0 %1397
  %1399 = vadd.xlane.f32.xlu0 %v1372
  %v1400 = vpop.xlane.xlu0 %1399
  %1401 = vadd.xlane.f32.xlu0 %v1373
  %v1402 = vpop.xlane.xlu0 %1401
  %1403 = vadd.xlane.f32.xlu0 %v1374
  %v1404 = vpop.xlane.xlu0 %1403
  %1405 = vadd.xlane.f32.xlu0 %v1375
  %v1406 = vpop.xlane.xlu0 %1405
  %1407 = vadd.xlane.f32.xlu0 %v1376
  %v1408 = vpop.xlane.xlu0 %1407
  %v1409 = vmul.f32 %v1378, 0.17677669
  %v1410 = vmul.f32 %v1380, 0.17677669
  %v1411 = vmul.f32 %v1382, 0.17677669
  %v1412 = vmul.f32 %v1384, 0.17677669
  %v1413 = vmul.f32 %v1386, 0.17677669
  %v1414 = vmul.f32 %v1388, 0.17677669
  %v1415 = vmul.f32 %v1390, 0.17677669
  %v1416 = vmul.f32 %v1392, 0.17677669
  %v1417 = vmul.f32 %v1394, 0.17677669
  %v1418 = vmul.f32 %v1396, 0.17677669
  %v1419 = vmul.f32 %v1398, 0.17677669
  %v1420 = vmul.f32 %v1400, 0.17677669
  %v1421 = vmul.f32 %v1402, 0.17677669
  %v1422 = vmul.f32 %v1404, 0.17677669
  %v1423 = vmul.f32 %v1406, 0.17677669
  %v1424 = vmul.f32 %v1408, 0.17677669
  %v1425 = vmax.f32 %v1345, %v1409
  %v1426 = vmax.f32 %v1346, %v1410
  %v1427 = vmax.f32 %v1347, %v1411
  %v1428 = vmax.f32 %v1348, %v1412
  %v1429 = vmax.f32 %v1349, %v1413
  %v1430 = vmax.f32 %v1350, %v1414
  %v1431 = vmax.f32 %v1351, %v1415
  %v1432 = vmax.f32 %v1352, %v1416
  %v1433 = vmax.f32 %v1353, %v1417
  %v1434 = vmax.f32 %v1354, %v1418
  %v1435 = vmax.f32 %v1355, %v1419
  %v1436 = vmax.f32 %v1356, %v1420
  %v1437 = vmax.f32 %v1357, %v1421
  %v1438 = vmax.f32 %v1358, %v1422
  %v1439 = vmax.f32 %v1359, %v1423
  %v1440 = vmax.f32 %v1360, %v1424
  %v1441 = vsub.f32 %v1345, %v1425
  %v1442 = vsub.f32 %v1346, %v1426
  %v1443 = vsub.f32 %v1347, %v1427
  %v1444 = vsub.f32 %v1348, %v1428
  %v1445 = vsub.f32 %v1349, %v1429
  %v1446 = vsub.f32 %v1350, %v1430
  %v1447 = vsub.f32 %v1351, %v1431
  %v1448 = vsub.f32 %v1352, %v1432
  %v1449 = vsub.f32 %v1353, %v1433
  %v1450 = vsub.f32 %v1354, %v1434
  %v1451 = vsub.f32 %v1355, %v1435
  %v1452 = vsub.f32 %v1356, %v1436
  %v1453 = vsub.f32 %v1357, %v1437
  %v1454 = vsub.f32 %v1358, %v1438
  %v1455 = vsub.f32 %v1359, %v1439
  %v1456 = vsub.f32 %v1360, %v1440
  %v1457 = vmul.f32 %v1441, 1.442695
  %v1458 = vpow.pop %v1457
  %v1459 = vmul.f32 %v1442, 1.442695
  %v1460 = vpow.pop %v1459
  %v1461 = vmul.f32 %v1443, 1.442695
  %v1462 = vpow.pop %v1461
  %v1463 = vmul.f32 %v1444, 1.442695
  %v1464 = vpow.pop %v1463
  %v1465 = vmul.f32 %v1445, 1.442695
  %v1466 = vpow.pop %v1465
  %v1467 = vmul.f32 %v1446, 1.442695
  %v1468 = vpow.pop %v1467
  %v1469 = vmul.f32 %v1447, 1.442695
  %v1470 = vpow.pop %v1469
  %v1471 = vmul.f32 %v1448, 1.442695
  %v1472 = vpow.pop %v1471
  %v1473 = vmul.f32 %v1449, 1.442695
  %v1474 = vpow.pop %v1473
  %v1475 = vmul.f32 %v1450, 1.442695
  %v1476 = vpow.pop %v1475
  %v1477 = vmul.f32 %v1451, 1.442695
  %v1478 = vpow.pop %v1477
  %v1479 = vmul.f32 %v1452, 1.442695
  %v1480 = vpow.pop %v1479
  %v1481 = vmul.f32 %v1453, 1.442695
  %v1482 = vpow.pop %v1481
  %v1483 = vmul.f32 %v1454, 1.442695
  %v1484 = vpow.pop %v1483
  %v1485 = vmul.f32 %v1455, 1.442695
  %v1486 = vpow.pop %v1485
  %v1487 = vmul.f32 %v1456, 1.442695
  %v1488 = vpow.pop %v1487
  %v1489 = vsub.f32 %v1409, %v1425
  %v1490 = vsub.f32 %v1410, %v1426
  %v1491 = vsub.f32 %v1411, %v1427
  %v1492 = vsub.f32 %v1412, %v1428
  %v1493 = vsub.f32 %v1413, %v1429
  %v1494 = vsub.f32 %v1414, %v1430
  %v1495 = vsub.f32 %v1415, %v1431
  %v1496 = vsub.f32 %v1416, %v1432
  %v1497 = vsub.f32 %v1417, %v1433
  %v1498 = vsub.f32 %v1418, %v1434
  %v1499 = vsub.f32 %v1419, %v1435
  %v1500 = vsub.f32 %v1420, %v1436
  %v1501 = vsub.f32 %v1421, %v1437
  %v1502 = vsub.f32 %v1422, %v1438
  %v1503 = vsub.f32 %v1423, %v1439
  %v1504 = vsub.f32 %v1424, %v1440
  %v1505 = vmul.f32 %v1489, 1.442695
  %v1506 = vpow.pop %v1505
  %v1507 = vmul.f32 %v1490, 1.442695
  %v1508 = vpow.pop %v1507
  %v1509 = vmul.f32 %v1491, 1.442695
  %v1510 = vpow.pop %v1509
  %v1511 = vmul.f32 %v1492, 1.442695
  %v1512 = vpow.pop %v1511
  %v1513 = vmul.f32 %v1493, 1.442695
  %v1514 = vpow.pop %v1513
  %v1515 = vmul.f32 %v1494, 1.442695
  %v1516 = vpow.pop %v1515
  %v1517 = vmul.f32 %v1495, 1.442695
  %v1518 = vpow.pop %v1517
  %v1519 = vmul.f32 %v1496, 1.442695
  %v1520 = vpow.pop %v1519
  %v1521 = vmul.f32 %v1497, 1.442695
  %v1522 = vpow.pop %v1521
  %v1523 = vmul.f32 %v1498, 1.442695
  %v1524 = vpow.pop %v1523
  %v1525 = vmul.f32 %v1499, 1.442695
  %v1526 = vpow.pop %v1525
  %v1527 = vmul.f32 %v1500, 1.442695
  %v1528 = vpow.pop %v1527
  %v1529 = vmul.f32 %v1501, 1.442695
  %v1530 = vpow.pop %v1529
  %v1531 = vmul.f32 %v1502, 1.442695
  %v1532 = vpow.pop %v1531
  %v1533 = vmul.f32 %v1503, 1.442695
  %v1534 = vpow.pop %v1533
  %v1535 = vmul.f32 %v1504, 1.442695
  %v1536 = vpow.pop %v1535
  %v1537 = vadd.f32 %v1458, %v1506
  %v1538 = vadd.f32 %v1460, %v1508
  %v1539 = vadd.f32 %v1462, %v1510
  %v1540 = vadd.f32 %v1464, %v1512
  %v1541 = vadd.f32 %v1466, %v1514
  %v1542 = vadd.f32 %v1468, %v1516
  %v1543 = vadd.f32 %v1470, %v1518
  %v1544 = vadd.f32 %v1472, %v1520
  %v1545 = vadd.f32 %v1474, %v1522
  %v1546 = vadd.f32 %v1476, %v1524
  %v1547 = vadd.f32 %v1478, %v1526
  %v1548 = vadd.f32 %v1480, %v1528
  %v1549 = vadd.f32 %v1482, %v1530
  %v1550 = vadd.f32 %v1484, %v1532
  %v1551 = vadd.f32 %v1486, %v1534
  %v1552 = vadd.f32 %v1488, %v1536
  %v1553 = vrcp.pop %v1537
  %v1554 = vrcp.pop %v1538
  %v1555 = vrcp.pop %v1539
  %v1556 = vrcp.pop %v1540
  %v1557 = vrcp.pop %v1541
  %v1558 = vrcp.pop %v1542
  %v1559 = vrcp.pop %v1543
  %v1560 = vrcp.pop %v1544
  %v1561 = vrcp.pop %v1545
  %v1562 = vrcp.pop %v1546
  %v1563 = vrcp.pop %v1547
  %v1564 = vrcp.pop %v1548
  %v1565 = vrcp.pop %v1549
  %v1566 = vrcp.pop %v1550
  %v1567 = vrcp.pop %v1551
  %v1568 = vrcp.pop %v1552
  %v1569 = vmul.f32 %v1458, %v1120
  %v1570 = vmul.f32 %v1460, %v1121
  %v1571 = vmul.f32 %v1462, %v1122
  %v1572 = vmul.f32 %v1464, %v1123
  %v1573 = vmul.f32 %v1466, %v1124
  %v1574 = vmul.f32 %v1468, %v1125
  %v1575 = vmul.f32 %v1470, %v1126
  %v1576 = vmul.f32 %v1472, %v1127
  %v1577 = vmul.f32 %v1474, %v1128
  %v1578 = vmul.f32 %v1476, %v1129
  %v1579 = vmul.f32 %v1478, %v1130
  %v1580 = vmul.f32 %v1480, %v1131
  %v1581 = vmul.f32 %v1482, %v1132
  %v1582 = vmul.f32 %v1484, %v1133
  %v1583 = vmul.f32 %v1486, %v1134
  %v1584 = vmul.f32 %v1488, %v1135
  %v1585 = vmul.f32 %v1506, %v520
  %v1586 = vmul.f32 %v1508, %v525
  %v1587 = vmul.f32 %v1510, %v530
  %v1588 = vmul.f32 %v1512, %v535
  %v1589 = vmul.f32 %v1514, %v540
  %v1590 = vmul.f32 %v1516, %v545
  %v1591 = vmul.f32 %v1518, %v550
  %v1592 = vmul.f32 %v1520, %v555
  %v1593 = vmul.f32 %v1522, %v560
  %v1594 = vmul.f32 %v1524, %v565
  %v1595 = vmul.f32 %v1526, %v570
  %v1596 = vmul.f32 %v1528, %v575
  %v1597 = vmul.f32 %v1530, %v580
  %v1598 = vmul.f32 %v1532, %v585
  %v1599 = vmul.f32 %v1534, %v590
  %v1600 = vmul.f32 %v1536, %v595
  %v1601 = vadd.f32 %v1569, %v1585
  %v1602 = vadd.f32 %v1570, %v1586
  %v1603 = vadd.f32 %v1571, %v1587
  %v1604 = vadd.f32 %v1572, %v1588
  %v1605 = vadd.f32 %v1573, %v1589
  %v1606 = vadd.f32 %v1574, %v1590
  %v1607 = vadd.f32 %v1575, %v1591
  %v1608 = vadd.f32 %v1576, %v1592
  %v1609 = vadd.f32 %v1577, %v1593
  %v1610 = vadd.f32 %v1578, %v1594
  %v1611 = vadd.f32 %v1579, %v1595
  %v1612 = vadd.f32 %v1580, %v1596
  %v1613 = vadd.f32 %v1581, %v1597
  %v1614 = vadd.f32 %v1582, %v1598
  %v1615 = vadd.f32 %v1583, %v1599
  %v1616 = vadd.f32 %v1584, %v1600
  %v1617 = vmul.f32 %v1601, %v1553
  %v1618 = vmul.f32 %v1602, %v1554
  %v1619 = vmul.f32 %v1603, %v1555
  %v1620 = vmul.f32 %v1604, %v1556
  %v1621 = vmul.f32 %v1605, %v1557
  %v1622 = vmul.f32 %v1606, %v1558
  %v1623 = vmul.f32 %v1607, %v1559
  %v1624 = vmul.f32 %v1608, %v1560
  %v1625 = vmul.f32 %v1609, %v1561
  %v1626 = vmul.f32 %v1610, %v1562
  %v1627 = vmul.f32 %v1611, %v1563
  %v1628 = vmul.f32 %v1612, %v1564
  %v1629 = vmul.f32 %v1613, %v1565
  %v1630 = vmul.f32 %v1614, %v1566
  %v1631 = vmul.f32 %v1615, %v1567
  %v1632 = vmul.f32 %v1616, %v1568
  %v1633 = vld [vmem:[%s12] sm:$0xff]
  %v1634 = vld [vmem:[%s12 + $0x8] sm:$0xff]
  %v1635 = vld [vmem:[%s12 + $0x10] sm:$0xff]
  %v1636 = vld [vmem:[%s12 + $0x18] sm:$0xff]
  %v1637 = vld [vmem:[%s12 + $0x20] sm:$0xff]
  %v1638 = vld [vmem:[%s12 + $0x28] sm:$0xff]
  %v1639 = vld [vmem:[%s12 + $0x30] sm:$0xff]
  %v1640 = vld [vmem:[%s12 + $0x38] sm:$0xff]
  %v1641 = vld [vmem:[%s12 + $0x40] sm:$0xff]
  %v1642 = vld [vmem:[%s12 + $0x48] sm:$0xff]
  %v1643 = vld [vmem:[%s12 + $0x50] sm:$0xff]
  %v1644 = vld [vmem:[%s12 + $0x58] sm:$0xff]
  %v1645 = vld [vmem:[%s12 + $0x60] sm:$0xff]
  %v1646 = vld [vmem:[%s12 + $0x68] sm:$0xff]
  %v1647 = vld [vmem:[%s12 + $0x70] sm:$0xff]
  %v1648 = vld [vmem:[%s12 + $0x78] sm:$0xff]
  %1649 = vmatprep.subr.mxu0 0.0
  %1650 = vmatpush1.msra.mxu0 %v1633
  %1651 = vmatprep.subr.mxu0 0.0
  %1652 = vmatpush1.msra.mxu0 %v1634
  %1653 = vmatprep.subr.mxu0 0.0
  %1654 = vmatpush1.msra.mxu0 %v1635
  %1655 = vmatprep.subr.mxu0 0.0
  %1656 = vmatpush1.msra.mxu0 %v1636
  %1657 = vmatprep.subr.mxu0 0.0
  %1658 = vmatpush1.msra.mxu0 %v1637
  %1659 = vmatprep.subr.mxu0 0.0
  %1660 = vmatpush1.msra.mxu0 %v1638
  %1661 = vmatprep.subr.mxu0 0.0
  %1662 = vmatpush1.msra.mxu0 %v1639
  %1663 = vmatprep.subr.mxu0 0.0
  %1664 = vmatpush1.msra.mxu0 %v1640
  %1665 = vmatprep.subr.mxu0 0.0
  %1666 = vmatpush1.msra.mxu0 %v1641
  %1667 = vmatprep.subr.mxu0 0.0
  %1668 = vmatpush1.msra.mxu0 %v1642
  %1669 = vmatprep.subr.mxu0 0.0
  %1670 = vmatpush1.msra.mxu0 %v1643
  %1671 = vmatprep.subr.mxu0 0.0
  %1672 = vmatpush1.msra.mxu0 %v1644
  %1673 = vmatprep.subr.mxu0 0.0
  %1674 = vmatpush1.msra.mxu0 %v1645
  %1675 = vmatprep.subr.mxu0 0.0
  %1676 = vmatpush1.msra.mxu0 %v1646
  %1677 = vmatprep.subr.mxu0 0.0
  %1678 = vmatpush1.msra.mxu0 %v1647
  %1679 = vmatprep.subr.mxu0 0.0
  %1680 = vmatpush1.msra.mxu0 %v1648
  %1681 = vmatprep.subr.mxu0 0.0
  %1682 = vmatpush1.msra.mxu0 0.0
  %1683 = vmatprep.subr.mxu0 0.0
  %1684 = vmatpush1.msra.mxu0 0.0
  %1685 = vmatprep.subr.mxu0 0.0
  %1686 = vmatpush1.msra.mxu0 0.0
  %1687 = vmatprep.subr.mxu0 0.0
  %1688 = vmatpush1.msra.mxu0 0.0
  %1689 = vmatprep.subr.mxu0 0.0
  %1690 = vmatpush1.msra.mxu0 0.0
  %1691 = vmatprep.subr.mxu0 0.0
  %1692 = vmatpush1.msra.mxu0 0.0
  %1693 = vmatprep.subr.mxu0 0.0
  %1694 = vmatpush1.msra.mxu0 0.0
  %1695 = vmatprep.subr.mxu0 0.0
  %1696 = vmatpush1.msra.mxu0 0.0
  %1697 = vmatprep.subr.mxu0 0.0
  %1698 = vmatpush1.msra.mxu0 0.0
  %1699 = vmatprep.subr.mxu0 0.0
  %1700 = vmatpush1.msra.mxu0 0.0
  %1701 = vmatprep.subr.mxu0 0.0
  %1702 = vmatpush1.msra.mxu0 0.0
  %1703 = vmatprep.subr.mxu0 0.0
  %1704 = vmatpush1.msra.mxu0 0.0
  %1705 = vmatprep.subr.mxu0 0.0
  %1706 = vmatpush1.msra.mxu0 0.0
  %1707 = vmatprep.subr.mxu0 0.0
  %1708 = vmatpush1.msra.mxu0 0.0
  %1709 = vmatprep.subr.mxu0 0.0
  %1710 = vmatpush1.msra.mxu0 0.0
  %1711 = vmatprep.subr.mxu0 0.0
  %1712 = vmatpush1.msra.mxu0 0.0
  %1713 = vmatprep.mubr.f32.mxu0 0.0
  %1714 = vmatmul.mubr.f32.gmra.mrb[0].mxu0 %v1617
  %v1715 = vpop.f32.mrb[0].mxu0
  %v1716 = vadd.f32 0.0, %v1715
  %v1717 = vpop.f32.mrb[0].mxu0
  %1718 = vmatprep.mubr.f32.mxu0 0.0
  %1719 = vmatmul.mubr.f32.gmra.mrb[0].mxu0 %v1618
  %v1720 = vpop.f32.mrb[0].mxu0
  %v1721 = vadd.f32 0.0, %v1720
  %v1722 = vpop.f32.mrb[0].mxu0
  %1723 = vmatprep.mubr.f32.mxu0 0.0
  %1724 = vmatmul.mubr.f32.gmra.mrb[0].mxu0 %v1619
  %v1725 = vpop.f32.mrb[0].mxu0
  %v1726 = vadd.f32 0.0, %v1725
  %v1727 = vpop.f32.mrb[0].mxu0
  %1728 = vmatprep.mubr.f32.mxu0 0.0
  %1729 = vmatmul.mubr.f32.gmra.mrb[0].mxu0 %v1620
  %v1730 = vpop.f32.mrb[0].mxu0
  %v1731 = vadd.f32 0.0, %v1730
  %v1732 = vpop.f32.mrb[0].mxu0
  %1733 = vmatprep.mubr.f32.mxu0 0.0
  %1734 = vmatmul.mubr.f32.gmra.mrb[0].mxu0 %v1621
  %v1735 = vpop.f32.mrb[0].mxu0
  %v1736 = vadd.f32 0.0, %v1735
  %v1737 = vpop.f32.mrb[0].mxu0
  %1738 = vmatprep.mubr.f32.mxu0 0.0
  %1739 = vmatmul.mubr.f32.gmra.mrb[0].mxu0 %v1622
  %v1740 = vpop.f32.mrb[0].mxu0
  %v1741 = vadd.f32 0.0, %v1740
  %v1742 = vpop.f32.mrb[0].mxu0
  %1743 = vmatprep.mubr.f32.mxu0 0.0
  %1744 = vmatmul.mubr.f32.gmra.mrb[0].mxu0 %v1623
  %v1745 = vpop.f32.mrb[0].mxu0
  %v1746 = vadd.f32 0.0, %v1745
  %v1747 = vpop.f32.mrb[0].mxu0
  %1748 = vmatprep.mubr.f32.mxu0 0.0
  %1749 = vmatmul.mubr.f32.gmra.mrb[0].mxu0 %v1624
  %v1750 = vpop.f32.mrb[0].mxu0
  %v1751 = vadd.f32 0.0, %v1750
  %v1752 = vpop.f32.mrb[0].mxu0
  %1753 = vmatprep.mubr.f32.mxu0 0.0
  %1754 = vmatmul.mubr.f32.gmra.mrb[0].mxu0 %v1625
  %v1755 = vpop.f32.mrb[0].mxu0
  %v1756 = vadd.f32 0.0, %v1755
  %v1757 = vpop.f32.mrb[0].mxu0
  %1758 = vmatprep.mubr.f32.mxu0 0.0
  %1759 = vmatmul.mubr.f32.gmra.mrb[0].mxu0 %v1626
  %v1760 = vpop.f32.mrb[0].mxu0
  %v1761 = vadd.f32 0.0, %v1760
  %v1762 = vpop.f32.mrb[0].mxu0
  %1763 = vmatprep.mubr.f32.mxu0 0.0
  %1764 = vmatmul.mubr.f32.gmra.mrb[0].mxu0 %v1627
  %v1765 = vpop.f32.mrb[0].mxu0
  %v1766 = vadd.f32 0.0, %v1765
  %v1767 = vpop.f32.mrb[0].mxu0
  %1768 = vmatprep.mubr.f32.mxu0 0.0
  %1769 = vmatmul.mubr.f32.gmra.mrb[0].mxu0 %v1628
  %v1770 = vpop.f32.mrb[0].mxu0
  %v1771 = vadd.f32 0.0, %v1770
  %v1772 = vpop.f32.mrb[0].mxu0
  %1773 = vmatprep.mubr.f32.mxu0 0.0
  %1774 = vmatmul.mubr.f32.gmra.mrb[0].mxu0 %v1629
  %v1775 = vpop.f32.mrb[0].mxu0
  %v1776 = vadd.f32 0.0, %v1775
  %v1777 = vpop.f32.mrb[0].mxu0
  %1778 = vmatprep.mubr.f32.mxu0 0.0
  %1779 = vmatmul.mubr.f32.gmra.mrb[0].mxu0 %v1630
  %v1780 = vpop.f32.mrb[0].mxu0
  %v1781 = vadd.f32 0.0, %v1780
  %v1782 = vpop.f32.mrb[0].mxu0
  %1783 = vmatprep.mubr.f32.mxu0 0.0
  %1784 = vmatmul.mubr.f32.gmra.mrb[0].mxu0 %v1631
  %v1785 = vpop.f32.mrb[0].mxu0
  %v1786 = vadd.f32 0.0, %v1785
  %v1787 = vpop.f32.mrb[0].mxu0
  %1788 = vmatprep.mubr.f32.mxu0 0.0
  %1789 = vmatmul.mubr.f32.gmra.mrb[0].mxu0 %v1632
  %v1790 = vpop.f32.mrb[0].mxu0
  %v1791 = vadd.f32 0.0, %v1790
  %v1792 = vpop.f32.mrb[0].mxu0
  %1793 = vdwg.mxu0
  %v1794 = vlaneseq
  %v1795 = vand.u32 %v1794, 127
  %vm1796 = vcmp.lt.s32.totalorder %v1795, 8
  %v1797 = vsel %vm1796, %v1716, -1e+30
  %v1798 = vsel %vm1796, %v1721, -1e+30
  %v1799 = vsel %vm1796, %v1726, -1e+30
  %v1800 = vsel %vm1796, %v1731, -1e+30
  %v1801 = vsel %vm1796, %v1736, -1e+30
  %v1802 = vsel %vm1796, %v1741, -1e+30
  %v1803 = vsel %vm1796, %v1746, -1e+30
  %v1804 = vsel %vm1796, %v1751, -1e+30
  %v1805 = vsel %vm1796, %v1756, -1e+30
  %v1806 = vsel %vm1796, %v1761, -1e+30
  %v1807 = vsel %vm1796, %v1766, -1e+30
  %v1808 = vsel %vm1796, %v1771, -1e+30
  %v1809 = vsel %vm1796, %v1776, -1e+30
  %v1810 = vsel %vm1796, %v1781, -1e+30
  %v1811 = vsel %vm1796, %v1786, -1e+30
  %v1812 = vsel %vm1796, %v1791, -1e+30
  %1813 = vmax.xlane.f32.xlu0 %v1797
  %v1814 = vpop.xlane.xlu0 %1813
  %1815 = vmax.xlane.f32.xlu0 %v1798
  %v1816 = vpop.xlane.xlu0 %1815
  %1817 = vmax.xlane.f32.xlu0 %v1799
  %v1818 = vpop.xlane.xlu0 %1817
  %1819 = vmax.xlane.f32.xlu0 %v1800
  %v1820 = vpop.xlane.xlu0 %1819
  %1821 = vmax.xlane.f32.xlu0 %v1801
  %v1822 = vpop.xlane.xlu0 %1821
  %1823 = vmax.xlane.f32.xlu0 %v1802
  %v1824 = vpop.xlane.xlu0 %1823
  %1825 = vmax.xlane.f32.xlu0 %v1803
  %v1826 = vpop.xlane.xlu0 %1825
  %1827 = vmax.xlane.f32.xlu0 %v1804
  %v1828 = vpop.xlane.xlu0 %1827
  %1829 = vmax.xlane.f32.xlu0 %v1805
  %v1830 = vpop.xlane.xlu0 %1829
  %1831 = vmax.xlane.f32.xlu0 %v1806
  %v1832 = vpop.xlane.xlu0 %1831
  %1833 = vmax.xlane.f32.xlu0 %v1807
  %v1834 = vpop.xlane.xlu0 %1833
  %1835 = vmax.xlane.f32.xlu0 %v1808
  %v1836 = vpop.xlane.xlu0 %1835
  %1837 = vmax.xlane.f32.xlu0 %v1809
  %v1838 = vpop.xlane.xlu0 %1837
  %1839 = vmax.xlane.f32.xlu0 %v1810
  %v1840 = vpop.xlane.xlu0 %1839
  %1841 = vmax.xlane.f32.xlu0 %v1811
  %v1842 = vpop.xlane.xlu0 %1841
  %1843 = vmax.xlane.f32.xlu0 %v1812
  %v1844 = vpop.xlane.xlu0 %1843
  %v1845 = vsub.f32 %v1797, %v1814
  %v1846 = vsub.f32 %v1798, %v1816
  %v1847 = vsub.f32 %v1799, %v1818
  %v1848 = vsub.f32 %v1800, %v1820
  %v1849 = vsub.f32 %v1801, %v1822
  %v1850 = vsub.f32 %v1802, %v1824
  %v1851 = vsub.f32 %v1803, %v1826
  %v1852 = vsub.f32 %v1804, %v1828
  %v1853 = vsub.f32 %v1805, %v1830
  %v1854 = vsub.f32 %v1806, %v1832
  %v1855 = vsub.f32 %v1807, %v1834
  %v1856 = vsub.f32 %v1808, %v1836
  %v1857 = vsub.f32 %v1809, %v1838
  %v1858 = vsub.f32 %v1810, %v1840
  %v1859 = vsub.f32 %v1811, %v1842
  %v1860 = vsub.f32 %v1812, %v1844
  %v1861 = vmul.f32 %v1845, 1.442695
  %v1862 = vpow.pop %v1861
  %v1863 = vmul.f32 %v1846, 1.442695
  %v1864 = vpow.pop %v1863
  %v1865 = vmul.f32 %v1847, 1.442695
  %v1866 = vpow.pop %v1865
  %v1867 = vmul.f32 %v1848, 1.442695
  %v1868 = vpow.pop %v1867
  %v1869 = vmul.f32 %v1849, 1.442695
  %v1870 = vpow.pop %v1869
  %v1871 = vmul.f32 %v1850, 1.442695
  %v1872 = vpow.pop %v1871
  %v1873 = vmul.f32 %v1851, 1.442695
  %v1874 = vpow.pop %v1873
  %v1875 = vmul.f32 %v1852, 1.442695
  %v1876 = vpow.pop %v1875
  %v1877 = vmul.f32 %v1853, 1.442695
  %v1878 = vpow.pop %v1877
  %v1879 = vmul.f32 %v1854, 1.442695
  %v1880 = vpow.pop %v1879
  %v1881 = vmul.f32 %v1855, 1.442695
  %v1882 = vpow.pop %v1881
  %v1883 = vmul.f32 %v1856, 1.442695
  %v1884 = vpow.pop %v1883
  %v1885 = vmul.f32 %v1857, 1.442695
  %v1886 = vpow.pop %v1885
  %v1887 = vmul.f32 %v1858, 1.442695
  %v1888 = vpow.pop %v1887
  %v1889 = vmul.f32 %v1859, 1.442695
  %v1890 = vpow.pop %v1889
  %v1891 = vmul.f32 %v1860, 1.442695
  %v1892 = vpow.pop %v1891
  %1893 = vadd.xlane.f32.xlu0 %v1862
  %v1894 = vpop.xlane.xlu0 %1893
  %1895 = vadd.xlane.f32.xlu0 %v1864
  %v1896 = vpop.xlane.xlu0 %1895
  %1897 = vadd.xlane.f32.xlu0 %v1866
  %v1898 = vpop.xlane.xlu0 %1897
  %1899 = vadd.xlane.f32.xlu0 %v1868
  %v1900 = vpop.xlane.xlu0 %1899
  %1901 = vadd.xlane.f32.xlu0 %v1870
  %v1902 = vpop.xlane.xlu0 %1901
  %1903 = vadd.xlane.f32.xlu0 %v1872
  %v1904 = vpop.xlane.xlu0 %1903
  %1905 = vadd.xlane.f32.xlu0 %v1874
  %v1906 = vpop.xlane.xlu0 %1905
  %1907 = vadd.xlane.f32.xlu0 %v1876
  %v1908 = vpop.xlane.xlu0 %1907
  %1909 = vadd.xlane.f32.xlu0 %v1878
  %v1910 = vpop.xlane.xlu0 %1909
  %1911 = vadd.xlane.f32.xlu0 %v1880
  %v1912 = vpop.xlane.xlu0 %1911
  %1913 = vadd.xlane.f32.xlu0 %v1882
  %v1914 = vpop.xlane.xlu0 %1913
  %1915 = vadd.xlane.f32.xlu0 %v1884
  %v1916 = vpop.xlane.xlu0 %1915
  %1917 = vadd.xlane.f32.xlu0 %v1886
  %v1918 = vpop.xlane.xlu0 %1917
  %1919 = vadd.xlane.f32.xlu0 %v1888
  %v1920 = vpop.xlane.xlu0 %1919
  %1921 = vadd.xlane.f32.xlu0 %v1890
  %v1922 = vpop.xlane.xlu0 %1921
  %1923 = vadd.xlane.f32.xlu0 %v1892
  %v1924 = vpop.xlane.xlu0 %1923
  %v1925 = vlog2.pop %v1894
  %v1926 = vmul.f32 %v1925, 0.6931472
  %v1927 = vlog2.pop %v1896
  %v1928 = vmul.f32 %v1927, 0.6931472
  %v1929 = vlog2.pop %v1898
  %v1930 = vmul.f32 %v1929, 0.6931472
  %v1931 = vlog2.pop %v1900
  %v1932 = vmul.f32 %v1931, 0.6931472
  %v1933 = vlog2.pop %v1902
  %v1934 = vmul.f32 %v1933, 0.6931472
  %v1935 = vlog2.pop %v1904
  %v1936 = vmul.f32 %v1935, 0.6931472
  %v1937 = vlog2.pop %v1906
  %v1938 = vmul.f32 %v1937, 0.6931472
  %v1939 = vlog2.pop %v1908
  %v1940 = vmul.f32 %v1939, 0.6931472
  %v1941 = vlog2.pop %v1910
  %v1942 = vmul.f32 %v1941, 0.6931472
  %v1943 = vlog2.pop %v1912
  %v1944 = vmul.f32 %v1943, 0.6931472
  %v1945 = vlog2.pop %v1914
  %v1946 = vmul.f32 %v1945, 0.6931472
  %v1947 = vlog2.pop %v1916
  %v1948 = vmul.f32 %v1947, 0.6931472
  %v1949 = vlog2.pop %v1918
  %v1950 = vmul.f32 %v1949, 0.6931472
  %v1951 = vlog2.pop %v1920
  %v1952 = vmul.f32 %v1951, 0.6931472
  %v1953 = vlog2.pop %v1922
  %v1954 = vmul.f32 %v1953, 0.6931472
  %v1955 = vlog2.pop %v1924
  %v1956 = vmul.f32 %v1955, 0.6931472
  %v1957 = vsub.f32 %v1845, %v1926
  %v1958 = vsub.f32 %v1846, %v1928
  %v1959 = vsub.f32 %v1847, %v1930
  %v1960 = vsub.f32 %v1848, %v1932
  %v1961 = vsub.f32 %v1849, %v1934
  %v1962 = vsub.f32 %v1850, %v1936
  %v1963 = vsub.f32 %v1851, %v1938
  %v1964 = vsub.f32 %v1852, %v1940
  %v1965 = vsub.f32 %v1853, %v1942
  %v1966 = vsub.f32 %v1854, %v1944
  %v1967 = vsub.f32 %v1855, %v1946
  %v1968 = vsub.f32 %v1856, %v1948
  %v1969 = vsub.f32 %v1857, %v1950
  %v1970 = vsub.f32 %v1858, %v1952
  %v1971 = vsub.f32 %v1859, %v1954
  %v1972 = vsub.f32 %v1860, %v1956
  %1973 = vst [vmem:[%s13] sm:$0xff] %v1957
  %1974 = vst [vmem:[%s13 + $0x8] sm:$0xff] %v1958
  %1975 = vst [vmem:[%s13 + $0x10] sm:$0xff] %v1959
  %1976 = vst [vmem:[%s13 + $0x18] sm:$0xff] %v1960
  %1977 = vst [vmem:[%s13 + $0x20] sm:$0xff] %v1961
  %1978 = vst [vmem:[%s13 + $0x28] sm:$0xff] %v1962
  %1979 = vst [vmem:[%s13 + $0x30] sm:$0xff] %v1963
  %1980 = vst [vmem:[%s13 + $0x38] sm:$0xff] %v1964
  %1981 = vst [vmem:[%s13 + $0x40] sm:$0xff] %v1965
  %1982 = vst [vmem:[%s13 + $0x48] sm:$0xff] %v1966
  %1983 = vst [vmem:[%s13 + $0x50] sm:$0xff] %v1967
  %1984 = vst [vmem:[%s13 + $0x58] sm:$0xff] %v1968
  %1985 = vst [vmem:[%s13 + $0x60] sm:$0xff] %v1969
  %1986 = vst [vmem:[%s13 + $0x68] sm:$0xff] %v1970
  %1987 = vst [vmem:[%s13 + $0x70] sm:$0xff] %v1971
  %1988 = vst [vmem:[%s13 + $0x78] sm:$0xff] %v1972
  // Predicated region
  $region54: #{forward.5} parent=0 // pred_check
    _
  $region55: #{forward.5} parent=0 // pred_check_branch
    %1990 = sbr.rel (0) target = $region57
  $region56: #{forward.5} parent=0 // pred_region
    _
  $region57: #{forward.5} parent=0 // pred_fallthru
    _
  // Predicated region
  $region58: #{forward.5} parent=0 // pred_check
    _
  $region59: #{forward.5} parent=0 // pred_check_branch
    %1992 = sbr.rel (0) target = $region61
  $region60: #{forward.5} parent=0 // pred_region
    _
  $region61: #{forward.5} parent=0 // pred_fallthru
    _

</llo_original>
